<compile_context>
chip_gen: v7x
topology: tpu7x:2x2x1
jax: 0.10.0
libtpu: 0.0.40
codegen_flags: <defaults>
</compile_context>

<pallas_src>
import functools

import jax
import jax.numpy as jnp
import numpy as np
from jax import lax
from jax.experimental import pallas as pl
from jax.experimental.pallas import tpu as pltpu


def _round_up(x, m):
    return ((x + m - 1) // m) * m


def _pick_time_block(T, B_t, d_pad, H_pad, C_pad):
    """Largest time block (<=32) whose VMEM working set fits a ~20 MiB budget."""
    fixed = 2 * (
        d_pad * 3 * H_pad * 4        # w_i (f32), default double-buffered
        + 3 * H_pad * 4              # b_i
        + H_pad * 3 * H_pad * 2      # w_h (bf16)
        + 8 * H_pad * 4              # hp slab
        + H_pad * C_pad * 4          # head weight
        + C_pad * 4                  # head bias
        + B_t * C_pad * 4            # out block
        + B_t * H_pad * 4            # emb block (recurrent state)
    )
    budget = 20 * 2**20
    tb = min(32, T)
    while tb > 1:
        per_t = 2 * B_t * d_pad * 4 + B_t * 3 * H_pad * 4   # streamed x + xp scratch
        if fixed + tb * per_t <= budget:
            break
        tb //= 2
    return max(1, tb)


# ---------------------------------------------------------------------------
# Pallas kernel
# ---------------------------------------------------------------------------
def gru_mlp_kernel(
    x_ref,      # (Tb, B_t, d_pad)    f32   raw inputs for this (batch, time) block
    wi_ref,     # (d_pad, 3*H_pad)    f32   [W_ir | W_iz | W_in] (transposed, gate-padded)
    bi_ref,     # (1, 3*H_pad)        f32   b_ir+b_hr | b_iz+b_hz | b_in
    wh_ref,     # (H_pad, 3*H_pad)    bf16  [W_hr | W_hz | W_hn]
    hp_ref,     # (8, H_pad)          f32   rows: b_hn, gamma, beta, mean, var, 0, 0, 0
    wlin_ref,   # (H_pad, C_pad)      f32   head weight
    blin_ref,   # (1, C_pad)          f32   head bias
    out_ref,    # (B_t, C_pad)        f32   logits
    emb_ref,    # (B_t, H_pad)        f32   final hidden state; recurrent state across t
    xp_scr,     # (Tb, B_t, 3*H_pad)  f32   input projections for this block
    *,
    seq_len,     # static: true (unpadded) sequence length T
    needs_mask,  # static: last time block is ragged
    unroll,      # static: recurrence unroll factor
):
    t = pl.program_id(1)
    n_t = pl.num_programs(1)
    Tb, B_t, _ = x_ref.shape
    H = emb_ref.shape[1]     # padded hidden size (multiple of 128)

    @pl.when(t == 0)
    def _():
        emb_ref[...] = jnp.zeros_like(emb_ref)   # h0 = 0

    # Input projection for all Tb timesteps.  Independent of h, so it sits off the
    # serial recurrence chain (MXU work that overlaps with / is dwarfed by it).
    bi = bi_ref[...]
    for i in range(Tb):
        xp_scr[i] = (
            jnp.dot(x_ref[i], wi_ref[...], preferred_element_type=jnp.float32) + bi
        )

    # Hoisted out of the unrolled loop (JAX does not CSE broadcast_in_dim).
    b_hn = jnp.broadcast_to(hp_ref[0:1, :], (B_t, H))
    t0 = t * Tb

    def step(i, h):
        xp = xp_scr[i]                                            # (B_t, 3H)
        # Serial-chain matmul in bf16, f32 accumulate.
        g = jnp.dot(h.astype(jnp.bfloat16), wh_ref[...],
                    preferred_element_type=jnp.float32)           # (B_t, 3H)
        # PyTorch GRU gate order (r, z, n); b_ir+b_hr, b_iz+b_hz, b_in are folded
        # into xp, b_hn must stay inside the r * (.) term.
        r = jax.nn.sigmoid(xp[:, 0:H] + g[:, 0:H])
        z = jax.nn.sigmoid(xp[:, H:2 * H] + g[:, H:2 * H])
        n = jnp.tanh(xp[:, 2 * H:3 * H] + r * (g[:, 2 * H:3 * H] + b_hn))
        h_new = (1.0 - z) * n + z * h
        if needs_mask:
            h_new = jnp.where(t0 + i < seq_len, h_new, h)   # ragged last block
        return h_new

    h = lax.fori_loop(0, Tb, step, emb_ref[...], unroll=unroll)
    emb_ref[...] = h

    @pl.when(t == n_t - 1)
    def _():
        # MLP head: BatchNorm1d (eval, running stats) -> ReLU -> Dropout(id) -> Linear
        gamma = hp_ref[1:2, :]
        beta = hp_ref[2:3, :]
        mean = hp_ref[3:4, :]
        var = hp_ref[4:5, :]
        inv_std = lax.rsqrt(var + 1e-5)
        act = jnp.maximum((h - mean) * inv_std * gamma + beta, 0.0)
        out_ref[...] = (
            jnp.dot(act, wlin_ref[...], preferred_element_type=jnp.float32)
            + blin_ref[...]
        )


# ---------------------------------------------------------------------------
# Wrapper
# ---------------------------------------------------------------------------
@functools.partial(jax.jit, static_argnames=("get_embedding",))
def gru_forward(x, times, params, get_embedding=False):
    """x: (T, B, d_inp) float32, time-first; `times` is unused (matches `_times`)."""
    del times
    T, B, d_inp = x.shape
    w_ih = params["w_ih"]          # (3H, d_inp)  PyTorch layout, gate order r,z,n
    w_hh = params["w_hh"]          # (3H, H)
    b_ih = params["b_ih"]          # (3H,)
    b_hh = params["b_hh"]          # (3H,)
    w_lin = params["w_lin"]        # (C, H)
    b_lin = params["b_lin"]        # (C,)
    gamma, beta = params["gamma"], params["beta"]
    mean, var = params["mean"], params["var"]

    H = w_hh.shape[1]
    C = w_lin.shape[0]
    H_pad = _round_up(H, 128)
    C_pad = _round_up(C, 128)
    d_pad = _round_up(d_inp, 8)
    B_pad = _round_up(B, 8)
    if B_pad > 128:                # block the batch across grid steps / cores
        B_pad = _round_up(B_pad, 128)
        B_t = 128
    else:
        B_t = B_pad

    Tb = _pick_time_block(T, B_t, d_pad, H_pad, C_pad)
    T_pad = _round_up(T, Tb)
    n_b = B_pad // B_t
    n_t = T_pad // Tb

    # Cap the recurrence unroll by vreg pressure (full unroll only for small tiles).
    tiles = max(1, (B_t // 8) * (H_pad // 128))
    unroll = Tb if tiles <= 2 else min(Tb, 4)

    # ---- fused weights / biases (PyTorch gate order r, z, n) -----------------
    def pad_gates(a):   # pad each of the 3 gate blocks on the last axis H -> H_pad
        parts = [a[..., g * H:(g + 1) * H] for g in range(3)]
        cfg = [(0, 0)] * (a.ndim - 1) + [(0, H_pad - H)]
        return jnp.concatenate([jnp.pad(p, cfg) for p in parts], axis=-1)

    # b_ir+b_hr and b_iz+b_hz (and b_in) fold into the input projection;
    # b_hn must stay inside r * (.), so it rides in the hp slab.
    b_i = jnp.concatenate([
        b_ih[0:H] + b_hh[0:H],
        b_ih[H:2 * H] + b_hh[H:2 * H],
        b_ih[2 * H:3 * H],
    ])
    w_i_p = jnp.pad(pad_gates(w_ih.T), ((0, d_pad - d_inp), (0, 0)))      # (d_pad, 3H_pad)
    b_i_p = pad_gates(b_i.reshape(1, 3 * H))                              # (1, 3H_pad)
    # bf16 recurrent weight (f32 accumulate in-kernel).
    w_h_p = jnp.pad(pad_gates(w_hh.T), ((0, H_pad - H), (0, 0))).astype(jnp.bfloat16)

    def padH(v, cval=0.0):
        return jnp.pad(v, (0, H_pad - H), constant_values=cval)

    zrow = jnp.zeros((H_pad,), jnp.float32)
    hp = jnp.stack([padH(b_hh[2 * H:3 * H]), padH(gamma), padH(beta),
                    padH(mean), padH(var, 1.0), zrow, zrow, zrow])        # (8, H_pad)

    w_lin_p = jnp.pad(w_lin.T, ((0, H_pad - H), (0, C_pad - C)))          # (H_pad, C_pad)
    b_lin_p = jnp.pad(b_lin, (0, C_pad - C)).reshape(1, C_pad)            # (1, C_pad)

    # Raw x is what gets streamed per grid step (d_pad << 3*H_pad bytes).
    x_p = jnp.pad(x, ((0, T_pad - T), (0, B_pad - B), (0, d_pad - d_inp)))

    kernel = functools.partial(gru_mlp_kernel, seq_len=T,
                               needs_mask=(T_pad != T), unroll=unroll)

    out_p, emb_p = pl.pallas_call(
        kernel,
        out_shape=(
            jax.ShapeDtypeStruct((B_pad, C_pad), jnp.float32),
            jax.ShapeDtypeStruct((B_pad, H_pad), jnp.float32),
        ),
        grid_spec=pltpu.PrefetchScalarGridSpec(
            num_scalar_prefetch=0,
            grid=(n_b, n_t),                      # batch blocks outer, time inner (serial)
            in_specs=[
                pl.BlockSpec((Tb, B_t, d_pad), lambda b, t: (t, b, 0)),
                pl.BlockSpec((d_pad, 3 * H_pad), lambda b, t: (0, 0)),
                pl.BlockSpec((1, 3 * H_pad), lambda b, t: (0, 0)),
                pl.BlockSpec((H_pad, 3 * H_pad), lambda b, t: (0, 0)),
                pl.BlockSpec((8, H_pad), lambda b, t: (0, 0)),
                pl.BlockSpec((H_pad, C_pad), lambda b, t: (0, 0)),
                pl.BlockSpec((1, C_pad), lambda b, t: (0, 0)),
            ],
            out_specs=[
                pl.BlockSpec((B_t, C_pad), lambda b, t: (b, 0)),
                pl.BlockSpec((B_t, H_pad), lambda b, t: (b, 0)),
            ],
            scratch_shapes=[pltpu.VMEM((Tb, B_t, 3 * H_pad), jnp.float32)],
        ),
        compiler_params=pltpu.CompilerParams(
            dimension_semantics=("parallel", "arbitrary"),
            vmem_limit_bytes=32 * 1024 * 1024,
        ),
    )(x_p, w_i_p, b_i_p, w_h_p, hp, w_lin_p, b_lin_p)

    out = out_p[:B, :C]
    emb = emb_p[:B, :H]
    if get_embedding:
        return out, emb
    return out


# ---------------------------------------------------------------------------
# Pure-JAX reference (PyTorch GRU eval semantics) for the correctness check
# ---------------------------------------------------------------------------
def gru_forward_ref(x, params):
    T, B, d_inp = x.shape
    w_ih, w_hh = params["w_ih"], params["w_hh"]
    b_ih, b_hh = params["b_ih"], params["b_hh"]
    H = w_hh.shape[1]
    wir, wiz, win = w_ih[0:H], w_ih[H:2 * H], w_ih[2 * H:3 * H]
    whr, whz, whn = w_hh[0:H], w_hh[H:2 * H], w_hh[2 * H:3 * H]
    bir, biz, bin_ = b_ih[0:H], b_ih[H:2 * H], b_ih[2 * H:3 * H]
    bhr, bhz, bhn = b_hh[0:H], b_hh[H:2 * H], b_hh[2 * H:3 * H]

    def step(h, x_t):
        r = jax.nn.sigmoid(x_t @ wir.T + bir + h @ whr.T + bhr)
        z = jax.nn.sigmoid(x_t @ wiz.T + biz + h @ whz.T + bhz)
        n = jnp.tanh(x_t @ win.T + bin_ + r * (h @ whn.T + bhn))
        return (1.0 - z) * n + z * h, None

    h0 = jnp.zeros((B, H), jnp.float32)
    h_final, _ = lax.scan(step, h0, x)
    inv_std = lax.rsqrt(params["var"] + 1e-5)
    bn = (h_final - params["mean"]) * inv_std * params["gamma"] + params["beta"]
    act = jnp.maximum(bn, 0.0)
    out = act @ params["w_lin"].T + params["b_lin"]
    return out, h_final


# ---------------------------------------------------------------------------
# Deterministic parameter construction (mirrors nn.GRU / nn.Linear / BatchNorm1d)
# ---------------------------------------------------------------------------
def make_params(key, d_inp, dim, n_classes):
    H = dim
    k_gru = 1.0 / np.sqrt(H)
    keys = jax.random.split(key, 8)

    w_ih = jax.random.uniform(keys[0], (3 * H, d_inp), jnp.float32, -k_gru, k_gru)
    w_hh = jax.random.uniform(keys[1], (3 * H, H), jnp.float32, -k_gru, k_gru)
    b_ih = jax.random.uniform(keys[2], (3 * H,), jnp.float32, -k_gru, k_gru)
    b_hh = jax.random.uniform(keys[3], (3 * H,), jnp.float32, -k_gru, k_gru)

    k_lin = 1.0 / np.sqrt(H)
    w_lin = jax.random.uniform(keys[4], (n_classes, H), jnp.float32, -k_lin, k_lin)
    b_lin = jax.random.uniform(keys[5], (n_classes,), jnp.float32, -k_lin, k_lin)

    gamma = 1.0 + 0.1 * jax.random.normal(keys[6], (H,), jnp.float32)
    beta = 0.1 * jax.random.normal(keys[7], (H,), jnp.float32)
    mean = 0.05 * jnp.arange(H, dtype=jnp.float32) / H
    var = 1.0 + 0.02 * jnp.arange(H, dtype=jnp.float32) / H

    return {
        "w_ih": w_ih, "w_hh": w_hh, "b_ih": b_ih, "b_hh": b_hh,
        "w_lin": w_lin, "b_lin": b_lin,
        "gamma": gamma, "beta": beta, "mean": mean, "var": var,
    }


if __name__ == "__main__":
    T, B, d_inp, dim, n_classes = 8, 2, 4, 32, 4

    key = jax.random.PRNGKey(0)
    kx, kp = jax.random.split(key)
    x = jax.random.normal(kx, (T, B, d_inp), jnp.float32)        # time-first, like the module
    times = jnp.arange(T * B, dtype=jnp.float32).reshape(T, B)   # unused `_times`
    params = make_params(kp, d_inp, dim, n_classes)

    out, emb = gru_forward(x, times, params, get_embedding=True)
    out = jax.block_until_ready(out)
    emb = jax.block_until_ready(emb)

    out_ref, emb_ref = gru_forward_ref(x, params)
    assert np.allclose(np.asarray(out), np.asarray(out_ref), rtol=2e-2, atol=2e-2), "out mismatch"
    assert np.allclose(np.asarray(emb), np.asarray(emb_ref), rtol=2e-2, atol=2e-2), "emb mismatch"

    print("KERNEL_OK")
</pallas_src>

<mosaic_0001>
module attributes {stable_mosaic.version = 11 : i64} {
  func.func @gru_mlp_kernel(%arg0: i32, %arg1: i32, %arg2: memref<8x8x8xf32, #tpu.memory_space<vmem>>, %arg3: memref<8x384xf32, #tpu.memory_space<vmem>>, %arg4: memref<1x384xf32, #tpu.memory_space<vmem>>, %arg5: memref<128x384xbf16, #tpu.memory_space<vmem>>, %arg6: memref<8x128xf32, #tpu.memory_space<vmem>>, %arg7: memref<128x128xf32, #tpu.memory_space<vmem>>, %arg8: memref<1x128xf32, #tpu.memory_space<vmem>>, %arg9: memref<8x128xf32, #tpu.memory_space<vmem>>, %arg10: memref<8x128xf32, #tpu.memory_space<vmem>>, %arg11: memref<8x8x384xf32, #tpu.memory_space<vmem>>) attributes {dimension_semantics = [#tpu.dimension_semantics<parallel>, #tpu.dimension_semantics<arbitrary>], iteration_bounds = array<i64: 1, 1>, scalar_prefetch = 0 : i64, scratch_operands = 1 : i64, tpu.core_type = #tpu.core_type<tc>, window_params = [{transform_indices = @transform_0, window_bounds = array<i64: 8, 8, 8>}, {pipeline_mode = #tpu.pipeline_mode<synchronous>, transform_indices = @transform_1, window_bounds = array<i64: 8, 384>}, {pipeline_mode = #tpu.pipeline_mode<synchronous>, transform_indices = @transform_2, window_bounds = array<i64: 1, 384>}, {pipeline_mode = #tpu.pipeline_mode<synchronous>, transform_indices = @transform_3, window_bounds = array<i64: 128, 384>}, {pipeline_mode = #tpu.pipeline_mode<synchronous>, transform_indices = @transform_4, window_bounds = array<i64: 8, 128>}, {pipeline_mode = #tpu.pipeline_mode<synchronous>, transform_indices = @transform_5, window_bounds = array<i64: 128, 128>}, {pipeline_mode = #tpu.pipeline_mode<synchronous>, transform_indices = @transform_6, window_bounds = array<i64: 1, 128>}, {transform_indices = @transform_7, window_bounds = array<i64: 8, 128>}, {transform_indices = @transform_8, window_bounds = array<i64: 8, 128>}]} {
    %c0_i32 = arith.constant 0 : i32
    %0 = arith.cmpi eq, %arg1, %c0_i32 : i32
    %1 = arith.extui %0 : i1 to i32
    %c0_i32_0 = arith.constant 0 : i32
    %2 = arith.cmpi ne, %1, %c0_i32_0 : i32
    scf.if %2 {
      %cst_139 = arith.constant 0.000000e+00 : f32
      %348 = vector.broadcast %cst_139 : f32 to vector<8x128xf32>
      %c0_140 = arith.constant 0 : index
      %c0_141 = arith.constant 0 : index
      %349 = vector.load %arg10[%c0_140, %c0_141] : memref<8x128xf32, #tpu.memory_space<vmem>>, vector<8x128xf32>
      tpu.vector_store %arg10[%c0_140, %c0_141], %348 {strides = array<i32>} : memref<8x128xf32, #tpu.memory_space<vmem>>, vector<8x128xf32>,
    } else {
    }
    %c0 = arith.constant 0 : index
    %c0_1 = arith.constant 0 : index
    %3 = vector.load %arg4[%c0, %c0_1] : memref<1x384xf32, #tpu.memory_space<vmem>>, vector<1x384xf32>
    %c0_2 = arith.constant 0 : index
    %c0_3 = arith.constant 0 : index
    %c0_4 = arith.constant 0 : index
    %4 = vector.load %arg2[%c0_2, %c0_3, %c0_4] : memref<8x8x8xf32, #tpu.memory_space<vmem>>, vector<1x8x8xf32>
    %5 = vector.shape_cast %4 : vector<1x8x8xf32> to vector<8x8xf32>
    %c0_5 = arith.constant 0 : index
    %c0_6 = arith.constant 0 : index
    %6 = vector.load %arg3[%c0_5, %c0_6] : memref<8x384xf32, #tpu.memory_space<vmem>>, vector<8x384xf32>
    %cst = arith.constant dense<0.000000e+00> : vector<8x384xf32>
    %7 = tpu.matmul %5, %6, %cst {dimension_numbers = #tpu.dot_dimension_numbers<[1], [0], [0], [1], [0, 0, 1, 1], [], []>} : vector<8x8xf32>, vector<8x384xf32>, vector<8x384xf32> -> vector<8x384xf32>
    %8 = vector.broadcast %3 : vector<1x384xf32> to vector<8x384xf32>
    %9 = arith.addf %7, %8 : vector<8x384xf32>
    %c0_7 = arith.constant 0 : index
    %c0_8 = arith.constant 0 : index
    %c0_9 = arith.constant 0 : index
    %10 = vector.load %arg11[%c0_7, %c0_8, %c0_9] : memref<8x8x384xf32, #tpu.memory_space<vmem>>, vector<1x8x384xf32>
    %11 = vector.shape_cast %10 : vector<1x8x384xf32> to vector<8x384xf32>
    %12 = vector.shape_cast %9 : vector<8x384xf32> to vector<1x8x384xf32>
    tpu.vector_store %arg11[%c0_7, %c0_8, %c0_9], %12 {strides = array<i32>} : memref<8x8x384xf32, #tpu.memory_space<vmem>>, vector<1x8x384xf32>,
    %c1 = arith.constant 1 : index
    %c0_10 = arith.constant 0 : index
    %c0_11 = arith.constant 0 : index
    %13 = vector.load %arg2[%c1, %c0_10, %c0_11] : memref<8x8x8xf32, #tpu.memory_space<vmem>>, vector<1x8x8xf32>
    %14 = vector.shape_cast %13 : vector<1x8x8xf32> to vector<8x8xf32>
    %c0_12 = arith.constant 0 : index
    %c0_13 = arith.constant 0 : index
    %15 = vector.load %arg3[%c0_12, %c0_13] : memref<8x384xf32, #tpu.memory_space<vmem>>, vector<8x384xf32>
    %cst_14 = arith.constant dense<0.000000e+00> : vector<8x384xf32>
    %16 = tpu.matmul %14, %15, %cst_14 {dimension_numbers = #tpu.dot_dimension_numbers<[1], [0], [0], [1], [0, 0, 1, 1], [], []>} : vector<8x8xf32>, vector<8x384xf32>, vector<8x384xf32> -> vector<8x384xf32>
    %17 = vector.broadcast %3 : vector<1x384xf32> to vector<8x384xf32>
    %18 = arith.addf %16, %17 : vector<8x384xf32>
    %c1_15 = arith.constant 1 : index
    %c0_16 = arith.constant 0 : index
    %c0_17 = arith.constant 0 : index
    %19 = vector.load %arg11[%c1_15, %c0_16, %c0_17] : memref<8x8x384xf32, #tpu.memory_space<vmem>>, vector<1x8x384xf32>
    %20 = vector.shape_cast %19 : vector<1x8x384xf32> to vector<8x384xf32>
    %21 = vector.shape_cast %18 : vector<8x384xf32> to vector<1x8x384xf32>
    tpu.vector_store %arg11[%c1_15, %c0_16, %c0_17], %21 {strides = array<i32>} : memref<8x8x384xf32, #tpu.memory_space<vmem>>, vector<1x8x384xf32>,
    %c2 = arith.constant 2 : index
    %c0_18 = arith.constant 0 : index
    %c0_19 = arith.constant 0 : index
    %22 = vector.load %arg2[%c2, %c0_18, %c0_19] : memref<8x8x8xf32, #tpu.memory_space<vmem>>, vector<1x8x8xf32>
    %23 = vector.shape_cast %22 : vector<1x8x8xf32> to vector<8x8xf32>
    %c0_20 = arith.constant 0 : index
    %c0_21 = arith.constant 0 : index
    %24 = vector.load %arg3[%c0_20, %c0_21] : memref<8x384xf32, #tpu.memory_space<vmem>>, vector<8x384xf32>
    %cst_22 = arith.constant dense<0.000000e+00> : vector<8x384xf32>
    %25 = tpu.matmul %23, %24, %cst_22 {dimension_numbers = #tpu.dot_dimension_numbers<[1], [0], [0], [1], [0, 0, 1, 1], [], []>} : vector<8x8xf32>, vector<8x384xf32>, vector<8x384xf32> -> vector<8x384xf32>
    %26 = vector.broadcast %3 : vector<1x384xf32> to vector<8x384xf32>
    %27 = arith.addf %25, %26 : vector<8x384xf32>
    %c2_23 = arith.constant 2 : index
    %c0_24 = arith.constant 0 : index
    %c0_25 = arith.constant 0 : index
    %28 = vector.load %arg11[%c2_23, %c0_24, %c0_25] : memref<8x8x384xf32, #tpu.memory_space<vmem>>, vector<1x8x384xf32>
    %29 = vector.shape_cast %28 : vector<1x8x384xf32> to vector<8x384xf32>
    %30 = vector.shape_cast %27 : vector<8x384xf32> to vector<1x8x384xf32>
    tpu.vector_store %arg11[%c2_23, %c0_24, %c0_25], %30 {strides = array<i32>} : memref<8x8x384xf32, #tpu.memory_space<vmem>>, vector<1x8x384xf32>,
    %c3 = arith.constant 3 : index
    %c0_26 = arith.constant 0 : index
    %c0_27 = arith.constant 0 : index
    %31 = vector.load %arg2[%c3, %c0_26, %c0_27] : memref<8x8x8xf32, #tpu.memory_space<vmem>>, vector<1x8x8xf32>
    %32 = vector.shape_cast %31 : vector<1x8x8xf32> to vector<8x8xf32>
    %c0_28 = arith.constant 0 : index
    %c0_29 = arith.constant 0 : index
    %33 = vector.load %arg3[%c0_28, %c0_29] : memref<8x384xf32, #tpu.memory_space<vmem>>, vector<8x384xf32>
    %cst_30 = arith.constant dense<0.000000e+00> : vector<8x384xf32>
    %34 = tpu.matmul %32, %33, %cst_30 {dimension_numbers = #tpu.dot_dimension_numbers<[1], [0], [0], [1], [0, 0, 1, 1], [], []>} : vector<8x8xf32>, vector<8x384xf32>, vector<8x384xf32> -> vector<8x384xf32>
    %35 = vector.broadcast %3 : vector<1x384xf32> to vector<8x384xf32>
    %36 = arith.addf %34, %35 : vector<8x384xf32>
    %c3_31 = arith.constant 3 : index
    %c0_32 = arith.constant 0 : index
    %c0_33 = arith.constant 0 : index
    %37 = vector.load %arg11[%c3_31, %c0_32, %c0_33] : memref<8x8x384xf32, #tpu.memory_space<vmem>>, vector<1x8x384xf32>
    %38 = vector.shape_cast %37 : vector<1x8x384xf32> to vector<8x384xf32>
    %39 = vector.shape_cast %36 : vector<8x384xf32> to vector<1x8x384xf32>
    tpu.vector_store %arg11[%c3_31, %c0_32, %c0_33], %39 {strides = array<i32>} : memref<8x8x384xf32, #tpu.memory_space<vmem>>, vector<1x8x384xf32>,
    %c4 = arith.constant 4 : index
    %c0_34 = arith.constant 0 : index
    %c0_35 = arith.constant 0 : index
    %40 = vector.load %arg2[%c4, %c0_34, %c0_35] : memref<8x8x8xf32, #tpu.memory_space<vmem>>, vector<1x8x8xf32>
    %41 = vector.shape_cast %40 : vector<1x8x8xf32> to vector<8x8xf32>
    %c0_36 = arith.constant 0 : index
    %c0_37 = arith.constant 0 : index
    %42 = vector.load %arg3[%c0_36, %c0_37] : memref<8x384xf32, #tpu.memory_space<vmem>>, vector<8x384xf32>
    %cst_38 = arith.constant dense<0.000000e+00> : vector<8x384xf32>
    %43 = tpu.matmul %41, %42, %cst_38 {dimension_numbers = #tpu.dot_dimension_numbers<[1], [0], [0], [1], [0, 0, 1, 1], [], []>} : vector<8x8xf32>, vector<8x384xf32>, vector<8x384xf32> -> vector<8x384xf32>
    %44 = vector.broadcast %3 : vector<1x384xf32> to vector<8x384xf32>
    %45 = arith.addf %43, %44 : vector<8x384xf32>
    %c4_39 = arith.constant 4 : index
    %c0_40 = arith.constant 0 : index
    %c0_41 = arith.constant 0 : index
    %46 = vector.load %arg11[%c4_39, %c0_40, %c0_41] : memref<8x8x384xf32, #tpu.memory_space<vmem>>, vector<1x8x384xf32>
    %47 = vector.shape_cast %46 : vector<1x8x384xf32> to vector<8x384xf32>
    %48 = vector.shape_cast %45 : vector<8x384xf32> to vector<1x8x384xf32>
    tpu.vector_store %arg11[%c4_39, %c0_40, %c0_41], %48 {strides = array<i32>} : memref<8x8x384xf32, #tpu.memory_space<vmem>>, vector<1x8x384xf32>,
    %c5 = arith.constant 5 : index
    %c0_42 = arith.constant 0 : index
    %c0_43 = arith.constant 0 : index
    %49 = vector.load %arg2[%c5, %c0_42, %c0_43] : memref<8x8x8xf32, #tpu.memory_space<vmem>>, vector<1x8x8xf32>
    %50 = vector.shape_cast %49 : vector<1x8x8xf32> to vector<8x8xf32>
    %c0_44 = arith.constant 0 : index
    %c0_45 = arith.constant 0 : index
    %51 = vector.load %arg3[%c0_44, %c0_45] : memref<8x384xf32, #tpu.memory_space<vmem>>, vector<8x384xf32>
    %cst_46 = arith.constant dense<0.000000e+00> : vector<8x384xf32>
    %52 = tpu.matmul %50, %51, %cst_46 {dimension_numbers = #tpu.dot_dimension_numbers<[1], [0], [0], [1], [0, 0, 1, 1], [], []>} : vector<8x8xf32>, vector<8x384xf32>, vector<8x384xf32> -> vector<8x384xf32>
    %53 = vector.broadcast %3 : vector<1x384xf32> to vector<8x384xf32>
    %54 = arith.addf %52, %53 : vector<8x384xf32>
    %c5_47 = arith.constant 5 : index
    %c0_48 = arith.constant 0 : index
    %c0_49 = arith.constant 0 : index
    %55 = vector.load %arg11[%c5_47, %c0_48, %c0_49] : memref<8x8x384xf32, #tpu.memory_space<vmem>>, vector<1x8x384xf32>
    %56 = vector.shape_cast %55 : vector<1x8x384xf32> to vector<8x384xf32>
    %57 = vector.shape_cast %54 : vector<8x384xf32> to vector<1x8x384xf32>
    tpu.vector_store %arg11[%c5_47, %c0_48, %c0_49], %57 {strides = array<i32>} : memref<8x8x384xf32, #tpu.memory_space<vmem>>, vector<1x8x384xf32>,
    %c6 = arith.constant 6 : index
    %c0_50 = arith.constant 0 : index
    %c0_51 = arith.constant 0 : index
    %58 = vector.load %arg2[%c6, %c0_50, %c0_51] : memref<8x8x8xf32, #tpu.memory_space<vmem>>, vector<1x8x8xf32>
    %59 = vector.shape_cast %58 : vector<1x8x8xf32> to vector<8x8xf32>
    %c0_52 = arith.constant 0 : index
    %c0_53 = arith.constant 0 : index
    %60 = vector.load %arg3[%c0_52, %c0_53] : memref<8x384xf32, #tpu.memory_space<vmem>>, vector<8x384xf32>
    %cst_54 = arith.constant dense<0.000000e+00> : vector<8x384xf32>
    %61 = tpu.matmul %59, %60, %cst_54 {dimension_numbers = #tpu.dot_dimension_numbers<[1], [0], [0], [1], [0, 0, 1, 1], [], []>} : vector<8x8xf32>, vector<8x384xf32>, vector<8x384xf32> -> vector<8x384xf32>
    %62 = vector.broadcast %3 : vector<1x384xf32> to vector<8x384xf32>
    %63 = arith.addf %61, %62 : vector<8x384xf32>
    %c6_55 = arith.constant 6 : index
    %c0_56 = arith.constant 0 : index
    %c0_57 = arith.constant 0 : index
    %64 = vector.load %arg11[%c6_55, %c0_56, %c0_57] : memref<8x8x384xf32, #tpu.memory_space<vmem>>, vector<1x8x384xf32>
    %65 = vector.shape_cast %64 : vector<1x8x384xf32> to vector<8x384xf32>
    %66 = vector.shape_cast %63 : vector<8x384xf32> to vector<1x8x384xf32>
    tpu.vector_store %arg11[%c6_55, %c0_56, %c0_57], %66 {strides = array<i32>} : memref<8x8x384xf32, #tpu.memory_space<vmem>>, vector<1x8x384xf32>,
    %c7 = arith.constant 7 : index
    %c0_58 = arith.constant 0 : index
    %c0_59 = arith.constant 0 : index
    %67 = vector.load %arg2[%c7, %c0_58, %c0_59] : memref<8x8x8xf32, #tpu.memory_space<vmem>>, vector<1x8x8xf32>
    %68 = vector.shape_cast %67 : vector<1x8x8xf32> to vector<8x8xf32>
    %c0_60 = arith.constant 0 : index
    %c0_61 = arith.constant 0 : index
    %69 = vector.load %arg3[%c0_60, %c0_61] : memref<8x384xf32, #tpu.memory_space<vmem>>, vector<8x384xf32>
    %cst_62 = arith.constant dense<0.000000e+00> : vector<8x384xf32>
    %70 = tpu.matmul %68, %69, %cst_62 {dimension_numbers = #tpu.dot_dimension_numbers<[1], [0], [0], [1], [0, 0, 1, 1], [], []>} : vector<8x8xf32>, vector<8x384xf32>, vector<8x384xf32> -> vector<8x384xf32>
    %71 = vector.broadcast %3 : vector<1x384xf32> to vector<8x384xf32>
    %72 = arith.addf %70, %71 : vector<8x384xf32>
    %c7_63 = arith.constant 7 : index
    %c0_64 = arith.constant 0 : index
    %c0_65 = arith.constant 0 : index
    %73 = vector.load %arg11[%c7_63, %c0_64, %c0_65] : memref<8x8x384xf32, #tpu.memory_space<vmem>>, vector<1x8x384xf32>
    %74 = vector.shape_cast %73 : vector<1x8x384xf32> to vector<8x384xf32>
    %75 = vector.shape_cast %72 : vector<8x384xf32> to vector<1x8x384xf32>
    tpu.vector_store %arg11[%c7_63, %c0_64, %c0_65], %75 {strides = array<i32>} : memref<8x8x384xf32, #tpu.memory_space<vmem>>, vector<1x8x384xf32>,
    %c0_66 = arith.constant 0 : index
    %c0_67 = arith.constant 0 : index
    %76 = vector.load %arg6[%c0_66, %c0_67] : memref<8x128xf32, #tpu.memory_space<vmem>>, vector<1x128xf32>
    %77 = vector.shape_cast %76 : vector<1x128xf32> to vector<1x128xf32>
    %78 = vector.broadcast %77 : vector<1x128xf32> to vector<8x128xf32>
    %c0_68 = arith.constant 0 : index
    %c0_69 = arith.constant 0 : index
    %79 = vector.load %arg10[%c0_68, %c0_69] : memref<8x128xf32, #tpu.memory_space<vmem>>, vector<8x128xf32>
    %c0_i32_70 = arith.constant 0 : i32
    %80 = arith.index_cast %c0_i32_70 : i32 to index
    %c0_71 = arith.constant 0 : index
    %c0_72 = arith.constant 0 : index
    %81 = vector.load %arg11[%80, %c0_71, %c0_72] : memref<8x8x384xf32, #tpu.memory_space<vmem>>, vector<1x8x384xf32>
    %82 = vector.shape_cast %81 : vector<1x8x384xf32> to vector<8x384xf32>
    %83 = arith.truncf %79 : vector<8x128xf32> to vector<8x128xbf16>
    %c0_73 = arith.constant 0 : index
    %c0_74 = arith.constant 0 : index
    %84 = vector.load %arg5[%c0_73, %c0_74] : memref<128x384xbf16, #tpu.memory_space<vmem>>, vector<128x384xbf16>
    %cst_75 = arith.constant dense<0.000000e+00> : vector<8x384xf32>
    %85 = tpu.matmul %83, %84, %cst_75 {dimension_numbers = #tpu.dot_dimension_numbers<[1], [0], [0], [1], [0, 0, 1, 1], [], []>} : vector<8x128xbf16>, vector<128x384xbf16>, vector<8x384xf32> -> vector<8x384xf32>
    %86 = vector.extract_strided_slice %82 {offsets = [0, 0], sizes = [8, 128], strides = [1, 1]} : vector<8x384xf32> to vector<8x128xf32>
    %87 = vector.extract_strided_slice %85 {offsets = [0, 0], sizes = [8, 128], strides = [1, 1]} : vector<8x384xf32> to vector<8x128xf32>
    %88 = arith.addf %86, %87 : vector<8x128xf32>
    %89 = arith.negf %88 : vector<8x128xf32>
    %90 = math.exp %89 : vector<8x128xf32>
    %cst_76 = arith.constant 1.000000e+00 : f32
    %91 = vector.broadcast %cst_76 : f32 to vector<8x128xf32>
    %92 = arith.addf %91, %90 : vector<8x128xf32>
    %93 = arith.divf %91, %92 : vector<8x128xf32>
    %94 = vector.extract_strided_slice %82 {offsets = [0, 128], sizes = [8, 128], strides = [1, 1]} : vector<8x384xf32> to vector<8x128xf32>
    %95 = vector.extract_strided_slice %85 {offsets = [0, 128], sizes = [8, 128], strides = [1, 1]} : vector<8x384xf32> to vector<8x128xf32>
    %96 = arith.addf %94, %95 : vector<8x128xf32>
    %97 = arith.negf %96 : vector<8x128xf32>
    %98 = math.exp %97 : vector<8x128xf32>
    %cst_77 = arith.constant 1.000000e+00 : f32
    %99 = vector.broadcast %cst_77 : f32 to vector<8x128xf32>
    %100 = arith.addf %99, %98 : vector<8x128xf32>
    %101 = arith.divf %99, %100 : vector<8x128xf32>
    %102 = vector.extract_strided_slice %82 {offsets = [0, 256], sizes = [8, 128], strides = [1, 1]} : vector<8x384xf32> to vector<8x128xf32>
    %103 = vector.extract_strided_slice %85 {offsets = [0, 256], sizes = [8, 128], strides = [1, 1]} : vector<8x384xf32> to vector<8x128xf32>
    %104 = arith.addf %103, %78 : vector<8x128xf32>
    %105 = arith.mulf %93, %104 : vector<8x128xf32>
    %106 = arith.addf %102, %105 : vector<8x128xf32>
    %107 = math.tanh %106 : vector<8x128xf32>
    %cst_78 = arith.constant 1.000000e+00 : f32
    %108 = vector.broadcast %cst_78 : f32 to vector<8x128xf32>
    %109 = arith.subf %108, %101 : vector<8x128xf32>
    %110 = arith.mulf %109, %107 : vector<8x128xf32>
    %111 = arith.mulf %101, %79 : vector<8x128xf32>
    %112 = arith.addf %110, %111 : vector<8x128xf32>
    %c1_i32 = arith.constant 1 : i32
    %113 = arith.index_cast %c1_i32 : i32 to index
    %c0_79 = arith.constant 0 : index
    %c0_80 = arith.constant 0 : index
    %114 = vector.load %arg11[%113, %c0_79, %c0_80] : memref<8x8x384xf32, #tpu.memory_space<vmem>>, vector<1x8x384xf32>
    %115 = vector.shape_cast %114 : vector<1x8x384xf32> to vector<8x384xf32>
    %116 = arith.truncf %112 : vector<8x128xf32> to vector<8x128xbf16>
    %c0_81 = arith.constant 0 : index
    %c0_82 = arith.constant 0 : index
    %117 = vector.load %arg5[%c0_81, %c0_82] : memref<128x384xbf16, #tpu.memory_space<vmem>>, vector<128x384xbf16>
    %cst_83 = arith.constant dense<0.000000e+00> : vector<8x384xf32>
    %118 = tpu.matmul %116, %117, %cst_83 {dimension_numbers = #tpu.dot_dimension_numbers<[1], [0], [0], [1], [0, 0, 1, 1], [], []>} : vector<8x128xbf16>, vector<128x384xbf16>, vector<8x384xf32> -> vector<8x384xf32>
    %119 = vector.extract_strided_slice %115 {offsets = [0, 0], sizes = [8, 128], strides = [1, 1]} : vector<8x384xf32> to vector<8x128xf32>
    %120 = vector.extract_strided_slice %118 {offsets = [0, 0], sizes = [8, 128], strides = [1, 1]} : vector<8x384xf32> to vector<8x128xf32>
    %121 = arith.addf %119, %120 : vector<8x128xf32>
    %122 = arith.negf %121 : vector<8x128xf32>
    %123 = math.exp %122 : vector<8x128xf32>
    %cst_84 = arith.constant 1.000000e+00 : f32
    %124 = vector.broadcast %cst_84 : f32 to vector<8x128xf32>
    %125 = arith.addf %124, %123 : vector<8x128xf32>
    %126 = arith.divf %124, %125 : vector<8x128xf32>
    %127 = vector.extract_strided_slice %115 {offsets = [0, 128], sizes = [8, 128], strides = [1, 1]} : vector<8x384xf32> to vector<8x128xf32>
    %128 = vector.extract_strided_slice %118 {offsets = [0, 128], sizes = [8, 128], strides = [1, 1]} : vector<8x384xf32> to vector<8x128xf32>
    %129 = arith.addf %127, %128 : vector<8x128xf32>
    %130 = arith.negf %129 : vector<8x128xf32>
    %131 = math.exp %130 : vector<8x128xf32>
    %cst_85 = arith.constant 1.000000e+00 : f32
    %132 = vector.broadcast %cst_85 : f32 to vector<8x128xf32>
    %133 = arith.addf %132, %131 : vector<8x128xf32>
    %134 = arith.divf %132, %133 : vector<8x128xf32>
    %135 = vector.extract_strided_slice %115 {offsets = [0, 256], sizes = [8, 128], strides = [1, 1]} : vector<8x384xf32> to vector<8x128xf32>
    %136 = vector.extract_strided_slice %118 {offsets = [0, 256], sizes = [8, 128], strides = [1, 1]} : vector<8x384xf32> to vector<8x128xf32>
    %137 = arith.addf %136, %78 : vector<8x128xf32>
    %138 = arith.mulf %126, %137 : vector<8x128xf32>
    %139 = arith.addf %135, %138 : vector<8x128xf32>
    %140 = math.tanh %139 : vector<8x128xf32>
    %cst_86 = arith.constant 1.000000e+00 : f32
    %141 = vector.broadcast %cst_86 : f32 to vector<8x128xf32>
    %142 = arith.subf %141, %134 : vector<8x128xf32>
    %143 = arith.mulf %142, %140 : vector<8x128xf32>
    %144 = arith.mulf %134, %112 : vector<8x128xf32>
    %145 = arith.addf %143, %144 : vector<8x128xf32>
    %c2_i32 = arith.constant 2 : i32
    %146 = arith.index_cast %c2_i32 : i32 to index
    %c0_87 = arith.constant 0 : index
    %c0_88 = arith.constant 0 : index
    %147 = vector.load %arg11[%146, %c0_87, %c0_88] : memref<8x8x384xf32, #tpu.memory_space<vmem>>, vector<1x8x384xf32>
    %148 = vector.shape_cast %147 : vector<1x8x384xf32> to vector<8x384xf32>
    %149 = arith.truncf %145 : vector<8x128xf32> to vector<8x128xbf16>
    %c0_89 = arith.constant 0 : index
    %c0_90 = arith.constant 0 : index
    %150 = vector.load %arg5[%c0_89, %c0_90] : memref<128x384xbf16, #tpu.memory_space<vmem>>, vector<128x384xbf16>
    %cst_91 = arith.constant dense<0.000000e+00> : vector<8x384xf32>
    %151 = tpu.matmul %149, %150, %cst_91 {dimension_numbers = #tpu.dot_dimension_numbers<[1], [0], [0], [1], [0, 0, 1, 1], [], []>} : vector<8x128xbf16>, vector<128x384xbf16>, vector<8x384xf32> -> vector<8x384xf32>
    %152 = vector.extract_strided_slice %148 {offsets = [0, 0], sizes = [8, 128], strides = [1, 1]} : vector<8x384xf32> to vector<8x128xf32>
    %153 = vector.extract_strided_slice %151 {offsets = [0, 0], sizes = [8, 128], strides = [1, 1]} : vector<8x384xf32> to vector<8x128xf32>
    %154 = arith.addf %152, %153 : vector<8x128xf32>
    %155 = arith.negf %154 : vector<8x128xf32>
    %156 = math.exp %155 : vector<8x128xf32>
    %cst_92 = arith.constant 1.000000e+00 : f32
    %157 = vector.broadcast %cst_92 : f32 to vector<8x128xf32>
    %158 = arith.addf %157, %156 : vector<8x128xf32>
    %159 = arith.divf %157, %158 : vector<8x128xf32>
    %160 = vector.extract_strided_slice %148 {offsets = [0, 128], sizes = [8, 128], strides = [1, 1]} : vector<8x384xf32> to vector<8x128xf32>
    %161 = vector.extract_strided_slice %151 {offsets = [0, 128], sizes = [8, 128], strides = [1, 1]} : vector<8x384xf32> to vector<8x128xf32>
    %162 = arith.addf %160, %161 : vector<8x128xf32>
    %163 = arith.negf %162 : vector<8x128xf32>
    %164 = math.exp %163 : vector<8x128xf32>
    %cst_93 = arith.constant 1.000000e+00 : f32
    %165 = vector.broadcast %cst_93 : f32 to vector<8x128xf32>
    %166 = arith.addf %165, %164 : vector<8x128xf32>
    %167 = arith.divf %165, %166 : vector<8x128xf32>
    %168 = vector.extract_strided_slice %148 {offsets = [0, 256], sizes = [8, 128], strides = [1, 1]} : vector<8x384xf32> to vector<8x128xf32>
    %169 = vector.extract_strided_slice %151 {offsets = [0, 256], sizes = [8, 128], strides = [1, 1]} : vector<8x384xf32> to vector<8x128xf32>
    %170 = arith.addf %169, %78 : vector<8x128xf32>
    %171 = arith.mulf %159, %170 : vector<8x128xf32>
    %172 = arith.addf %168, %171 : vector<8x128xf32>
    %173 = math.tanh %172 : vector<8x128xf32>
    %cst_94 = arith.constant 1.000000e+00 : f32
    %174 = vector.broadcast %cst_94 : f32 to vector<8x128xf32>
    %175 = arith.subf %174, %167 : vector<8x128xf32>
    %176 = arith.mulf %175, %173 : vector<8x128xf32>
    %177 = arith.mulf %167, %145 : vector<8x128xf32>
    %178 = arith.addf %176, %177 : vector<8x128xf32>
    %c3_i32 = arith.constant 3 : i32
    %179 = arith.index_cast %c3_i32 : i32 to index
    %c0_95 = arith.constant 0 : index
    %c0_96 = arith.constant 0 : index
    %180 = vector.load %arg11[%179, %c0_95, %c0_96] : memref<8x8x384xf32, #tpu.memory_space<vmem>>, vector<1x8x384xf32>
    %181 = vector.shape_cast %180 : vector<1x8x384xf32> to vector<8x384xf32>
    %182 = arith.truncf %178 : vector<8x128xf32> to vector<8x128xbf16>
    %c0_97 = arith.constant 0 : index
    %c0_98 = arith.constant 0 : index
    %183 = vector.load %arg5[%c0_97, %c0_98] : memref<128x384xbf16, #tpu.memory_space<vmem>>, vector<128x384xbf16>
    %cst_99 = arith.constant dense<0.000000e+00> : vector<8x384xf32>
    %184 = tpu.matmul %182, %183, %cst_99 {dimension_numbers = #tpu.dot_dimension_numbers<[1], [0], [0], [1], [0, 0, 1, 1], [], []>} : vector<8x128xbf16>, vector<128x384xbf16>, vector<8x384xf32> -> vector<8x384xf32>
    %185 = vector.extract_strided_slice %181 {offsets = [0, 0], sizes = [8, 128], strides = [1, 1]} : vector<8x384xf32> to vector<8x128xf32>
    %186 = vector.extract_strided_slice %184 {offsets = [0, 0], sizes = [8, 128], strides = [1, 1]} : vector<8x384xf32> to vector<8x128xf32>
    %187 = arith.addf %185, %186 : vector<8x128xf32>
    %188 = arith.negf %187 : vector<8x128xf32>
    %189 = math.exp %188 : vector<8x128xf32>
    %cst_100 = arith.constant 1.000000e+00 : f32
    %190 = vector.broadcast %cst_100 : f32 to vector<8x128xf32>
    %191 = arith.addf %190, %189 : vector<8x128xf32>
    %192 = arith.divf %190, %191 : vector<8x128xf32>
    %193 = vector.extract_strided_slice %181 {offsets = [0, 128], sizes = [8, 128], strides = [1, 1]} : vector<8x384xf32> to vector<8x128xf32>
    %194 = vector.extract_strided_slice %184 {offsets = [0, 128], sizes = [8, 128], strides = [1, 1]} : vector<8x384xf32> to vector<8x128xf32>
    %195 = arith.addf %193, %194 : vector<8x128xf32>
    %196 = arith.negf %195 : vector<8x128xf32>
    %197 = math.exp %196 : vector<8x128xf32>
    %cst_101 = arith.constant 1.000000e+00 : f32
    %198 = vector.broadcast %cst_101 : f32 to vector<8x128xf32>
    %199 = arith.addf %198, %197 : vector<8x128xf32>
    %200 = arith.divf %198, %199 : vector<8x128xf32>
    %201 = vector.extract_strided_slice %181 {offsets = [0, 256], sizes = [8, 128], strides = [1, 1]} : vector<8x384xf32> to vector<8x128xf32>
    %202 = vector.extract_strided_slice %184 {offsets = [0, 256], sizes = [8, 128], strides = [1, 1]} : vector<8x384xf32> to vector<8x128xf32>
    %203 = arith.addf %202, %78 : vector<8x128xf32>
    %204 = arith.mulf %192, %203 : vector<8x128xf32>
    %205 = arith.addf %201, %204 : vector<8x128xf32>
    %206 = math.tanh %205 : vector<8x128xf32>
    %cst_102 = arith.constant 1.000000e+00 : f32
    %207 = vector.broadcast %cst_102 : f32 to vector<8x128xf32>
    %208 = arith.subf %207, %200 : vector<8x128xf32>
    %209 = arith.mulf %208, %206 : vector<8x128xf32>
    %210 = arith.mulf %200, %178 : vector<8x128xf32>
    %211 = arith.addf %209, %210 : vector<8x128xf32>
    %c4_i32 = arith.constant 4 : i32
    %212 = arith.index_cast %c4_i32 : i32 to index
    %c0_103 = arith.constant 0 : index
    %c0_104 = arith.constant 0 : index
    %213 = vector.load %arg11[%212, %c0_103, %c0_104] : memref<8x8x384xf32, #tpu.memory_space<vmem>>, vector<1x8x384xf32>
    %214 = vector.shape_cast %213 : vector<1x8x384xf32> to vector<8x384xf32>
    %215 = arith.truncf %211 : vector<8x128xf32> to vector<8x128xbf16>
    %c0_105 = arith.constant 0 : index
    %c0_106 = arith.constant 0 : index
    %216 = vector.load %arg5[%c0_105, %c0_106] : memref<128x384xbf16, #tpu.memory_space<vmem>>, vector<128x384xbf16>
    %cst_107 = arith.constant dense<0.000000e+00> : vector<8x384xf32>
    %217 = tpu.matmul %215, %216, %cst_107 {dimension_numbers = #tpu.dot_dimension_numbers<[1], [0], [0], [1], [0, 0, 1, 1], [], []>} : vector<8x128xbf16>, vector<128x384xbf16>, vector<8x384xf32> -> vector<8x384xf32>
    %218 = vector.extract_strided_slice %214 {offsets = [0, 0], sizes = [8, 128], strides = [1, 1]} : vector<8x384xf32> to vector<8x128xf32>
    %219 = vector.extract_strided_slice %217 {offsets = [0, 0], sizes = [8, 128], strides = [1, 1]} : vector<8x384xf32> to vector<8x128xf32>
    %220 = arith.addf %218, %219 : vector<8x128xf32>
    %221 = arith.negf %220 : vector<8x128xf32>
    %222 = math.exp %221 : vector<8x128xf32>
    %cst_108 = arith.constant 1.000000e+00 : f32
    %223 = vector.broadcast %cst_108 : f32 to vector<8x128xf32>
    %224 = arith.addf %223, %222 : vector<8x128xf32>
    %225 = arith.divf %223, %224 : vector<8x128xf32>
    %226 = vector.extract_strided_slice %214 {offsets = [0, 128], sizes = [8, 128], strides = [1, 1]} : vector<8x384xf32> to vector<8x128xf32>
    %227 = vector.extract_strided_slice %217 {offsets = [0, 128], sizes = [8, 128], strides = [1, 1]} : vector<8x384xf32> to vector<8x128xf32>
    %228 = arith.addf %226, %227 : vector<8x128xf32>
    %229 = arith.negf %228 : vector<8x128xf32>
    %230 = math.exp %229 : vector<8x128xf32>
    %cst_109 = arith.constant 1.000000e+00 : f32
    %231 = vector.broadcast %cst_109 : f32 to vector<8x128xf32>
    %232 = arith.addf %231, %230 : vector<8x128xf32>
    %233 = arith.divf %231, %232 : vector<8x128xf32>
    %234 = vector.extract_strided_slice %214 {offsets = [0, 256], sizes = [8, 128], strides = [1, 1]} : vector<8x384xf32> to vector<8x128xf32>
    %235 = vector.extract_strided_slice %217 {offsets = [0, 256], sizes = [8, 128], strides = [1, 1]} : vector<8x384xf32> to vector<8x128xf32>
    %236 = arith.addf %235, %78 : vector<8x128xf32>
    %237 = arith.mulf %225, %236 : vector<8x128xf32>
    %238 = arith.addf %234, %237 : vector<8x128xf32>
    %239 = math.tanh %238 : vector<8x128xf32>
    %cst_110 = arith.constant 1.000000e+00 : f32
    %240 = vector.broadcast %cst_110 : f32 to vector<8x128xf32>
    %241 = arith.subf %240, %233 : vector<8x128xf32>
    %242 = arith.mulf %241, %239 : vector<8x128xf32>
    %243 = arith.mulf %233, %211 : vector<8x128xf32>
    %244 = arith.addf %242, %243 : vector<8x128xf32>
    %c5_i32 = arith.constant 5 : i32
    %245 = arith.index_cast %c5_i32 : i32 to index
    %c0_111 = arith.constant 0 : index
    %c0_112 = arith.constant 0 : index
    %246 = vector.load %arg11[%245, %c0_111, %c0_112] : memref<8x8x384xf32, #tpu.memory_space<vmem>>, vector<1x8x384xf32>
    %247 = vector.shape_cast %246 : vector<1x8x384xf32> to vector<8x384xf32>
    %248 = arith.truncf %244 : vector<8x128xf32> to vector<8x128xbf16>
    %c0_113 = arith.constant 0 : index
    %c0_114 = arith.constant 0 : index
    %249 = vector.load %arg5[%c0_113, %c0_114] : memref<128x384xbf16, #tpu.memory_space<vmem>>, vector<128x384xbf16>
    %cst_115 = arith.constant dense<0.000000e+00> : vector<8x384xf32>
    %250 = tpu.matmul %248, %249, %cst_115 {dimension_numbers = #tpu.dot_dimension_numbers<[1], [0], [0], [1], [0, 0, 1, 1], [], []>} : vector<8x128xbf16>, vector<128x384xbf16>, vector<8x384xf32> -> vector<8x384xf32>
    %251 = vector.extract_strided_slice %247 {offsets = [0, 0], sizes = [8, 128], strides = [1, 1]} : vector<8x384xf32> to vector<8x128xf32>
    %252 = vector.extract_strided_slice %250 {offsets = [0, 0], sizes = [8, 128], strides = [1, 1]} : vector<8x384xf32> to vector<8x128xf32>
    %253 = arith.addf %251, %252 : vector<8x128xf32>
    %254 = arith.negf %253 : vector<8x128xf32>
    %255 = math.exp %254 : vector<8x128xf32>
    %cst_116 = arith.constant 1.000000e+00 : f32
    %256 = vector.broadcast %cst_116 : f32 to vector<8x128xf32>
    %257 = arith.addf %256, %255 : vector<8x128xf32>
    %258 = arith.divf %256, %257 : vector<8x128xf32>
    %259 = vector.extract_strided_slice %247 {offsets = [0, 128], sizes = [8, 128], strides = [1, 1]} : vector<8x384xf32> to vector<8x128xf32>
    %260 = vector.extract_strided_slice %250 {offsets = [0, 128], sizes = [8, 128], strides = [1, 1]} : vector<8x384xf32> to vector<8x128xf32>
    %261 = arith.addf %259, %260 : vector<8x128xf32>
    %262 = arith.negf %261 : vector<8x128xf32>
    %263 = math.exp %262 : vector<8x128xf32>
    %cst_117 = arith.constant 1.000000e+00 : f32
    %264 = vector.broadcast %cst_117 : f32 to vector<8x128xf32>
    %265 = arith.addf %264, %263 : vector<8x128xf32>
    %266 = arith.divf %264, %265 : vector<8x128xf32>
    %267 = vector.extract_strided_slice %247 {offsets = [0, 256], sizes = [8, 128], strides = [1, 1]} : vector<8x384xf32> to vector<8x128xf32>
    %268 = vector.extract_strided_slice %250 {offsets = [0, 256], sizes = [8, 128], strides = [1, 1]} : vector<8x384xf32> to vector<8x128xf32>
    %269 = arith.addf %268, %78 : vector<8x128xf32>
    %270 = arith.mulf %258, %269 : vector<8x128xf32>
    %271 = arith.addf %267, %270 : vector<8x128xf32>
    %272 = math.tanh %271 : vector<8x128xf32>
    %cst_118 = arith.constant 1.000000e+00 : f32
    %273 = vector.broadcast %cst_118 : f32 to vector<8x128xf32>
    %274 = arith.subf %273, %266 : vector<8x128xf32>
    %275 = arith.mulf %274, %272 : vector<8x128xf32>
    %276 = arith.mulf %266, %244 : vector<8x128xf32>
    %277 = arith.addf %275, %276 : vector<8x128xf32>
    %c6_i32 = arith.constant 6 : i32
    %278 = arith.index_cast %c6_i32 : i32 to index
    %c0_119 = arith.constant 0 : index
    %c0_120 = arith.constant 0 : index
    %279 = vector.load %arg11[%278, %c0_119, %c0_120] : memref<8x8x384xf32, #tpu.memory_space<vmem>>, vector<1x8x384xf32>
    %280 = vector.shape_cast %279 : vector<1x8x384xf32> to vector<8x384xf32>
    %281 = arith.truncf %277 : vector<8x128xf32> to vector<8x128xbf16>
    %c0_121 = arith.constant 0 : index
    %c0_122 = arith.constant 0 : index
    %282 = vector.load %arg5[%c0_121, %c0_122] : memref<128x384xbf16, #tpu.memory_space<vmem>>, vector<128x384xbf16>
    %cst_123 = arith.constant dense<0.000000e+00> : vector<8x384xf32>
    %283 = tpu.matmul %281, %282, %cst_123 {dimension_numbers = #tpu.dot_dimension_numbers<[1], [0], [0], [1], [0, 0, 1, 1], [], []>} : vector<8x128xbf16>, vector<128x384xbf16>, vector<8x384xf32> -> vector<8x384xf32>
    %284 = vector.extract_strided_slice %280 {offsets = [0, 0], sizes = [8, 128], strides = [1, 1]} : vector<8x384xf32> to vector<8x128xf32>
    %285 = vector.extract_strided_slice %283 {offsets = [0, 0], sizes = [8, 128], strides = [1, 1]} : vector<8x384xf32> to vector<8x128xf32>
    %286 = arith.addf %284, %285 : vector<8x128xf32>
    %287 = arith.negf %286 : vector<8x128xf32>
    %288 = math.exp %287 : vector<8x128xf32>
    %cst_124 = arith.constant 1.000000e+00 : f32
    %289 = vector.broadcast %cst_124 : f32 to vector<8x128xf32>
    %290 = arith.addf %289, %288 : vector<8x128xf32>
    %291 = arith.divf %289, %290 : vector<8x128xf32>
    %292 = vector.extract_strided_slice %280 {offsets = [0, 128], sizes = [8, 128], strides = [1, 1]} : vector<8x384xf32> to vector<8x128xf32>
    %293 = vector.extract_strided_slice %283 {offsets = [0, 128], sizes = [8, 128], strides = [1, 1]} : vector<8x384xf32> to vector<8x128xf32>
    %294 = arith.addf %292, %293 : vector<8x128xf32>
    %295 = arith.negf %294 : vector<8x128xf32>
    %296 = math.exp %295 : vector<8x128xf32>
    %cst_125 = arith.constant 1.000000e+00 : f32
    %297 = vector.broadcast %cst_125 : f32 to vector<8x128xf32>
    %298 = arith.addf %297, %296 : vector<8x128xf32>
    %299 = arith.divf %297, %298 : vector<8x128xf32>
    %300 = vector.extract_strided_slice %280 {offsets = [0, 256], sizes = [8, 128], strides = [1, 1]} : vector<8x384xf32> to vector<8x128xf32>
    %301 = vector.extract_strided_slice %283 {offsets = [0, 256], sizes = [8, 128], strides = [1, 1]} : vector<8x384xf32> to vector<8x128xf32>
    %302 = arith.addf %301, %78 : vector<8x128xf32>
    %303 = arith.mulf %291, %302 : vector<8x128xf32>
    %304 = arith.addf %300, %303 : vector<8x128xf32>
    %305 = math.tanh %304 : vector<8x128xf32>
    %cst_126 = arith.constant 1.000000e+00 : f32
    %306 = vector.broadcast %cst_126 : f32 to vector<8x128xf32>
    %307 = arith.subf %306, %299 : vector<8x128xf32>
    %308 = arith.mulf %307, %305 : vector<8x128xf32>
    %309 = arith.mulf %299, %277 : vector<8x128xf32>
    %310 = arith.addf %308, %309 : vector<8x128xf32>
    %c7_i32 = arith.constant 7 : i32
    %311 = arith.index_cast %c7_i32 : i32 to index
    %c0_127 = arith.constant 0 : index
    %c0_128 = arith.constant 0 : index
    %312 = vector.load %arg11[%311, %c0_127, %c0_128] : memref<8x8x384xf32, #tpu.memory_space<vmem>>, vector<1x8x384xf32>
    %313 = vector.shape_cast %312 : vector<1x8x384xf32> to vector<8x384xf32>
    %314 = arith.truncf %310 : vector<8x128xf32> to vector<8x128xbf16>
    %c0_129 = arith.constant 0 : index
    %c0_130 = arith.constant 0 : index
    %315 = vector.load %arg5[%c0_129, %c0_130] : memref<128x384xbf16, #tpu.memory_space<vmem>>, vector<128x384xbf16>
    %cst_131 = arith.constant dense<0.000000e+00> : vector<8x384xf32>
    %316 = tpu.matmul %314, %315, %cst_131 {dimension_numbers = #tpu.dot_dimension_numbers<[1], [0], [0], [1], [0, 0, 1, 1], [], []>} : vector<8x128xbf16>, vector<128x384xbf16>, vector<8x384xf32> -> vector<8x384xf32>
    %317 = vector.extract_strided_slice %313 {offsets = [0, 0], sizes = [8, 128], strides = [1, 1]} : vector<8x384xf32> to vector<8x128xf32>
    %318 = vector.extract_strided_slice %316 {offsets = [0, 0], sizes = [8, 128], strides = [1, 1]} : vector<8x384xf32> to vector<8x128xf32>
    %319 = arith.addf %317, %318 : vector<8x128xf32>
    %320 = arith.negf %319 : vector<8x128xf32>
    %321 = math.exp %320 : vector<8x128xf32>
    %cst_132 = arith.constant 1.000000e+00 : f32
    %322 = vector.broadcast %cst_132 : f32 to vector<8x128xf32>
    %323 = arith.addf %322, %321 : vector<8x128xf32>
    %324 = arith.divf %322, %323 : vector<8x128xf32>
    %325 = vector.extract_strided_slice %313 {offsets = [0, 128], sizes = [8, 128], strides = [1, 1]} : vector<8x384xf32> to vector<8x128xf32>
    %326 = vector.extract_strided_slice %316 {offsets = [0, 128], sizes = [8, 128], strides = [1, 1]} : vector<8x384xf32> to vector<8x128xf32>
    %327 = arith.addf %325, %326 : vector<8x128xf32>
    %328 = arith.negf %327 : vector<8x128xf32>
    %329 = math.exp %328 : vector<8x128xf32>
    %cst_133 = arith.constant 1.000000e+00 : f32
    %330 = vector.broadcast %cst_133 : f32 to vector<8x128xf32>
    %331 = arith.addf %330, %329 : vector<8x128xf32>
    %332 = arith.divf %330, %331 : vector<8x128xf32>
    %333 = vector.extract_strided_slice %313 {offsets = [0, 256], sizes = [8, 128], strides = [1, 1]} : vector<8x384xf32> to vector<8x128xf32>
    %334 = vector.extract_strided_slice %316 {offsets = [0, 256], sizes = [8, 128], strides = [1, 1]} : vector<8x384xf32> to vector<8x128xf32>
    %335 = arith.addf %334, %78 : vector<8x128xf32>
    %336 = arith.mulf %324, %335 : vector<8x128xf32>
    %337 = arith.addf %333, %336 : vector<8x128xf32>
    %338 = math.tanh %337 : vector<8x128xf32>
    %cst_134 = arith.constant 1.000000e+00 : f32
    %339 = vector.broadcast %cst_134 : f32 to vector<8x128xf32>
    %340 = arith.subf %339, %332 : vector<8x128xf32>
    %341 = arith.mulf %340, %338 : vector<8x128xf32>
    %342 = arith.mulf %332, %310 : vector<8x128xf32>
    %343 = arith.addf %341, %342 : vector<8x128xf32>
    %c8_i32 = arith.constant 8 : i32
    %c0_135 = arith.constant 0 : index
    %c0_136 = arith.constant 0 : index
    %344 = vector.load %arg10[%c0_135, %c0_136] : memref<8x128xf32, #tpu.memory_space<vmem>>, vector<8x128xf32>
    tpu.vector_store %arg10[%c0_135, %c0_136], %343 {strides = array<i32>} : memref<8x128xf32, #tpu.memory_space<vmem>>, vector<8x128xf32>,
    %c0_i32_137 = arith.constant 0 : i32
    %345 = arith.cmpi eq, %arg1, %c0_i32_137 : i32
    %346 = arith.extui %345 : i1 to i32
    %c0_i32_138 = arith.constant 0 : i32
    %347 = arith.cmpi ne, %346, %c0_i32_138 : i32
    scf.if %347 {
      %c1_139 = arith.constant 1 : index
      %c0_140 = arith.constant 0 : index
      %348 = vector.load %arg6[%c1_139, %c0_140] : memref<8x128xf32, #tpu.memory_space<vmem>>, vector<1x128xf32>
      %c2_141 = arith.constant 2 : index
      %c0_142 = arith.constant 0 : index
      %349 = vector.load %arg6[%c2_141, %c0_142] : memref<8x128xf32, #tpu.memory_space<vmem>>, vector<1x128xf32>
      %c3_143 = arith.constant 3 : index
      %c0_144 = arith.constant 0 : index
      %350 = vector.load %arg6[%c3_143, %c0_144] : memref<8x128xf32, #tpu.memory_space<vmem>>, vector<1x128xf32>
      %c4_145 = arith.constant 4 : index
      %c0_146 = arith.constant 0 : index
      %351 = vector.load %arg6[%c4_145, %c0_146] : memref<8x128xf32, #tpu.memory_space<vmem>>, vector<1x128xf32>
      %cst_147 = arith.constant 9.99999974E-6 : f32
      %352 = vector.broadcast %cst_147 : f32 to vector<1x128xf32>
      %353 = arith.addf %351, %352 : vector<1x128xf32>
      %354 = math.rsqrt %353 : vector<1x128xf32>
      %355 = vector.broadcast %350 : vector<1x128xf32> to vector<8x128xf32>
      %356 = arith.subf %343, %355 : vector<8x128xf32>
      %357 = vector.broadcast %354 : vector<1x128xf32> to vector<8x128xf32>
      %358 = arith.mulf %356, %357 : vector<8x128xf32>
      %359 = vector.broadcast %348 : vector<1x128xf32> to vector<8x128xf32>
      %360 = arith.mulf %358, %359 : vector<8x128xf32>
      %361 = vector.broadcast %349 : vector<1x128xf32> to vector<8x128xf32>
      %362 = arith.addf %360, %361 : vector<8x128xf32>
      %cst_148 = arith.constant 0.000000e+00 : f32
      %363 = vector.broadcast %cst_148 : f32 to vector<8x128xf32>
      %364 = arith.maximumf %362, %363 : vector<8x128xf32>
      %c0_149 = arith.constant 0 : index
      %c0_150 = arith.constant 0 : index
      %365 = vector.load %arg7[%c0_149, %c0_150] : memref<128x128xf32, #tpu.memory_space<vmem>>, vector<128x128xf32>
      %cst_151 = arith.constant dense<0.000000e+00> : vector<8x128xf32>
      %366 = tpu.matmul %364, %365, %cst_151 {dimension_numbers = #tpu.dot_dimension_numbers<[1], [0], [0], [1], [0, 0, 1, 1], [], []>} : vector<8x128xf32>, vector<128x128xf32>, vector<8x128xf32> -> vector<8x128xf32>
      %c0_152 = arith.constant 0 : index
      %c0_153 = arith.constant 0 : index
      %367 = vector.load %arg8[%c0_152, %c0_153] : memref<1x128xf32, #tpu.memory_space<vmem>>, vector<1x128xf32>
      %368 = vector.broadcast %367 : vector<1x128xf32> to vector<8x128xf32>
      %369 = arith.addf %366, %368 : vector<8x128xf32>
      %c0_154 = arith.constant 0 : index
      %c0_155 = arith.constant 0 : index
      %370 = vector.load %arg9[%c0_154, %c0_155] : memref<8x128xf32, #tpu.memory_space<vmem>>, vector<8x128xf32>
      tpu.vector_store %arg9[%c0_154, %c0_155], %369 {strides = array<i32>} : memref<8x128xf32, #tpu.memory_space<vmem>>, vector<8x128xf32>,
    } else {
    }
    return
  }
  func.func @transform_0(%arg0: i32, %arg1: i32) -> (i32, i32, i32) {
    %c0_i32 = arith.constant 0 : i32
    %c0_i32_0 = arith.constant 0 : i32
    return %arg1, %arg0, %c0_i32 : i32, i32, i32
  }
  func.func @transform_1(%arg0: i32, %arg1: i32) -> (i32, i32) {
    %c0_i32 = arith.constant 0 : i32
    %c0_i32_0 = arith.constant 0 : i32
    %c0_i32_1 = arith.constant 0 : i32
    return %c0_i32, %c0_i32_0 : i32, i32
  }
  func.func @transform_2(%arg0: i32, %arg1: i32) -> (i32, i32) {
    %c0_i32 = arith.constant 0 : i32
    %c0_i32_0 = arith.constant 0 : i32
    %c0_i32_1 = arith.constant 0 : i32
    return %c0_i32, %c0_i32_0 : i32, i32
  }
  func.func @transform_3(%arg0: i32, %arg1: i32) -> (i32, i32) {
    %c0_i32 = arith.constant 0 : i32
    %c0_i32_0 = arith.constant 0 : i32
    %c0_i32_1 = arith.constant 0 : i32
    return %c0_i32, %c0_i32_0 : i32, i32
  }
  func.func @transform_4(%arg0: i32, %arg1: i32) -> (i32, i32) {
    %c0_i32 = arith.constant 0 : i32
    %c0_i32_0 = arith.constant 0 : i32
    %c0_i32_1 = arith.constant 0 : i32
    return %c0_i32, %c0_i32_0 : i32, i32
  }
  func.func @transform_5(%arg0: i32, %arg1: i32) -> (i32, i32) {
    %c0_i32 = arith.constant 0 : i32
    %c0_i32_0 = arith.constant 0 : i32
    %c0_i32_1 = arith.constant 0 : i32
    return %c0_i32, %c0_i32_0 : i32, i32
  }
  func.func @transform_6(%arg0: i32, %arg1: i32) -> (i32, i32) {
    %c0_i32 = arith.constant 0 : i32
    %c0_i32_0 = arith.constant 0 : i32
    %c0_i32_1 = arith.constant 0 : i32
    return %c0_i32, %c0_i32_0 : i32, i32
  }
  func.func @transform_7(%arg0: i32, %arg1: i32) -> (i32, i32) {
    %c0_i32 = arith.constant 0 : i32
    %c0_i32_0 = arith.constant 0 : i32
    return %arg0, %c0_i32 : i32, i32
  }
  func.func @transform_8(%arg0: i32, %arg1: i32) -> (i32, i32) {
    %c0_i32 = arith.constant 0 : i32
    %c0_i32_0 = arith.constant 0 : i32
    return %arg0, %c0_i32 : i32, i32
  }
}

</mosaic_0001>

<llo_original>
// kernel: gru_forward.1
$region0: #{gru_forward.1}
  #allocation0 [shape = 'u32[]', space=smem, size = 0x4, offset = 0x4, fixed_abs, tag = 'smem constant byte address 0x4 - core index']
  #allocation1 [shape = 'u32[144,128]{1,0:T(1,128)}', space=vmem, size = 0x12000, scoped, tag = 'internal scratch']
  #allocation2 [shape = 'f32[8,8,384]{2,1,0:T(8,128)}', space=vmem, size = 0x18000, scoped, tag = 'scratch operand']
  %s0 = inlined_call_operand.vmem [shape: f32[8,8,8], index: 0, kind: input, shape index: {}]
  %s1 = inlined_call_operand.vmem [shape: f32[8,384], index: 1, kind: input, shape index: {}]
  %s2 = inlined_call_operand.vmem [shape: f32[1,384], index: 2, kind: input, shape index: {}]
  %s3 = inlined_call_operand.vmem [shape: bf16[128,384], index: 3, kind: input, shape index: {}]
  %s4 = inlined_call_operand.vmem [shape: f32[8,128], index: 4, kind: input, shape index: {}]
  %s5 = inlined_call_operand.vmem [shape: f32[128,128], index: 5, kind: input, shape index: {}]
  %s6 = inlined_call_operand.vmem [shape: f32[1,128], index: 6, kind: input, shape index: {}]
  %s7 = inlined_call_operand.vmem [shape: f32[8,128], index: 7, kind: output, shape index: {0}]
  %s8 = inlined_call_operand.vmem [shape: f32[8,128], index: 8, kind: output, shape index: {1}]
  %9 = xla_tuple %s7, %s8
  %s10 = sld [smem:[#allocation0]]
  $region54: #{gru_forward.1} parent=0
    _
  %s12 = ssub.s32 1, %s10
  %s13 = scalar_select 0, %s12, %s10
  // Predicated region
  $region2: #{gru_forward.1} parent=0 // pred_check
    _
  $region3: #{gru_forward.1} parent=0 // pred_check_branch
    %15 = sbr.rel (0) target = $region5
  $region4: #{gru_forward.1} parent=0 // pred_region
    _
  $region5: #{gru_forward.1} parent=0 // pred_fallthru
    _
  // Predicated region
  $region6: #{gru_forward.1} parent=0 // pred_check
    _
  $region7: #{gru_forward.1} parent=0 // pred_check_branch
    %17 = sbr.rel (0) target = $region9
  $region8: #{gru_forward.1} parent=0 // pred_region
    _
  $region9: #{gru_forward.1} parent=0 // pred_fallthru
    _
  // Predicated region
  $region10: #{gru_forward.1} parent=0 // pred_check
    _
  $region11: #{gru_forward.1} parent=0 // pred_check_branch
    %19 = sbr.rel (0) target = $region13
  $region12: #{gru_forward.1} parent=0 // pred_region
    _
  $region13: #{gru_forward.1} parent=0 // pred_fallthru
    _
  // Predicated region
  $region14: #{gru_forward.1} parent=0 // pred_check
    _
  $region15: #{gru_forward.1} parent=0 // pred_check_branch
    %21 = sbr.rel (0) target = $region17
  $region16: #{gru_forward.1} parent=0 // pred_region
    _
  $region17: #{gru_forward.1} parent=0 // pred_fallthru
    _
  // Predicated region
  $region18: #{gru_forward.1} parent=0 // pred_check
    _
  $region19: #{gru_forward.1} parent=0 // pred_check_branch
    %23 = sbr.rel (0) target = $region21
  $region20: #{gru_forward.1} parent=0 // pred_region
    _
  $region21: #{gru_forward.1} parent=0 // pred_fallthru
    _
  // Predicated region
  $region22: #{gru_forward.1} parent=0 // pred_check
    _
  $region23: #{gru_forward.1} parent=0 // pred_check_branch
    %25 = sbr.rel (0) target = $region25
  $region24: #{gru_forward.1} parent=0 // pred_region
    _
  $region25: #{gru_forward.1} parent=0 // pred_fallthru
    _
  // Predicated region
  $region26: #{gru_forward.1} parent=0 // pred_check
    _
  $region27: #{gru_forward.1} parent=0 // pred_check_branch
    %27 = sbr.rel (0) target = $region29
  $region28: #{gru_forward.1} parent=0 // pred_region
    _
  $region29: #{gru_forward.1} parent=0 // pred_fallthru
    _
  %p29 = scmp.eq.s32.totalorder 0, 0
  // Predicated region
  $region30: #{gru_forward.1} parent=0 // pred_check
    %p30 = pneg %p29
  $region31: #{gru_forward.1} parent=0 // pred_check_branch
    %32 = sbr.rel (%p30) target = $region33
  $region32: #{gru_forward.1} parent=0 // pred_region
    %33 = vst [vmem:[%s8] sm:$0xff] 0.0
  $region33: #{gru_forward.1} parent=0 // pred_fallthru
    _
  %v34 = vld [vmem:[%s2] sm:$0x7]
  %v35 = vld [vmem:[%s0] sm:$0xff]
  %v36 = vld [vmem:[%s1] sm:$0xff]
  %v37 = vld [vmem:[%s1 + $0x8] sm:$0xff]
  %v38 = vld [vmem:[%s1 + $0x10] sm:$0xff]
  %v40 = vlaneseq
  %v41 = vshrl.u32 %v40, 7
  %v42 = vsub.s32 0, %v41
  %v43 = vrot.slane %v34, %v42
  %v44 = vlaneseq
  %v45 = vshrl.u32 %v44, 7
  %v46 = vsub.s32 1, %v45
  %v47 = vrot.slane %v34, %v46
  %v48 = vlaneseq
  %v49 = vshrl.u32 %v48, 7
  %v50 = vsub.s32 2, %v49
  %v51 = vrot.slane %v34, %v50
  %vm55 = vcmask 64512
  %v57 = vsel %vm55, %v35, 0
  %59 = vmatprep.subr.mxu0 %v37
  %60 = vmatpush1.msra.mxu0 %v36
  %61 = vmatprep.subr.mxu0 0.0
  %62 = vmatpush1.msra.mxu0 0.0
  %63 = vmatprep.subr.mxu0 0.0
  %64 = vmatpush1.msra.mxu0 0.0
  %65 = vmatprep.subr.mxu0 0.0
  %66 = vmatpush1.msra.mxu0 0.0
  %67 = vmatprep.subr.mxu0 0.0
  %68 = vmatpush1.msra.mxu0 0.0
  %69 = vmatprep.subr.mxu0 0.0
  %70 = vmatpush1.msra.mxu0 0.0
  %71 = vmatprep.subr.mxu0 0.0
  %72 = vmatpush1.msra.mxu0 0.0
  %73 = vmatprep.subr.mxu0 0.0
  %74 = vmatpush1.msra.mxu0 0.0
  %75 = vmatprep.subr.mxu0 0.0
  %76 = vmatpush1.msra.mxu0 0.0
  %77 = vmatprep.subr.mxu0 0.0
  %78 = vmatpush1.msra.mxu0 0.0
  %79 = vmatprep.subr.mxu0 0.0
  %80 = vmatpush1.msra.mxu0 0.0
  %81 = vmatprep.subr.mxu0 0.0
  %82 = vmatpush1.msra.mxu0 0.0
  %83 = vmatprep.subr.mxu0 0.0
  %84 = vmatpush1.msra.mxu0 0.0
  %85 = vmatprep.subr.mxu0 0.0
  %86 = vmatpush1.msra.mxu0 0.0
  %87 = vmatprep.subr.mxu0 0.0
  %88 = vmatpush1.msra.mxu0 0.0
  %89 = vmatprep.subr.mxu0 0.0
  %90 = vmatpush1.msra.mxu0 0.0
  %91 = vmatprep.subr.mxu0 0.0
  %92 = vmatpush1.msra.mxu0 0.0
  %93 = vmatprep.subr.mxu0 0.0
  %94 = vmatpush1.msra.mxu0 0.0
  %95 = vmatprep.subr.mxu0 0.0
  %96 = vmatpush1.msra.mxu0 0.0
  %97 = vmatprep.subr.mxu0 0.0
  %98 = vmatpush1.msra.mxu0 0.0
  %99 = vmatprep.subr.mxu0 0.0
  %100 = vmatpush1.msra.mxu0 0.0
  %101 = vmatprep.subr.mxu0 0.0
  %102 = vmatpush1.msra.mxu0 0.0
  %103 = vmatprep.subr.mxu0 0.0
  %104 = vmatpush1.msra.mxu0 0.0
  %105 = vmatprep.subr.mxu0 0.0
  %106 = vmatpush1.msra.mxu0 0.0
  %107 = vmatprep.subr.mxu0 0.0
  %108 = vmatpush1.msra.mxu0 0.0
  %109 = vmatprep.subr.mxu0 0.0
  %110 = vmatpush1.msra.mxu0 0.0
  %111 = vmatprep.subr.mxu0 0.0
  %112 = vmatpush1.msra.mxu0 0.0
  %113 = vmatprep.subr.mxu0 0.0
  %114 = vmatpush1.msra.mxu0 0.0
  %115 = vmatprep.subr.mxu0 0.0
  %116 = vmatpush1.msra.mxu0 0.0
  %117 = vmatprep.subr.mxu0 0.0
  %118 = vmatpush1.msra.mxu0 0.0
  %119 = vmatprep.subr.mxu0 0.0
  %120 = vmatpush1.msra.mxu0 0.0
  %121 = vmatprep.subr.mxu0 0.0
  %122 = vmatpush1.msra.mxu0 0.0
  %123 = vmatprep.mubr.f32.mxu0 0.0
  %124 = vmatmul.mubr.f32.gmra.mrb[0].mxu0 %v57
  %v125 = vpop.f32.mrb[0].mxu0
  %v126 = vadd.f32 %v43, %v125
  %v127 = vpop.f32.mrb[0].mxu0
  %v128 = vadd.f32 %v47, %v127
  %129 = vdwg.mxu0
  %130 = vmatprep.subr.mxu0 0.0
  %131 = vmatpush1.msra.mxu0 %v38
  %132 = vmatprep.subr.mxu0 0.0
  %133 = vmatpush1.msra.mxu0 0.0
  %134 = vmatprep.subr.mxu0 0.0
  %135 = vmatpush1.msra.mxu0 0.0
  %136 = vmatprep.subr.mxu0 0.0
  %137 = vmatpush1.msra.mxu0 0.0
  %138 = vmatprep.subr.mxu0 0.0
  %139 = vmatpush1.msra.mxu0 0.0
  %140 = vmatprep.subr.mxu0 0.0
  %141 = vmatpush1.msra.mxu0 0.0
  %142 = vmatprep.subr.mxu0 0.0
  %143 = vmatpush1.msra.mxu0 0.0
  %144 = vmatprep.subr.mxu0 0.0
  %145 = vmatpush1.msra.mxu0 0.0
  %146 = vmatprep.subr.mxu0 0.0
  %147 = vmatpush1.msra.mxu0 0.0
  %148 = vmatprep.subr.mxu0 0.0
  %149 = vmatpush1.msra.mxu0 0.0
  %150 = vmatprep.subr.mxu0 0.0
  %151 = vmatpush1.msra.mxu0 0.0
  %152 = vmatprep.subr.mxu0 0.0
  %153 = vmatpush1.msra.mxu0 0.0
  %154 = vmatprep.subr.mxu0 0.0
  %155 = vmatpush1.msra.mxu0 0.0
  %156 = vmatprep.subr.mxu0 0.0
  %157 = vmatpush1.msra.mxu0 0.0
  %158 = vmatprep.subr.mxu0 0.0
  %159 = vmatpush1.msra.mxu0 0.0
  %160 = vmatprep.subr.mxu0 0.0
  %161 = vmatpush1.msra.mxu0 0.0
  %162 = vmatprep.subr.mxu0 0.0
  %163 = vmatpush1.msra.mxu0 0.0
  %164 = vmatprep.subr.mxu0 0.0
  %165 = vmatpush1.msra.mxu0 0.0
  %166 = vmatprep.subr.mxu0 0.0
  %167 = vmatpush1.msra.mxu0 0.0
  %168 = vmatprep.subr.mxu0 0.0
  %169 = vmatpush1.msra.mxu0 0.0
  %170 = vmatprep.subr.mxu0 0.0
  %171 = vmatpush1.msra.mxu0 0.0
  %172 = vmatprep.subr.mxu0 0.0
  %173 = vmatpush1.msra.mxu0 0.0
  %174 = vmatprep.subr.mxu0 0.0
  %175 = vmatpush1.msra.mxu0 0.0
  %176 = vmatprep.subr.mxu0 0.0
  %177 = vmatpush1.msra.mxu0 0.0
  %178 = vmatprep.subr.mxu0 0.0
  %179 = vmatpush1.msra.mxu0 0.0
  %180 = vmatprep.subr.mxu0 0.0
  %181 = vmatpush1.msra.mxu0 0.0
  %182 = vmatprep.subr.mxu0 0.0
  %183 = vmatpush1.msra.mxu0 0.0
  %184 = vmatprep.subr.mxu0 0.0
  %185 = vmatpush1.msra.mxu0 0.0
  %186 = vmatprep.subr.mxu0 0.0
  %187 = vmatpush1.msra.mxu0 0.0
  %188 = vmatprep.subr.mxu0 0.0
  %189 = vmatpush1.msra.mxu0 0.0
  %190 = vmatprep.subr.mxu0 0.0
  %191 = vmatpush1.msra.mxu0 0.0
  %192 = vmatprep.subr.mxu0 0.0
  %193 = vmatpush1.msra.mxu0 0.0
  %194 = vmatprep.mubr.f32.mxu0 0.0
  %195 = vmatmul.mubr.f32.gmra.mrb[0].mxu0 %v57
  %v196 = vpop.f32.mrb[0].mxu0
  %v197 = vadd.f32 %v51, %v196
  %v198 = vpop.f32.mrb[0].mxu0
  %199 = vdwg.mxu0
  %200 = vst [vmem:[#allocation2] sm:$0xff] %v126
  %201 = vst [vmem:[#allocation2 + $0x8] sm:$0xff] %v128
  %202 = vst [vmem:[#allocation2 + $0x10] sm:$0xff] %v197
  %s203 = scalar_lea.vmem %s0, 8
  %v204 = vld [vmem:[%s203] sm:$0xff]
  %v205 = vld [vmem:[%s1] sm:$0xff]
  %v206 = vld [vmem:[%s1 + $0x8] sm:$0xff]
  %v207 = vld [vmem:[%s1 + $0x10] sm:$0xff]
  %v209 = vsel %vm55, %v204, 0
  %211 = vmatprep.subr.mxu0 %v206
  %212 = vmatpush1.msra.mxu0 %v205
  %213 = vmatprep.subr.mxu0 0.0
  %214 = vmatpush1.msra.mxu0 0.0
  %215 = vmatprep.subr.mxu0 0.0
  %216 = vmatpush1.msra.mxu0 0.0
  %217 = vmatprep.subr.mxu0 0.0
  %218 = vmatpush1.msra.mxu0 0.0
  %219 = vmatprep.subr.mxu0 0.0
  %220 = vmatpush1.msra.mxu0 0.0
  %221 = vmatprep.subr.mxu0 0.0
  %222 = vmatpush1.msra.mxu0 0.0
  %223 = vmatprep.subr.mxu0 0.0
  %224 = vmatpush1.msra.mxu0 0.0
  %225 = vmatprep.subr.mxu0 0.0
  %226 = vmatpush1.msra.mxu0 0.0
  %227 = vmatprep.subr.mxu0 0.0
  %228 = vmatpush1.msra.mxu0 0.0
  %229 = vmatprep.subr.mxu0 0.0
  %230 = vmatpush1.msra.mxu0 0.0
  %231 = vmatprep.subr.mxu0 0.0
  %232 = vmatpush1.msra.mxu0 0.0
  %233 = vmatprep.subr.mxu0 0.0
  %234 = vmatpush1.msra.mxu0 0.0
  %235 = vmatprep.subr.mxu0 0.0
  %236 = vmatpush1.msra.mxu0 0.0
  %237 = vmatprep.subr.mxu0 0.0
  %238 = vmatpush1.msra.mxu0 0.0
  %239 = vmatprep.subr.mxu0 0.0
  %240 = vmatpush1.msra.mxu0 0.0
  %241 = vmatprep.subr.mxu0 0.0
  %242 = vmatpush1.msra.mxu0 0.0
  %243 = vmatprep.subr.mxu0 0.0
  %244 = vmatpush1.msra.mxu0 0.0
  %245 = vmatprep.subr.mxu0 0.0
  %246 = vmatpush1.msra.mxu0 0.0
  %247 = vmatprep.subr.mxu0 0.0
  %248 = vmatpush1.msra.mxu0 0.0
  %249 = vmatprep.subr.mxu0 0.0
  %250 = vmatpush1.msra.mxu0 0.0
  %251 = vmatprep.subr.mxu0 0.0
  %252 = vmatpush1.msra.mxu0 0.0
  %253 = vmatprep.subr.mxu0 0.0
  %254 = vmatpush1.msra.mxu0 0.0
  %255 = vmatprep.subr.mxu0 0.0
  %256 = vmatpush1.msra.mxu0 0.0
  %257 = vmatprep.subr.mxu0 0.0
  %258 = vmatpush1.msra.mxu0 0.0
  %259 = vmatprep.subr.mxu0 0.0
  %260 = vmatpush1.msra.mxu0 0.0
  %261 = vmatprep.subr.mxu0 0.0
  %262 = vmatpush1.msra.mxu0 0.0
  %263 = vmatprep.subr.mxu0 0.0
  %264 = vmatpush1.msra.mxu0 0.0
  %265 = vmatprep.subr.mxu0 0.0
  %266 = vmatpush1.msra.mxu0 0.0
  %267 = vmatprep.subr.mxu0 0.0
  %268 = vmatpush1.msra.mxu0 0.0
  %269 = vmatprep.subr.mxu0 0.0
  %270 = vmatpush1.msra.mxu0 0.0
  %271 = vmatprep.subr.mxu0 0.0
  %272 = vmatpush1.msra.mxu0 0.0
  %273 = vmatprep.subr.mxu0 0.0
  %274 = vmatpush1.msra.mxu0 0.0
  %275 = vmatprep.mubr.f32.mxu0 0.0
  %276 = vmatmul.mubr.f32.gmra.mrb[0].mxu0 %v209
  %v277 = vpop.f32.mrb[0].mxu0
  %v278 = vadd.f32 %v43, %v277
  %v279 = vpop.f32.mrb[0].mxu0
  %v280 = vadd.f32 %v47, %v279
  %281 = vdwg.mxu0
  %282 = vmatprep.subr.mxu0 0.0
  %283 = vmatpush1.msra.mxu0 %v207
  %284 = vmatprep.subr.mxu0 0.0
  %285 = vmatpush1.msra.mxu0 0.0
  %286 = vmatprep.subr.mxu0 0.0
  %287 = vmatpush1.msra.mxu0 0.0
  %288 = vmatprep.subr.mxu0 0.0
  %289 = vmatpush1.msra.mxu0 0.0
  %290 = vmatprep.subr.mxu0 0.0
  %291 = vmatpush1.msra.mxu0 0.0
  %292 = vmatprep.subr.mxu0 0.0
  %293 = vmatpush1.msra.mxu0 0.0
  %294 = vmatprep.subr.mxu0 0.0
  %295 = vmatpush1.msra.mxu0 0.0
  %296 = vmatprep.subr.mxu0 0.0
  %297 = vmatpush1.msra.mxu0 0.0
  %298 = vmatprep.subr.mxu0 0.0
  %299 = vmatpush1.msra.mxu0 0.0
  %300 = vmatprep.subr.mxu0 0.0
  %301 = vmatpush1.msra.mxu0 0.0
  %302 = vmatprep.subr.mxu0 0.0
  %303 = vmatpush1.msra.mxu0 0.0
  %304 = vmatprep.subr.mxu0 0.0
  %305 = vmatpush1.msra.mxu0 0.0
  %306 = vmatprep.subr.mxu0 0.0
  %307 = vmatpush1.msra.mxu0 0.0
  %308 = vmatprep.subr.mxu0 0.0
  %309 = vmatpush1.msra.mxu0 0.0
  %310 = vmatprep.subr.mxu0 0.0
  %311 = vmatpush1.msra.mxu0 0.0
  %312 = vmatprep.subr.mxu0 0.0
  %313 = vmatpush1.msra.mxu0 0.0
  %314 = vmatprep.subr.mxu0 0.0
  %315 = vmatpush1.msra.mxu0 0.0
  %316 = vmatprep.subr.mxu0 0.0
  %317 = vmatpush1.msra.mxu0 0.0
  %318 = vmatprep.subr.mxu0 0.0
  %319 = vmatpush1.msra.mxu0 0.0
  %320 = vmatprep.subr.mxu0 0.0
  %321 = vmatpush1.msra.mxu0 0.0
  %322 = vmatprep.subr.mxu0 0.0
  %323 = vmatpush1.msra.mxu0 0.0
  %324 = vmatprep.subr.mxu0 0.0
  %325 = vmatpush1.msra.mxu0 0.0
  %326 = vmatprep.subr.mxu0 0.0
  %327 = vmatpush1.msra.mxu0 0.0
  %328 = vmatprep.subr.mxu0 0.0
  %329 = vmatpush1.msra.mxu0 0.0
  %330 = vmatprep.subr.mxu0 0.0
  %331 = vmatpush1.msra.mxu0 0.0
  %332 = vmatprep.subr.mxu0 0.0
  %333 = vmatpush1.msra.mxu0 0.0
  %334 = vmatprep.subr.mxu0 0.0
  %335 = vmatpush1.msra.mxu0 0.0
  %336 = vmatprep.subr.mxu0 0.0
  %337 = vmatpush1.msra.mxu0 0.0
  %338 = vmatprep.subr.mxu0 0.0
  %339 = vmatpush1.msra.mxu0 0.0
  %340 = vmatprep.subr.mxu0 0.0
  %341 = vmatpush1.msra.mxu0 0.0
  %342 = vmatprep.subr.mxu0 0.0
  %343 = vmatpush1.msra.mxu0 0.0
  %344 = vmatprep.subr.mxu0 0.0
  %345 = vmatpush1.msra.mxu0 0.0
  %346 = vmatprep.mubr.f32.mxu0 0.0
  %347 = vmatmul.mubr.f32.gmra.mrb[0].mxu0 %v209
  %v348 = vpop.f32.mrb[0].mxu0
  %v349 = vadd.f32 %v51, %v348
  %v350 = vpop.f32.mrb[0].mxu0
  %351 = vdwg.mxu0
  %s352 = scalar_lea.vmem [#allocation2], 24
  %353 = vst [vmem:[%s352] sm:$0xff] %v278
  %354 = vst [vmem:[%s352 + $0x8] sm:$0xff] %v280
  %355 = vst [vmem:[%s352 + $0x10] sm:$0xff] %v349
  %s356 = scalar_lea.vmem %s0, 16
  %v357 = vld [vmem:[%s356] sm:$0xff]
  %v358 = vld [vmem:[%s1] sm:$0xff]
  %v359 = vld [vmem:[%s1 + $0x8] sm:$0xff]
  %v360 = vld [vmem:[%s1 + $0x10] sm:$0xff]
  %v362 = vsel %vm55, %v357, 0
  %364 = vmatprep.subr.mxu0 %v359
  %365 = vmatpush1.msra.mxu0 %v358
  %366 = vmatprep.subr.mxu0 0.0
  %367 = vmatpush1.msra.mxu0 0.0
  %368 = vmatprep.subr.mxu0 0.0
  %369 = vmatpush1.msra.mxu0 0.0
  %370 = vmatprep.subr.mxu0 0.0
  %371 = vmatpush1.msra.mxu0 0.0
  %372 = vmatprep.subr.mxu0 0.0
  %373 = vmatpush1.msra.mxu0 0.0
  %374 = vmatprep.subr.mxu0 0.0
  %375 = vmatpush1.msra.mxu0 0.0
  %376 = vmatprep.subr.mxu0 0.0
  %377 = vmatpush1.msra.mxu0 0.0
  %378 = vmatprep.subr.mxu0 0.0
  %379 = vmatpush1.msra.mxu0 0.0
  %380 = vmatprep.subr.mxu0 0.0
  %381 = vmatpush1.msra.mxu0 0.0
  %382 = vmatprep.subr.mxu0 0.0
  %383 = vmatpush1.msra.mxu0 0.0
  %384 = vmatprep.subr.mxu0 0.0
  %385 = vmatpush1.msra.mxu0 0.0
  %386 = vmatprep.subr.mxu0 0.0
  %387 = vmatpush1.msra.mxu0 0.0
  %388 = vmatprep.subr.mxu0 0.0
  %389 = vmatpush1.msra.mxu0 0.0
  %390 = vmatprep.subr.mxu0 0.0
  %391 = vmatpush1.msra.mxu0 0.0
  %392 = vmatprep.subr.mxu0 0.0
  %393 = vmatpush1.msra.mxu0 0.0
  %394 = vmatprep.subr.mxu0 0.0
  %395 = vmatpush1.msra.mxu0 0.0
  %396 = vmatprep.subr.mxu0 0.0
  %397 = vmatpush1.msra.mxu0 0.0
  %398 = vmatprep.subr.mxu0 0.0
  %399 = vmatpush1.msra.mxu0 0.0
  %400 = vmatprep.subr.mxu0 0.0
  %401 = vmatpush1.msra.mxu0 0.0
  %402 = vmatprep.subr.mxu0 0.0
  %403 = vmatpush1.msra.mxu0 0.0
  %404 = vmatprep.subr.mxu0 0.0
  %405 = vmatpush1.msra.mxu0 0.0
  %406 = vmatprep.subr.mxu0 0.0
  %407 = vmatpush1.msra.mxu0 0.0
  %408 = vmatprep.subr.mxu0 0.0
  %409 = vmatpush1.msra.mxu0 0.0
  %410 = vmatprep.subr.mxu0 0.0
  %411 = vmatpush1.msra.mxu0 0.0
  %412 = vmatprep.subr.mxu0 0.0
  %413 = vmatpush1.msra.mxu0 0.0
  %414 = vmatprep.subr.mxu0 0.0
  %415 = vmatpush1.msra.mxu0 0.0
  %416 = vmatprep.subr.mxu0 0.0
  %417 = vmatpush1.msra.mxu0 0.0
  %418 = vmatprep.subr.mxu0 0.0
  %419 = vmatpush1.msra.mxu0 0.0
  %420 = vmatprep.subr.mxu0 0.0
  %421 = vmatpush1.msra.mxu0 0.0
  %422 = vmatprep.subr.mxu0 0.0
  %423 = vmatpush1.msra.mxu0 0.0
  %424 = vmatprep.subr.mxu0 0.0
  %425 = vmatpush1.msra.mxu0 0.0
  %426 = vmatprep.subr.mxu0 0.0
  %427 = vmatpush1.msra.mxu0 0.0
  %428 = vmatprep.mubr.f32.mxu0 0.0
  %429 = vmatmul.mubr.f32.gmra.mrb[0].mxu0 %v362
  %v430 = vpop.f32.mrb[0].mxu0
  %v431 = vadd.f32 %v43, %v430
  %v432 = vpop.f32.mrb[0].mxu0
  %v433 = vadd.f32 %v47, %v432
  %434 = vdwg.mxu0
  %435 = vmatprep.subr.mxu0 0.0
  %436 = vmatpush1.msra.mxu0 %v360
  %437 = vmatprep.subr.mxu0 0.0
  %438 = vmatpush1.msra.mxu0 0.0
  %439 = vmatprep.subr.mxu0 0.0
  %440 = vmatpush1.msra.mxu0 0.0
  %441 = vmatprep.subr.mxu0 0.0
  %442 = vmatpush1.msra.mxu0 0.0
  %443 = vmatprep.subr.mxu0 0.0
  %444 = vmatpush1.msra.mxu0 0.0
  %445 = vmatprep.subr.mxu0 0.0
  %446 = vmatpush1.msra.mxu0 0.0
  %447 = vmatprep.subr.mxu0 0.0
  %448 = vmatpush1.msra.mxu0 0.0
  %449 = vmatprep.subr.mxu0 0.0
  %450 = vmatpush1.msra.mxu0 0.0
  %451 = vmatprep.subr.mxu0 0.0
  %452 = vmatpush1.msra.mxu0 0.0
  %453 = vmatprep.subr.mxu0 0.0
  %454 = vmatpush1.msra.mxu0 0.0
  %455 = vmatprep.subr.mxu0 0.0
  %456 = vmatpush1.msra.mxu0 0.0
  %457 = vmatprep.subr.mxu0 0.0
  %458 = vmatpush1.msra.mxu0 0.0
  %459 = vmatprep.subr.mxu0 0.0
  %460 = vmatpush1.msra.mxu0 0.0
  %461 = vmatprep.subr.mxu0 0.0
  %462 = vmatpush1.msra.mxu0 0.0
  %463 = vmatprep.subr.mxu0 0.0
  %464 = vmatpush1.msra.mxu0 0.0
  %465 = vmatprep.subr.mxu0 0.0
  %466 = vmatpush1.msra.mxu0 0.0
  %467 = vmatprep.subr.mxu0 0.0
  %468 = vmatpush1.msra.mxu0 0.0
  %469 = vmatprep.subr.mxu0 0.0
  %470 = vmatpush1.msra.mxu0 0.0
  %471 = vmatprep.subr.mxu0 0.0
  %472 = vmatpush1.msra.mxu0 0.0
  %473 = vmatprep.subr.mxu0 0.0
  %474 = vmatpush1.msra.mxu0 0.0
  %475 = vmatprep.subr.mxu0 0.0
  %476 = vmatpush1.msra.mxu0 0.0
  %477 = vmatprep.subr.mxu0 0.0
  %478 = vmatpush1.msra.mxu0 0.0
  %479 = vmatprep.subr.mxu0 0.0
  %480 = vmatpush1.msra.mxu0 0.0
  %481 = vmatprep.subr.mxu0 0.0
  %482 = vmatpush1.msra.mxu0 0.0
  %483 = vmatprep.subr.mxu0 0.0
  %484 = vmatpush1.msra.mxu0 0.0
  %485 = vmatprep.subr.mxu0 0.0
  %486 = vmatpush1.msra.mxu0 0.0
  %487 = vmatprep.subr.mxu0 0.0
  %488 = vmatpush1.msra.mxu0 0.0
  %489 = vmatprep.subr.mxu0 0.0
  %490 = vmatpush1.msra.mxu0 0.0
  %491 = vmatprep.subr.mxu0 0.0
  %492 = vmatpush1.msra.mxu0 0.0
  %493 = vmatprep.subr.mxu0 0.0
  %494 = vmatpush1.msra.mxu0 0.0
  %495 = vmatprep.subr.mxu0 0.0
  %496 = vmatpush1.msra.mxu0 0.0
  %497 = vmatprep.subr.mxu0 0.0
  %498 = vmatpush1.msra.mxu0 0.0
  %499 = vmatprep.mubr.f32.mxu0 0.0
  %500 = vmatmul.mubr.f32.gmra.mrb[0].mxu0 %v362
  %v501 = vpop.f32.mrb[0].mxu0
  %v502 = vadd.f32 %v51, %v501
  %v503 = vpop.f32.mrb[0].mxu0
  %504 = vdwg.mxu0
  %s505 = scalar_lea.vmem [#allocation2], 48
  %506 = vst [vmem:[%s505] sm:$0xff] %v431
  %507 = vst [vmem:[%s505 + $0x8] sm:$0xff] %v433
  %508 = vst [vmem:[%s505 + $0x10] sm:$0xff] %v502
  %s509 = scalar_lea.vmem %s0, 24
  %v510 = vld [vmem:[%s509] sm:$0xff]
  %v511 = vld [vmem:[%s1] sm:$0xff]
  %v512 = vld [vmem:[%s1 + $0x8] sm:$0xff]
  %v513 = vld [vmem:[%s1 + $0x10] sm:$0xff]
  %v515 = vsel %vm55, %v510, 0
  %517 = vmatprep.subr.mxu0 %v512
  %518 = vmatpush1.msra.mxu0 %v511
  %519 = vmatprep.subr.mxu0 0.0
  %520 = vmatpush1.msra.mxu0 0.0
  %521 = vmatprep.subr.mxu0 0.0
  %522 = vmatpush1.msra.mxu0 0.0
  %523 = vmatprep.subr.mxu0 0.0
  %524 = vmatpush1.msra.mxu0 0.0
  %525 = vmatprep.subr.mxu0 0.0
  %526 = vmatpush1.msra.mxu0 0.0
  %527 = vmatprep.subr.mxu0 0.0
  %528 = vmatpush1.msra.mxu0 0.0
  %529 = vmatprep.subr.mxu0 0.0
  %530 = vmatpush1.msra.mxu0 0.0
  %531 = vmatprep.subr.mxu0 0.0
  %532 = vmatpush1.msra.mxu0 0.0
  %533 = vmatprep.subr.mxu0 0.0
  %534 = vmatpush1.msra.mxu0 0.0
  %535 = vmatprep.subr.mxu0 0.0
  %536 = vmatpush1.msra.mxu0 0.0
  %537 = vmatprep.subr.mxu0 0.0
  %538 = vmatpush1.msra.mxu0 0.0
  %539 = vmatprep.subr.mxu0 0.0
  %540 = vmatpush1.msra.mxu0 0.0
  %541 = vmatprep.subr.mxu0 0.0
  %542 = vmatpush1.msra.mxu0 0.0
  %543 = vmatprep.subr.mxu0 0.0
  %544 = vmatpush1.msra.mxu0 0.0
  %545 = vmatprep.subr.mxu0 0.0
  %546 = vmatpush1.msra.mxu0 0.0
  %547 = vmatprep.subr.mxu0 0.0
  %548 = vmatpush1.msra.mxu0 0.0
  %549 = vmatprep.subr.mxu0 0.0
  %550 = vmatpush1.msra.mxu0 0.0
  %551 = vmatprep.subr.mxu0 0.0
  %552 = vmatpush1.msra.mxu0 0.0
  %553 = vmatprep.subr.mxu0 0.0
  %554 = vmatpush1.msra.mxu0 0.0
  %555 = vmatprep.subr.mxu0 0.0
  %556 = vmatpush1.msra.mxu0 0.0
  %557 = vmatprep.subr.mxu0 0.0
  %558 = vmatpush1.msra.mxu0 0.0
  %559 = vmatprep.subr.mxu0 0.0
  %560 = vmatpush1.msra.mxu0 0.0
  %561 = vmatprep.subr.mxu0 0.0
  %562 = vmatpush1.msra.mxu0 0.0
  %563 = vmatprep.subr.mxu0 0.0
  %564 = vmatpush1.msra.mxu0 0.0
  %565 = vmatprep.subr.mxu0 0.0
  %566 = vmatpush1.msra.mxu0 0.0
  %567 = vmatprep.subr.mxu0 0.0
  %568 = vmatpush1.msra.mxu0 0.0
  %569 = vmatprep.subr.mxu0 0.0
  %570 = vmatpush1.msra.mxu0 0.0
  %571 = vmatprep.subr.mxu0 0.0
  %572 = vmatpush1.msra.mxu0 0.0
  %573 = vmatprep.subr.mxu0 0.0
  %574 = vmatpush1.msra.mxu0 0.0
  %575 = vmatprep.subr.mxu0 0.0
  %576 = vmatpush1.msra.mxu0 0.0
  %577 = vmatprep.subr.mxu0 0.0
  %578 = vmatpush1.msra.mxu0 0.0
  %579 = vmatprep.subr.mxu0 0.0
  %580 = vmatpush1.msra.mxu0 0.0
  %581 = vmatprep.mubr.f32.mxu0 0.0
  %582 = vmatmul.mubr.f32.gmra.mrb[0].mxu0 %v515
  %v583 = vpop.f32.mrb[0].mxu0
  %v584 = vadd.f32 %v43, %v583
  %v585 = vpop.f32.mrb[0].mxu0
  %v586 = vadd.f32 %v47, %v585
  %587 = vdwg.mxu0
  %588 = vmatprep.subr.mxu0 0.0
  %589 = vmatpush1.msra.mxu0 %v513
  %590 = vmatprep.subr.mxu0 0.0
  %591 = vmatpush1.msra.mxu0 0.0
  %592 = vmatprep.subr.mxu0 0.0
  %593 = vmatpush1.msra.mxu0 0.0
  %594 = vmatprep.subr.mxu0 0.0
  %595 = vmatpush1.msra.mxu0 0.0
  %596 = vmatprep.subr.mxu0 0.0
  %597 = vmatpush1.msra.mxu0 0.0
  %598 = vmatprep.subr.mxu0 0.0
  %599 = vmatpush1.msra.mxu0 0.0
  %600 = vmatprep.subr.mxu0 0.0
  %601 = vmatpush1.msra.mxu0 0.0
  %602 = vmatprep.subr.mxu0 0.0
  %603 = vmatpush1.msra.mxu0 0.0
  %604 = vmatprep.subr.mxu0 0.0
  %605 = vmatpush1.msra.mxu0 0.0
  %606 = vmatprep.subr.mxu0 0.0
  %607 = vmatpush1.msra.mxu0 0.0
  %608 = vmatprep.subr.mxu0 0.0
  %609 = vmatpush1.msra.mxu0 0.0
  %610 = vmatprep.subr.mxu0 0.0
  %611 = vmatpush1.msra.mxu0 0.0
  %612 = vmatprep.subr.mxu0 0.0
  %613 = vmatpush1.msra.mxu0 0.0
  %614 = vmatprep.subr.mxu0 0.0
  %615 = vmatpush1.msra.mxu0 0.0
  %616 = vmatprep.subr.mxu0 0.0
  %617 = vmatpush1.msra.mxu0 0.0
  %618 = vmatprep.subr.mxu0 0.0
  %619 = vmatpush1.msra.mxu0 0.0
  %620 = vmatprep.subr.mxu0 0.0
  %621 = vmatpush1.msra.mxu0 0.0
  %622 = vmatprep.subr.mxu0 0.0
  %623 = vmatpush1.msra.mxu0 0.0
  %624 = vmatprep.subr.mxu0 0.0
  %625 = vmatpush1.msra.mxu0 0.0
  %626 = vmatprep.subr.mxu0 0.0
  %627 = vmatpush1.msra.mxu0 0.0
  %628 = vmatprep.subr.mxu0 0.0
  %629 = vmatpush1.msra.mxu0 0.0
  %630 = vmatprep.subr.mxu0 0.0
  %631 = vmatpush1.msra.mxu0 0.0
  %632 = vmatprep.subr.mxu0 0.0
  %633 = vmatpush1.msra.mxu0 0.0
  %634 = vmatprep.subr.mxu0 0.0
  %635 = vmatpush1.msra.mxu0 0.0
  %636 = vmatprep.subr.mxu0 0.0
  %637 = vmatpush1.msra.mxu0 0.0
  %638 = vmatprep.subr.mxu0 0.0
  %639 = vmatpush1.msra.mxu0 0.0
  %640 = vmatprep.subr.mxu0 0.0
  %641 = vmatpush1.msra.mxu0 0.0
  %642 = vmatprep.subr.mxu0 0.0
  %643 = vmatpush1.msra.mxu0 0.0
  %644 = vmatprep.subr.mxu0 0.0
  %645 = vmatpush1.msra.mxu0 0.0
  %646 = vmatprep.subr.mxu0 0.0
  %647 = vmatpush1.msra.mxu0 0.0
  %648 = vmatprep.subr.mxu0 0.0
  %649 = vmatpush1.msra.mxu0 0.0
  %650 = vmatprep.subr.mxu0 0.0
  %651 = vmatpush1.msra.mxu0 0.0
  %652 = vmatprep.mubr.f32.mxu0 0.0
  %653 = vmatmul.mubr.f32.gmra.mrb[0].mxu0 %v515
  %v654 = vpop.f32.mrb[0].mxu0
  %v655 = vadd.f32 %v51, %v654
  %v656 = vpop.f32.mrb[0].mxu0
  %657 = vdwg.mxu0
  %s658 = scalar_lea.vmem [#allocation2], 72
  %659 = vst [vmem:[%s658] sm:$0xff] %v584
  %660 = vst [vmem:[%s658 + $0x8] sm:$0xff] %v586
  %661 = vst [vmem:[%s658 + $0x10] sm:$0xff] %v655
  %s662 = scalar_lea.vmem %s0, 32
  %v663 = vld [vmem:[%s662] sm:$0xff]
  %v664 = vld [vmem:[%s1] sm:$0xff]
  %v665 = vld [vmem:[%s1 + $0x8] sm:$0xff]
  %v666 = vld [vmem:[%s1 + $0x10] sm:$0xff]
  %v668 = vsel %vm55, %v663, 0
  %670 = vmatprep.subr.mxu0 %v665
  %671 = vmatpush1.msra.mxu0 %v664
  %672 = vmatprep.subr.mxu0 0.0
  %673 = vmatpush1.msra.mxu0 0.0
  %674 = vmatprep.subr.mxu0 0.0
  %675 = vmatpush1.msra.mxu0 0.0
  %676 = vmatprep.subr.mxu0 0.0
  %677 = vmatpush1.msra.mxu0 0.0
  %678 = vmatprep.subr.mxu0 0.0
  %679 = vmatpush1.msra.mxu0 0.0
  %680 = vmatprep.subr.mxu0 0.0
  %681 = vmatpush1.msra.mxu0 0.0
  %682 = vmatprep.subr.mxu0 0.0
  %683 = vmatpush1.msra.mxu0 0.0
  %684 = vmatprep.subr.mxu0 0.0
  %685 = vmatpush1.msra.mxu0 0.0
  %686 = vmatprep.subr.mxu0 0.0
  %687 = vmatpush1.msra.mxu0 0.0
  %688 = vmatprep.subr.mxu0 0.0
  %689 = vmatpush1.msra.mxu0 0.0
  %690 = vmatprep.subr.mxu0 0.0
  %691 = vmatpush1.msra.mxu0 0.0
  %692 = vmatprep.subr.mxu0 0.0
  %693 = vmatpush1.msra.mxu0 0.0
  %694 = vmatprep.subr.mxu0 0.0
  %695 = vmatpush1.msra.mxu0 0.0
  %696 = vmatprep.subr.mxu0 0.0
  %697 = vmatpush1.msra.mxu0 0.0
  %698 = vmatprep.subr.mxu0 0.0
  %699 = vmatpush1.msra.mxu0 0.0
  %700 = vmatprep.subr.mxu0 0.0
  %701 = vmatpush1.msra.mxu0 0.0
  %702 = vmatprep.subr.mxu0 0.0
  %703 = vmatpush1.msra.mxu0 0.0
  %704 = vmatprep.subr.mxu0 0.0
  %705 = vmatpush1.msra.mxu0 0.0
  %706 = vmatprep.subr.mxu0 0.0
  %707 = vmatpush1.msra.mxu0 0.0
  %708 = vmatprep.subr.mxu0 0.0
  %709 = vmatpush1.msra.mxu0 0.0
  %710 = vmatprep.subr.mxu0 0.0
  %711 = vmatpush1.msra.mxu0 0.0
  %712 = vmatprep.subr.mxu0 0.0
  %713 = vmatpush1.msra.mxu0 0.0
  %714 = vmatprep.subr.mxu0 0.0
  %715 = vmatpush1.msra.mxu0 0.0
  %716 = vmatprep.subr.mxu0 0.0
  %717 = vmatpush1.msra.mxu0 0.0
  %718 = vmatprep.subr.mxu0 0.0
  %719 = vmatpush1.msra.mxu0 0.0
  %720 = vmatprep.subr.mxu0 0.0
  %721 = vmatpush1.msra.mxu0 0.0
  %722 = vmatprep.subr.mxu0 0.0
  %723 = vmatpush1.msra.mxu0 0.0
  %724 = vmatprep.subr.mxu0 0.0
  %725 = vmatpush1.msra.mxu0 0.0
  %726 = vmatprep.subr.mxu0 0.0
  %727 = vmatpush1.msra.mxu0 0.0
  %728 = vmatprep.subr.mxu0 0.0
  %729 = vmatpush1.msra.mxu0 0.0
  %730 = vmatprep.subr.mxu0 0.0
  %731 = vmatpush1.msra.mxu0 0.0
  %732 = vmatprep.subr.mxu0 0.0
  %733 = vmatpush1.msra.mxu0 0.0
  %734 = vmatprep.mubr.f32.mxu0 0.0
  %735 = vmatmul.mubr.f32.gmra.mrb[0].mxu0 %v668
  %v736 = vpop.f32.mrb[0].mxu0
  %v737 = vadd.f32 %v43, %v736
  %v738 = vpop.f32.mrb[0].mxu0
  %v739 = vadd.f32 %v47, %v738
  %740 = vdwg.mxu0
  %741 = vmatprep.subr.mxu0 0.0
  %742 = vmatpush1.msra.mxu0 %v666
  %743 = vmatprep.subr.mxu0 0.0
  %744 = vmatpush1.msra.mxu0 0.0
  %745 = vmatprep.subr.mxu0 0.0
  %746 = vmatpush1.msra.mxu0 0.0
  %747 = vmatprep.subr.mxu0 0.0
  %748 = vmatpush1.msra.mxu0 0.0
  %749 = vmatprep.subr.mxu0 0.0
  %750 = vmatpush1.msra.mxu0 0.0
  %751 = vmatprep.subr.mxu0 0.0
  %752 = vmatpush1.msra.mxu0 0.0
  %753 = vmatprep.subr.mxu0 0.0
  %754 = vmatpush1.msra.mxu0 0.0
  %755 = vmatprep.subr.mxu0 0.0
  %756 = vmatpush1.msra.mxu0 0.0
  %757 = vmatprep.subr.mxu0 0.0
  %758 = vmatpush1.msra.mxu0 0.0
  %759 = vmatprep.subr.mxu0 0.0
  %760 = vmatpush1.msra.mxu0 0.0
  %761 = vmatprep.subr.mxu0 0.0
  %762 = vmatpush1.msra.mxu0 0.0
  %763 = vmatprep.subr.mxu0 0.0
  %764 = vmatpush1.msra.mxu0 0.0
  %765 = vmatprep.subr.mxu0 0.0
  %766 = vmatpush1.msra.mxu0 0.0
  %767 = vmatprep.subr.mxu0 0.0
  %768 = vmatpush1.msra.mxu0 0.0
  %769 = vmatprep.subr.mxu0 0.0
  %770 = vmatpush1.msra.mxu0 0.0
  %771 = vmatprep.subr.mxu0 0.0
  %772 = vmatpush1.msra.mxu0 0.0
  %773 = vmatprep.subr.mxu0 0.0
  %774 = vmatpush1.msra.mxu0 0.0
  %775 = vmatprep.subr.mxu0 0.0
  %776 = vmatpush1.msra.mxu0 0.0
  %777 = vmatprep.subr.mxu0 0.0
  %778 = vmatpush1.msra.mxu0 0.0
  %779 = vmatprep.subr.mxu0 0.0
  %780 = vmatpush1.msra.mxu0 0.0
  %781 = vmatprep.subr.mxu0 0.0
  %782 = vmatpush1.msra.mxu0 0.0
  %783 = vmatprep.subr.mxu0 0.0
  %784 = vmatpush1.msra.mxu0 0.0
  %785 = vmatprep.subr.mxu0 0.0
  %786 = vmatpush1.msra.mxu0 0.0
  %787 = vmatprep.subr.mxu0 0.0
  %788 = vmatpush1.msra.mxu0 0.0
  %789 = vmatprep.subr.mxu0 0.0
  %790 = vmatpush1.msra.mxu0 0.0
  %791 = vmatprep.subr.mxu0 0.0
  %792 = vmatpush1.msra.mxu0 0.0
  %793 = vmatprep.subr.mxu0 0.0
  %794 = vmatpush1.msra.mxu0 0.0
  %795 = vmatprep.subr.mxu0 0.0
  %796 = vmatpush1.msra.mxu0 0.0
  %797 = vmatprep.subr.mxu0 0.0
  %798 = vmatpush1.msra.mxu0 0.0
  %799 = vmatprep.subr.mxu0 0.0
  %800 = vmatpush1.msra.mxu0 0.0
  %801 = vmatprep.subr.mxu0 0.0
  %802 = vmatpush1.msra.mxu0 0.0
  %803 = vmatprep.subr.mxu0 0.0
  %804 = vmatpush1.msra.mxu0 0.0
  %805 = vmatprep.mubr.f32.mxu0 0.0
  %806 = vmatmul.mubr.f32.gmra.mrb[0].mxu0 %v668
  %v807 = vpop.f32.mrb[0].mxu0
  %v808 = vadd.f32 %v51, %v807
  %v809 = vpop.f32.mrb[0].mxu0
  %810 = vdwg.mxu0
  %s811 = scalar_lea.vmem [#allocation2], 96
  %812 = vst [vmem:[%s811] sm:$0xff] %v737
  %813 = vst [vmem:[%s811 + $0x8] sm:$0xff] %v739
  %814 = vst [vmem:[%s811 + $0x10] sm:$0xff] %v808
  %s815 = scalar_lea.vmem %s0, 40
  %v816 = vld [vmem:[%s815] sm:$0xff]
  %v817 = vld [vmem:[%s1] sm:$0xff]
  %v818 = vld [vmem:[%s1 + $0x8] sm:$0xff]
  %v819 = vld [vmem:[%s1 + $0x10] sm:$0xff]
  %v821 = vsel %vm55, %v816, 0
  %823 = vmatprep.subr.mxu0 %v818
  %824 = vmatpush1.msra.mxu0 %v817
  %825 = vmatprep.subr.mxu0 0.0
  %826 = vmatpush1.msra.mxu0 0.0
  %827 = vmatprep.subr.mxu0 0.0
  %828 = vmatpush1.msra.mxu0 0.0
  %829 = vmatprep.subr.mxu0 0.0
  %830 = vmatpush1.msra.mxu0 0.0
  %831 = vmatprep.subr.mxu0 0.0
  %832 = vmatpush1.msra.mxu0 0.0
  %833 = vmatprep.subr.mxu0 0.0
  %834 = vmatpush1.msra.mxu0 0.0
  %835 = vmatprep.subr.mxu0 0.0
  %836 = vmatpush1.msra.mxu0 0.0
  %837 = vmatprep.subr.mxu0 0.0
  %838 = vmatpush1.msra.mxu0 0.0
  %839 = vmatprep.subr.mxu0 0.0
  %840 = vmatpush1.msra.mxu0 0.0
  %841 = vmatprep.subr.mxu0 0.0
  %842 = vmatpush1.msra.mxu0 0.0
  %843 = vmatprep.subr.mxu0 0.0
  %844 = vmatpush1.msra.mxu0 0.0
  %845 = vmatprep.subr.mxu0 0.0
  %846 = vmatpush1.msra.mxu0 0.0
  %847 = vmatprep.subr.mxu0 0.0
  %848 = vmatpush1.msra.mxu0 0.0
  %849 = vmatprep.subr.mxu0 0.0
  %850 = vmatpush1.msra.mxu0 0.0
  %851 = vmatprep.subr.mxu0 0.0
  %852 = vmatpush1.msra.mxu0 0.0
  %853 = vmatprep.subr.mxu0 0.0
  %854 = vmatpush1.msra.mxu0 0.0
  %855 = vmatprep.subr.mxu0 0.0
  %856 = vmatpush1.msra.mxu0 0.0
  %857 = vmatprep.subr.mxu0 0.0
  %858 = vmatpush1.msra.mxu0 0.0
  %859 = vmatprep.subr.mxu0 0.0
  %860 = vmatpush1.msra.mxu0 0.0
  %861 = vmatprep.subr.mxu0 0.0
  %862 = vmatpush1.msra.mxu0 0.0
  %863 = vmatprep.subr.mxu0 0.0
  %864 = vmatpush1.msra.mxu0 0.0
  %865 = vmatprep.subr.mxu0 0.0
  %866 = vmatpush1.msra.mxu0 0.0
  %867 = vmatprep.subr.mxu0 0.0
  %868 = vmatpush1.msra.mxu0 0.0
  %869 = vmatprep.subr.mxu0 0.0
  %870 = vmatpush1.msra.mxu0 0.0
  %871 = vmatprep.subr.mxu0 0.0
  %872 = vmatpush1.msra.mxu0 0.0
  %873 = vmatprep.subr.mxu0 0.0
  %874 = vmatpush1.msra.mxu0 0.0
  %875 = vmatprep.subr.mxu0 0.0
  %876 = vmatpush1.msra.mxu0 0.0
  %877 = vmatprep.subr.mxu0 0.0
  %878 = vmatpush1.msra.mxu0 0.0
  %879 = vmatprep.subr.mxu0 0.0
  %880 = vmatpush1.msra.mxu0 0.0
  %881 = vmatprep.subr.mxu0 0.0
  %882 = vmatpush1.msra.mxu0 0.0
  %883 = vmatprep.subr.mxu0 0.0
  %884 = vmatpush1.msra.mxu0 0.0
  %885 = vmatprep.subr.mxu0 0.0
  %886 = vmatpush1.msra.mxu0 0.0
  %887 = vmatprep.mubr.f32.mxu0 0.0
  %888 = vmatmul.mubr.f32.gmra.mrb[0].mxu0 %v821
  %v889 = vpop.f32.mrb[0].mxu0
  %v890 = vadd.f32 %v43, %v889
  %v891 = vpop.f32.mrb[0].mxu0
  %v892 = vadd.f32 %v47, %v891
  %893 = vdwg.mxu0
  %894 = vmatprep.subr.mxu0 0.0
  %895 = vmatpush1.msra.mxu0 %v819
  %896 = vmatprep.subr.mxu0 0.0
  %897 = vmatpush1.msra.mxu0 0.0
  %898 = vmatprep.subr.mxu0 0.0
  %899 = vmatpush1.msra.mxu0 0.0
  %900 = vmatprep.subr.mxu0 0.0
  %901 = vmatpush1.msra.mxu0 0.0
  %902 = vmatprep.subr.mxu0 0.0
  %903 = vmatpush1.msra.mxu0 0.0
  %904 = vmatprep.subr.mxu0 0.0
  %905 = vmatpush1.msra.mxu0 0.0
  %906 = vmatprep.subr.mxu0 0.0
  %907 = vmatpush1.msra.mxu0 0.0
  %908 = vmatprep.subr.mxu0 0.0
  %909 = vmatpush1.msra.mxu0 0.0
  %910 = vmatprep.subr.mxu0 0.0
  %911 = vmatpush1.msra.mxu0 0.0
  %912 = vmatprep.subr.mxu0 0.0
  %913 = vmatpush1.msra.mxu0 0.0
  %914 = vmatprep.subr.mxu0 0.0
  %915 = vmatpush1.msra.mxu0 0.0
  %916 = vmatprep.subr.mxu0 0.0
  %917 = vmatpush1.msra.mxu0 0.0
  %918 = vmatprep.subr.mxu0 0.0
  %919 = vmatpush1.msra.mxu0 0.0
  %920 = vmatprep.subr.mxu0 0.0
  %921 = vmatpush1.msra.mxu0 0.0
  %922 = vmatprep.subr.mxu0 0.0
  %923 = vmatpush1.msra.mxu0 0.0
  %924 = vmatprep.subr.mxu0 0.0
  %925 = vmatpush1.msra.mxu0 0.0
  %926 = vmatprep.subr.mxu0 0.0
  %927 = vmatpush1.msra.mxu0 0.0
  %928 = vmatprep.subr.mxu0 0.0
  %929 = vmatpush1.msra.mxu0 0.0
  %930 = vmatprep.subr.mxu0 0.0
  %931 = vmatpush1.msra.mxu0 0.0
  %932 = vmatprep.subr.mxu0 0.0
  %933 = vmatpush1.msra.mxu0 0.0
  %934 = vmatprep.subr.mxu0 0.0
  %935 = vmatpush1.msra.mxu0 0.0
  %936 = vmatprep.subr.mxu0 0.0
  %937 = vmatpush1.msra.mxu0 0.0
  %938 = vmatprep.subr.mxu0 0.0
  %939 = vmatpush1.msra.mxu0 0.0
  %940 = vmatprep.subr.mxu0 0.0
  %941 = vmatpush1.msra.mxu0 0.0
  %942 = vmatprep.subr.mxu0 0.0
  %943 = vmatpush1.msra.mxu0 0.0
  %944 = vmatprep.subr.mxu0 0.0
  %945 = vmatpush1.msra.mxu0 0.0
  %946 = vmatprep.subr.mxu0 0.0
  %947 = vmatpush1.msra.mxu0 0.0
  %948 = vmatprep.subr.mxu0 0.0
  %949 = vmatpush1.msra.mxu0 0.0
  %950 = vmatprep.subr.mxu0 0.0
  %951 = vmatpush1.msra.mxu0 0.0
  %952 = vmatprep.subr.mxu0 0.0
  %953 = vmatpush1.msra.mxu0 0.0
  %954 = vmatprep.subr.mxu0 0.0
  %955 = vmatpush1.msra.mxu0 0.0
  %956 = vmatprep.subr.mxu0 0.0
  %957 = vmatpush1.msra.mxu0 0.0
  %958 = vmatprep.mubr.f32.mxu0 0.0
  %959 = vmatmul.mubr.f32.gmra.mrb[0].mxu0 %v821
  %v960 = vpop.f32.mrb[0].mxu0
  %v961 = vadd.f32 %v51, %v960
  %v962 = vpop.f32.mrb[0].mxu0
  %963 = vdwg.mxu0
  %s964 = scalar_lea.vmem [#allocation2], 120
  %965 = vst [vmem:[%s964] sm:$0xff] %v890
  %966 = vst [vmem:[%s964 + $0x8] sm:$0xff] %v892
  %967 = vst [vmem:[%s964 + $0x10] sm:$0xff] %v961
  %s968 = scalar_lea.vmem %s0, 48
  %v969 = vld [vmem:[%s968] sm:$0xff]
  %v970 = vld [vmem:[%s1] sm:$0xff]
  %v971 = vld [vmem:[%s1 + $0x8] sm:$0xff]
  %v972 = vld [vmem:[%s1 + $0x10] sm:$0xff]
  %v974 = vsel %vm55, %v969, 0
  %976 = vmatprep.subr.mxu0 %v971
  %977 = vmatpush1.msra.mxu0 %v970
  %978 = vmatprep.subr.mxu0 0.0
  %979 = vmatpush1.msra.mxu0 0.0
  %980 = vmatprep.subr.mxu0 0.0
  %981 = vmatpush1.msra.mxu0 0.0
  %982 = vmatprep.subr.mxu0 0.0
  %983 = vmatpush1.msra.mxu0 0.0
  %984 = vmatprep.subr.mxu0 0.0
  %985 = vmatpush1.msra.mxu0 0.0
  %986 = vmatprep.subr.mxu0 0.0
  %987 = vmatpush1.msra.mxu0 0.0
  %988 = vmatprep.subr.mxu0 0.0
  %989 = vmatpush1.msra.mxu0 0.0
  %990 = vmatprep.subr.mxu0 0.0
  %991 = vmatpush1.msra.mxu0 0.0
  %992 = vmatprep.subr.mxu0 0.0
  %993 = vmatpush1.msra.mxu0 0.0
  %994 = vmatprep.subr.mxu0 0.0
  %995 = vmatpush1.msra.mxu0 0.0
  %996 = vmatprep.subr.mxu0 0.0
  %997 = vmatpush1.msra.mxu0 0.0
  %998 = vmatprep.subr.mxu0 0.0
  %999 = vmatpush1.msra.mxu0 0.0
  %1000 = vmatprep.subr.mxu0 0.0
  %1001 = vmatpush1.msra.mxu0 0.0
  %1002 = vmatprep.subr.mxu0 0.0
  %1003 = vmatpush1.msra.mxu0 0.0
  %1004 = vmatprep.subr.mxu0 0.0
  %1005 = vmatpush1.msra.mxu0 0.0
  %1006 = vmatprep.subr.mxu0 0.0
  %1007 = vmatpush1.msra.mxu0 0.0
  %1008 = vmatprep.subr.mxu0 0.0
  %1009 = vmatpush1.msra.mxu0 0.0
  %1010 = vmatprep.subr.mxu0 0.0
  %1011 = vmatpush1.msra.mxu0 0.0
  %1012 = vmatprep.subr.mxu0 0.0
  %1013 = vmatpush1.msra.mxu0 0.0
  %1014 = vmatprep.subr.mxu0 0.0
  %1015 = vmatpush1.msra.mxu0 0.0
  %1016 = vmatprep.subr.mxu0 0.0
  %1017 = vmatpush1.msra.mxu0 0.0
  %1018 = vmatprep.subr.mxu0 0.0
  %1019 = vmatpush1.msra.mxu0 0.0
  %1020 = vmatprep.subr.mxu0 0.0
  %1021 = vmatpush1.msra.mxu0 0.0
  %1022 = vmatprep.subr.mxu0 0.0
  %1023 = vmatpush1.msra.mxu0 0.0
  %1024 = vmatprep.subr.mxu0 0.0
  %1025 = vmatpush1.msra.mxu0 0.0
  %1026 = vmatprep.subr.mxu0 0.0
  %1027 = vmatpush1.msra.mxu0 0.0
  %1028 = vmatprep.subr.mxu0 0.0
  %1029 = vmatpush1.msra.mxu0 0.0
  %1030 = vmatprep.subr.mxu0 0.0
  %1031 = vmatpush1.msra.mxu0 0.0
  %1032 = vmatprep.subr.mxu0 0.0
  %1033 = vmatpush1.msra.mxu0 0.0
  %1034 = vmatprep.subr.mxu0 0.0
  %1035 = vmatpush1.msra.mxu0 0.0
  %1036 = vmatprep.subr.mxu0 0.0
  %1037 = vmatpush1.msra.mxu0 0.0
  %1038 = vmatprep.subr.mxu0 0.0
  %1039 = vmatpush1.msra.mxu0 0.0
  %1040 = vmatprep.mubr.f32.mxu0 0.0
  %1041 = vmatmul.mubr.f32.gmra.mrb[0].mxu0 %v974
  %v1042 = vpop.f32.mrb[0].mxu0
  %v1043 = vadd.f32 %v43, %v1042
  %v1044 = vpop.f32.mrb[0].mxu0
  %v1045 = vadd.f32 %v47, %v1044
  %1046 = vdwg.mxu0
  %1047 = vmatprep.subr.mxu0 0.0
  %1048 = vmatpush1.msra.mxu0 %v972
  %1049 = vmatprep.subr.mxu0 0.0
  %1050 = vmatpush1.msra.mxu0 0.0
  %1051 = vmatprep.subr.mxu0 0.0
  %1052 = vmatpush1.msra.mxu0 0.0
  %1053 = vmatprep.subr.mxu0 0.0
  %1054 = vmatpush1.msra.mxu0 0.0
  %1055 = vmatprep.subr.mxu0 0.0
  %1056 = vmatpush1.msra.mxu0 0.0
  %1057 = vmatprep.subr.mxu0 0.0
  %1058 = vmatpush1.msra.mxu0 0.0
  %1059 = vmatprep.subr.mxu0 0.0
  %1060 = vmatpush1.msra.mxu0 0.0
  %1061 = vmatprep.subr.mxu0 0.0
  %1062 = vmatpush1.msra.mxu0 0.0
  %1063 = vmatprep.subr.mxu0 0.0
  %1064 = vmatpush1.msra.mxu0 0.0
  %1065 = vmatprep.subr.mxu0 0.0
  %1066 = vmatpush1.msra.mxu0 0.0
  %1067 = vmatprep.subr.mxu0 0.0
  %1068 = vmatpush1.msra.mxu0 0.0
  %1069 = vmatprep.subr.mxu0 0.0
  %1070 = vmatpush1.msra.mxu0 0.0
  %1071 = vmatprep.subr.mxu0 0.0
  %1072 = vmatpush1.msra.mxu0 0.0
  %1073 = vmatprep.subr.mxu0 0.0
  %1074 = vmatpush1.msra.mxu0 0.0
  %1075 = vmatprep.subr.mxu0 0.0
  %1076 = vmatpush1.msra.mxu0 0.0
  %1077 = vmatprep.subr.mxu0 0.0
  %1078 = vmatpush1.msra.mxu0 0.0
  %1079 = vmatprep.subr.mxu0 0.0
  %1080 = vmatpush1.msra.mxu0 0.0
  %1081 = vmatprep.subr.mxu0 0.0
  %1082 = vmatpush1.msra.mxu0 0.0
  %1083 = vmatprep.subr.mxu0 0.0
  %1084 = vmatpush1.msra.mxu0 0.0
  %1085 = vmatprep.subr.mxu0 0.0
  %1086 = vmatpush1.msra.mxu0 0.0
  %1087 = vmatprep.subr.mxu0 0.0
  %1088 = vmatpush1.msra.mxu0 0.0
  %1089 = vmatprep.subr.mxu0 0.0
  %1090 = vmatpush1.msra.mxu0 0.0
  %1091 = vmatprep.subr.mxu0 0.0
  %1092 = vmatpush1.msra.mxu0 0.0
  %1093 = vmatprep.subr.mxu0 0.0
  %1094 = vmatpush1.msra.mxu0 0.0
  %1095 = vmatprep.subr.mxu0 0.0
  %1096 = vmatpush1.msra.mxu0 0.0
  %1097 = vmatprep.subr.mxu0 0.0
  %1098 = vmatpush1.msra.mxu0 0.0
  %1099 = vmatprep.subr.mxu0 0.0
  %1100 = vmatpush1.msra.mxu0 0.0
  %1101 = vmatprep.subr.mxu0 0.0
  %1102 = vmatpush1.msra.mxu0 0.0
  %1103 = vmatprep.subr.mxu0 0.0
  %1104 = vmatpush1.msra.mxu0 0.0
  %1105 = vmatprep.subr.mxu0 0.0
  %1106 = vmatpush1.msra.mxu0 0.0
  %1107 = vmatprep.subr.mxu0 0.0
  %1108 = vmatpush1.msra.mxu0 0.0
  %1109 = vmatprep.subr.mxu0 0.0
  %1110 = vmatpush1.msra.mxu0 0.0
  %1111 = vmatprep.mubr.f32.mxu0 0.0
  %1112 = vmatmul.mubr.f32.gmra.mrb[0].mxu0 %v974
  %v1113 = vpop.f32.mrb[0].mxu0
  %v1114 = vadd.f32 %v51, %v1113
  %v1115 = vpop.f32.mrb[0].mxu0
  %1116 = vdwg.mxu0
  %s1117 = scalar_lea.vmem [#allocation2], 144
  %1118 = vst [vmem:[%s1117] sm:$0xff] %v1043
  %1119 = vst [vmem:[%s1117 + $0x8] sm:$0xff] %v1045
  %1120 = vst [vmem:[%s1117 + $0x10] sm:$0xff] %v1114
  %s1121 = scalar_lea.vmem %s0, 56
  %v1122 = vld [vmem:[%s1121] sm:$0xff]
  %v1123 = vld [vmem:[%s1] sm:$0xff]
  %v1124 = vld [vmem:[%s1 + $0x8] sm:$0xff]
  %v1125 = vld [vmem:[%s1 + $0x10] sm:$0xff]
  %v1127 = vsel %vm55, %v1122, 0
  %1129 = vmatprep.subr.mxu0 %v1124
  %1130 = vmatpush1.msra.mxu0 %v1123
  %1131 = vmatprep.subr.mxu0 0.0
  %1132 = vmatpush1.msra.mxu0 0.0
  %1133 = vmatprep.subr.mxu0 0.0
  %1134 = vmatpush1.msra.mxu0 0.0
  %1135 = vmatprep.subr.mxu0 0.0
  %1136 = vmatpush1.msra.mxu0 0.0
  %1137 = vmatprep.subr.mxu0 0.0
  %1138 = vmatpush1.msra.mxu0 0.0
  %1139 = vmatprep.subr.mxu0 0.0
  %1140 = vmatpush1.msra.mxu0 0.0
  %1141 = vmatprep.subr.mxu0 0.0
  %1142 = vmatpush1.msra.mxu0 0.0
  %1143 = vmatprep.subr.mxu0 0.0
  %1144 = vmatpush1.msra.mxu0 0.0
  %1145 = vmatprep.subr.mxu0 0.0
  %1146 = vmatpush1.msra.mxu0 0.0
  %1147 = vmatprep.subr.mxu0 0.0
  %1148 = vmatpush1.msra.mxu0 0.0
  %1149 = vmatprep.subr.mxu0 0.0
  %1150 = vmatpush1.msra.mxu0 0.0
  %1151 = vmatprep.subr.mxu0 0.0
  %1152 = vmatpush1.msra.mxu0 0.0
  %1153 = vmatprep.subr.mxu0 0.0
  %1154 = vmatpush1.msra.mxu0 0.0
  %1155 = vmatprep.subr.mxu0 0.0
  %1156 = vmatpush1.msra.mxu0 0.0
  %1157 = vmatprep.subr.mxu0 0.0
  %1158 = vmatpush1.msra.mxu0 0.0
  %1159 = vmatprep.subr.mxu0 0.0
  %1160 = vmatpush1.msra.mxu0 0.0
  %1161 = vmatprep.subr.mxu0 0.0
  %1162 = vmatpush1.msra.mxu0 0.0
  %1163 = vmatprep.subr.mxu0 0.0
  %1164 = vmatpush1.msra.mxu0 0.0
  %1165 = vmatprep.subr.mxu0 0.0
  %1166 = vmatpush1.msra.mxu0 0.0
  %1167 = vmatprep.subr.mxu0 0.0
  %1168 = vmatpush1.msra.mxu0 0.0
  %1169 = vmatprep.subr.mxu0 0.0
  %1170 = vmatpush1.msra.mxu0 0.0
  %1171 = vmatprep.subr.mxu0 0.0
  %1172 = vmatpush1.msra.mxu0 0.0
  %1173 = vmatprep.subr.mxu0 0.0
  %1174 = vmatpush1.msra.mxu0 0.0
  %1175 = vmatprep.subr.mxu0 0.0
  %1176 = vmatpush1.msra.mxu0 0.0
  %1177 = vmatprep.subr.mxu0 0.0
  %1178 = vmatpush1.msra.mxu0 0.0
  %1179 = vmatprep.subr.mxu0 0.0
  %1180 = vmatpush1.msra.mxu0 0.0
  %1181 = vmatprep.subr.mxu0 0.0
  %1182 = vmatpush1.msra.mxu0 0.0
  %1183 = vmatprep.subr.mxu0 0.0
  %1184 = vmatpush1.msra.mxu0 0.0
  %1185 = vmatprep.subr.mxu0 0.0
  %1186 = vmatpush1.msra.mxu0 0.0
  %1187 = vmatprep.subr.mxu0 0.0
  %1188 = vmatpush1.msra.mxu0 0.0
  %1189 = vmatprep.subr.mxu0 0.0
  %1190 = vmatpush1.msra.mxu0 0.0
  %1191 = vmatprep.subr.mxu0 0.0
  %1192 = vmatpush1.msra.mxu0 0.0
  %1193 = vmatprep.mubr.f32.mxu0 0.0
  %1194 = vmatmul.mubr.f32.gmra.mrb[0].mxu0 %v1127
  %v1195 = vpop.f32.mrb[0].mxu0
  %v1196 = vadd.f32 %v43, %v1195
  %v1197 = vpop.f32.mrb[0].mxu0
  %v1198 = vadd.f32 %v47, %v1197
  %1199 = vdwg.mxu0
  %1200 = vmatprep.subr.mxu0 0.0
  %1201 = vmatpush1.msra.mxu0 %v1125
  %1202 = vmatprep.subr.mxu0 0.0
  %1203 = vmatpush1.msra.mxu0 0.0
  %1204 = vmatprep.subr.mxu0 0.0
  %1205 = vmatpush1.msra.mxu0 0.0
  %1206 = vmatprep.subr.mxu0 0.0
  %1207 = vmatpush1.msra.mxu0 0.0
  %1208 = vmatprep.subr.mxu0 0.0
  %1209 = vmatpush1.msra.mxu0 0.0
  %1210 = vmatprep.subr.mxu0 0.0
  %1211 = vmatpush1.msra.mxu0 0.0
  %1212 = vmatprep.subr.mxu0 0.0
  %1213 = vmatpush1.msra.mxu0 0.0
  %1214 = vmatprep.subr.mxu0 0.0
  %1215 = vmatpush1.msra.mxu0 0.0
  %1216 = vmatprep.subr.mxu0 0.0
  %1217 = vmatpush1.msra.mxu0 0.0
  %1218 = vmatprep.subr.mxu0 0.0
  %1219 = vmatpush1.msra.mxu0 0.0
  %1220 = vmatprep.subr.mxu0 0.0
  %1221 = vmatpush1.msra.mxu0 0.0
  %1222 = vmatprep.subr.mxu0 0.0
  %1223 = vmatpush1.msra.mxu0 0.0
  %1224 = vmatprep.subr.mxu0 0.0
  %1225 = vmatpush1.msra.mxu0 0.0
  %1226 = vmatprep.subr.mxu0 0.0
  %1227 = vmatpush1.msra.mxu0 0.0
  %1228 = vmatprep.subr.mxu0 0.0
  %1229 = vmatpush1.msra.mxu0 0.0
  %1230 = vmatprep.subr.mxu0 0.0
  %1231 = vmatpush1.msra.mxu0 0.0
  %1232 = vmatprep.subr.mxu0 0.0
  %1233 = vmatpush1.msra.mxu0 0.0
  %1234 = vmatprep.subr.mxu0 0.0
  %1235 = vmatpush1.msra.mxu0 0.0
  %1236 = vmatprep.subr.mxu0 0.0
  %1237 = vmatpush1.msra.mxu0 0.0
  %1238 = vmatprep.subr.mxu0 0.0
  %1239 = vmatpush1.msra.mxu0 0.0
  %1240 = vmatprep.subr.mxu0 0.0
  %1241 = vmatpush1.msra.mxu0 0.0
  %1242 = vmatprep.subr.mxu0 0.0
  %1243 = vmatpush1.msra.mxu0 0.0
  %1244 = vmatprep.subr.mxu0 0.0
  %1245 = vmatpush1.msra.mxu0 0.0
  %1246 = vmatprep.subr.mxu0 0.0
  %1247 = vmatpush1.msra.mxu0 0.0
  %1248 = vmatprep.subr.mxu0 0.0
  %1249 = vmatpush1.msra.mxu0 0.0
  %1250 = vmatprep.subr.mxu0 0.0
  %1251 = vmatpush1.msra.mxu0 0.0
  %1252 = vmatprep.subr.mxu0 0.0
  %1253 = vmatpush1.msra.mxu0 0.0
  %1254 = vmatprep.subr.mxu0 0.0
  %1255 = vmatpush1.msra.mxu0 0.0
  %1256 = vmatprep.subr.mxu0 0.0
  %1257 = vmatpush1.msra.mxu0 0.0
  %1258 = vmatprep.subr.mxu0 0.0
  %1259 = vmatpush1.msra.mxu0 0.0
  %1260 = vmatprep.subr.mxu0 0.0
  %1261 = vmatpush1.msra.mxu0 0.0
  %1262 = vmatprep.subr.mxu0 0.0
  %1263 = vmatpush1.msra.mxu0 0.0
  %1264 = vmatprep.mubr.f32.mxu0 0.0
  %1265 = vmatmul.mubr.f32.gmra.mrb[0].mxu0 %v1127
  %v1266 = vpop.f32.mrb[0].mxu0
  %v1267 = vadd.f32 %v51, %v1266
  %v1268 = vpop.f32.mrb[0].mxu0
  %1269 = vdwg.mxu0
  %s1270 = scalar_lea.vmem [#allocation2], 168
  %1271 = vst [vmem:[%s1270] sm:$0xff] %v1196
  %1272 = vst [vmem:[%s1270 + $0x8] sm:$0xff] %v1198
  %1273 = vst [vmem:[%s1270 + $0x10] sm:$0xff] %v1267
  %v1274 = vld [vmem:[%s4] sm:$0x1]
  %v1275 = vlaneseq
  %v1276 = vshrl.u32 %v1275, 7
  %v1277 = vsub.s32 0, %v1276
  %v1278 = vrot.slane %v1274, %v1277
  %v1279 = vld [vmem:[%s8] sm:$0xff]
  %v1280 = vld [vmem:[#allocation2] sm:$0xff]
  %v1281 = vld [vmem:[#allocation2 + $0x8] sm:$0xff]
  %v1282 = vld [vmem:[#allocation2 + $0x10] sm:$0xff]
  %v1283 = vpack.c.bf16 %v1279, %v1279
  %v1284 = vld [vmem:[%s3] sm:$0xff]
  %v1285 = vld [vmem:[%s3 + $0x8] sm:$0xf]
  %v1286 = vld [vmem:[%s3 + $0xc] sm:$0xff]
  %v1287 = vld [vmem:[%s3 + $0x14] sm:$0xf]
  %v1288 = vld [vmem:[%s3 + $0x18] sm:$0xff]
  %v1289 = vld [vmem:[%s3 + $0x20] sm:$0xf]
  %v1290 = vld [vmem:[%s3 + $0x24] sm:$0xff]
  %v1291 = vld [vmem:[%s3 + $0x2c] sm:$0xf]
  %v1292 = vld [vmem:[%s3 + $0x30] sm:$0xff]
  %v1293 = vld [vmem:[%s3 + $0x38] sm:$0xf]
  %v1294 = vld [vmem:[%s3 + $0x3c] sm:$0xff]
  %v1295 = vld [vmem:[%s3 + $0x44] sm:$0xf]
  %v1296 = vld [vmem:[%s3 + $0x48] sm:$0xff]
  %v1297 = vld [vmem:[%s3 + $0x50] sm:$0xf]
  %v1298 = vld [vmem:[%s3 + $0x54] sm:$0xff]
  %v1299 = vld [vmem:[%s3 + $0x5c] sm:$0xf]
  %v1300 = vld [vmem:[%s3 + $0x60] sm:$0xff]
  %v1301 = vld [vmem:[%s3 + $0x68] sm:$0xf]
  %v1302 = vld [vmem:[%s3 + $0x6c] sm:$0xff]
  %v1303 = vld [vmem:[%s3 + $0x74] sm:$0xf]
  %v1304 = vld [vmem:[%s3 + $0x78] sm:$0xff]
  %v1305 = vld [vmem:[%s3 + $0x80] sm:$0xf]
  %v1306 = vld [vmem:[%s3 + $0x84] sm:$0xff]
  %v1307 = vld [vmem:[%s3 + $0x8c] sm:$0xf]
  %v1308 = vld [vmem:[%s3 + $0x90] sm:$0xff]
  %v1309 = vld [vmem:[%s3 + $0x98] sm:$0xf]
  %v1310 = vld [vmem:[%s3 + $0x9c] sm:$0xff]
  %v1311 = vld [vmem:[%s3 + $0xa4] sm:$0xf]
  %v1312 = vld [vmem:[%s3 + $0xa8] sm:$0xff]
  %v1313 = vld [vmem:[%s3 + $0xb0] sm:$0xf]
  %v1314 = vld [vmem:[%s3 + $0xb4] sm:$0xff]
  %v1315 = vld [vmem:[%s3 + $0xbc] sm:$0xf]
  %v1348 = vunpack.c.l.b16 %v1284
  %v1349 = vunpack.c.h.b16 %v1284
  %v1350 = vunpack.c.l.b16 %v1285
  %v1351 = vunpack.c.l.b16 %v1286
  %v1352 = vunpack.c.h.b16 %v1286
  %v1353 = vunpack.c.l.b16 %v1287
  %v1354 = vunpack.c.l.b16 %v1288
  %v1355 = vunpack.c.h.b16 %v1288
  %v1356 = vunpack.c.l.b16 %v1289
  %v1357 = vunpack.c.l.b16 %v1290
  %v1358 = vunpack.c.h.b16 %v1290
  %v1359 = vunpack.c.l.b16 %v1291
  %v1360 = vunpack.c.l.b16 %v1292
  %v1361 = vunpack.c.h.b16 %v1292
  %v1362 = vunpack.c.l.b16 %v1293
  %v1363 = vunpack.c.l.b16 %v1294
  %v1364 = vunpack.c.h.b16 %v1294
  %v1365 = vunpack.c.l.b16 %v1295
  %v1366 = vunpack.c.l.b16 %v1296
  %v1367 = vunpack.c.h.b16 %v1296
  %v1368 = vunpack.c.l.b16 %v1297
  %v1369 = vunpack.c.l.b16 %v1298
  %v1370 = vunpack.c.h.b16 %v1298
  %v1371 = vunpack.c.l.b16 %v1299
  %v1372 = vunpack.c.l.b16 %v1300
  %v1373 = vunpack.c.h.b16 %v1300
  %v1374 = vunpack.c.l.b16 %v1301
  %v1375 = vunpack.c.l.b16 %v1302
  %v1376 = vunpack.c.h.b16 %v1302
  %v1377 = vunpack.c.l.b16 %v1303
  %v1378 = vunpack.c.l.b16 %v1304
  %v1379 = vunpack.c.h.b16 %v1304
  %v1380 = vunpack.c.l.b16 %v1305
  %v1381 = vunpack.c.l.b16 %v1306
  %v1382 = vunpack.c.h.b16 %v1306
  %v1383 = vunpack.c.l.b16 %v1307
  %v1384 = vunpack.c.l.b16 %v1308
  %v1385 = vunpack.c.h.b16 %v1308
  %v1386 = vunpack.c.l.b16 %v1309
  %v1387 = vunpack.c.l.b16 %v1310
  %v1388 = vunpack.c.h.b16 %v1310
  %v1389 = vunpack.c.l.b16 %v1311
  %v1390 = vunpack.c.l.b16 %v1312
  %v1391 = vunpack.c.h.b16 %v1312
  %v1392 = vunpack.c.l.b16 %v1313
  %v1393 = vunpack.c.l.b16 %v1314
  %v1394 = vunpack.c.h.b16 %v1314
  %v1395 = vunpack.c.l.b16 %v1315
  %v1396 = vpack.c.b16 %v1351, %v1348
  %v1397 = vpack.c.b16 %v1352, %v1349
  %v1398 = vpack.c.b16 %v1353, %v1350
  %v1399 = vpack.c.b16 %v1357, %v1354
  %v1400 = vpack.c.b16 %v1358, %v1355
  %v1401 = vpack.c.b16 %v1359, %v1356
  %v1402 = vpack.c.b16 %v1363, %v1360
  %v1403 = vpack.c.b16 %v1364, %v1361
  %v1404 = vpack.c.b16 %v1365, %v1362
  %v1405 = vpack.c.b16 %v1369, %v1366
  %v1406 = vpack.c.b16 %v1370, %v1367
  %v1407 = vpack.c.b16 %v1371, %v1368
  %v1408 = vpack.c.b16 %v1375, %v1372
  %v1409 = vpack.c.b16 %v1376, %v1373
  %v1410 = vpack.c.b16 %v1377, %v1374
  %v1411 = vpack.c.b16 %v1381, %v1378
  %v1412 = vpack.c.b16 %v1382, %v1379
  %v1413 = vpack.c.b16 %v1383, %v1380
  %v1414 = vpack.c.b16 %v1387, %v1384
  %v1415 = vpack.c.b16 %v1388, %v1385
  %v1416 = vpack.c.b16 %v1389, %v1386
  %v1417 = vpack.c.b16 %v1393, %v1390
  %v1418 = vpack.c.b16 %v1394, %v1391
  %v1419 = vpack.c.b16 %v1395, %v1392
  %1444 = vmatprep.subr.bf16.mxu0 %v1397
  %1445 = vmatpush1.bf16.msra.mxu0 %v1396
  %1446 = vmatprep.subr.bf16.mxu0 %v1400
  %1447 = vmatpush1.bf16.msra.mxu0 %v1399
  %1448 = vmatprep.subr.bf16.mxu0 %v1403
  %1449 = vmatpush1.bf16.msra.mxu0 %v1402
  %1450 = vmatprep.subr.bf16.mxu0 %v1406
  %1451 = vmatpush1.bf16.msra.mxu0 %v1405
  %1452 = vmatprep.subr.bf16.mxu0 %v1409
  %1453 = vmatpush1.bf16.msra.mxu0 %v1408
  %1454 = vmatprep.subr.bf16.mxu0 %v1412
  %1455 = vmatpush1.bf16.msra.mxu0 %v1411
  %1456 = vmatprep.subr.bf16.mxu0 %v1415
  %1457 = vmatpush1.bf16.msra.mxu0 %v1414
  %1458 = vmatprep.subr.bf16.mxu0 %v1418
  %1459 = vmatpush1.bf16.msra.mxu0 %v1417
  %1460 = vmatprep.subr.bf16.mxu0 0
  %1461 = vmatpush1.bf16.msra.mxu0 0
  %1462 = vmatprep.subr.bf16.mxu0 0
  %1463 = vmatpush1.bf16.msra.mxu0 0
  %1464 = vmatprep.subr.bf16.mxu0 0
  %1465 = vmatpush1.bf16.msra.mxu0 0
  %1466 = vmatprep.subr.bf16.mxu0 0
  %1467 = vmatpush1.bf16.msra.mxu0 0
  %1468 = vmatprep.subr.bf16.mxu0 0
  %1469 = vmatpush1.bf16.msra.mxu0 0
  %1470 = vmatprep.subr.bf16.mxu0 0
  %1471 = vmatpush1.bf16.msra.mxu0 0
  %1472 = vmatprep.subr.bf16.mxu0 0
  %1473 = vmatpush1.bf16.msra.mxu0 0
  %1474 = vmatprep.subr.bf16.mxu0 0
  %1475 = vmatpush1.bf16.msra.mxu0 0
  %1476 = vmatprep.mubr.bf16.mxu0 0
  %1477 = vmatmul.mubr.bf16.gmra.mrb[0].mxu0 %v1283
  %v1478 = vpop.f32.mrb[0].mxu0
  %v1479 = vadd.f32 0.0, %v1478
  %v1480 = vpop.f32.mrb[0].mxu0
  %v1481 = vadd.f32 0.0, %v1480
  %v1482 = vpop.f32.mrb[0].mxu0
  %v1483 = vpop.f32.mrb[0].mxu0
  %1484 = vdwg.mxu0
  %1485 = vmatprep.subr.bf16.mxu0 0
  %1486 = vmatpush1.bf16.msra.mxu0 %v1398
  %1487 = vmatprep.subr.bf16.mxu0 0
  %1488 = vmatpush1.bf16.msra.mxu0 %v1401
  %1489 = vmatprep.subr.bf16.mxu0 0
  %1490 = vmatpush1.bf16.msra.mxu0 %v1404
  %1491 = vmatprep.subr.bf16.mxu0 0
  %1492 = vmatpush1.bf16.msra.mxu0 %v1407
  %1493 = vmatprep.subr.bf16.mxu0 0
  %1494 = vmatpush1.bf16.msra.mxu0 %v1410
  %1495 = vmatprep.subr.bf16.mxu0 0
  %1496 = vmatpush1.bf16.msra.mxu0 %v1413
  %1497 = vmatprep.subr.bf16.mxu0 0
  %1498 = vmatpush1.bf16.msra.mxu0 %v1416
  %1499 = vmatprep.subr.bf16.mxu0 0
  %1500 = vmatpush1.bf16.msra.mxu0 %v1419
  %1501 = vmatprep.subr.bf16.mxu0 0
  %1502 = vmatpush1.bf16.msra.mxu0 0
  %1503 = vmatprep.subr.bf16.mxu0 0
  %1504 = vmatpush1.bf16.msra.mxu0 0
  %1505 = vmatprep.subr.bf16.mxu0 0
  %1506 = vmatpush1.bf16.msra.mxu0 0
  %1507 = vmatprep.subr.bf16.mxu0 0
  %1508 = vmatpush1.bf16.msra.mxu0 0
  %1509 = vmatprep.subr.bf16.mxu0 0
  %1510 = vmatpush1.bf16.msra.mxu0 0
  %1511 = vmatprep.subr.bf16.mxu0 0
  %1512 = vmatpush1.bf16.msra.mxu0 0
  %1513 = vmatprep.subr.bf16.mxu0 0
  %1514 = vmatpush1.bf16.msra.mxu0 0
  %1515 = vmatprep.subr.bf16.mxu0 0
  %1516 = vmatpush1.bf16.msra.mxu0 0
  %1517 = vmatprep.mubr.bf16.mxu0 0
  %1518 = vmatmul.mubr.bf16.gmra.mrb[0].mxu0 %v1283
  %v1519 = vpop.f32.mrb[0].mxu0
  %v1520 = vadd.f32 0.0, %v1519
  %v1521 = vpop.f32.mrb[0].mxu0
  %v1522 = vpop.f32.mrb[0].mxu0
  %v1523 = vpop.f32.mrb[0].mxu0
  %1524 = vdwg.mxu0
  %v1525 = vadd.f32 %v1280, %v1479
  %v1526 = vxor.u32 %v1525, 2147483648
  %v1527 = vmul.f32 %v1526, 1.442695
  %v1528 = vpow.pop %v1527
  %v1529 = vadd.f32 %v1528, 1.0
  %v1530 = vrcp.pop %v1529
  %v1531 = vmul.f32 1.0, %v1530
  %v1532 = vadd.f32 %v1281, %v1481
  %v1533 = vxor.u32 %v1532, 2147483648
  %v1534 = vmul.f32 %v1533, 1.442695
  %v1535 = vpow.pop %v1534
  %v1536 = vadd.f32 %v1535, 1.0
  %v1537 = vrcp.pop %v1536
  %v1538 = vmul.f32 1.0, %v1537
  %v1539 = vadd.f32 %v1520, %v1278
  %v1540 = vmul.f32 %v1531, %v1539
  %v1541 = vadd.f32 %v1282, %v1540
  %v1542 = vtanh.pop %v1541
  %v1543 = vsub.f32 1.0, %v1538
  %v1544 = vmul.f32 %v1543, %v1542
  %v1545 = vmul.f32 %v1538, %v1279
  %v1546 = vadd.f32 %v1544, %v1545
  %v1547 = vld [vmem:[%s352] sm:$0xff]
  %v1548 = vld [vmem:[%s352 + $0x8] sm:$0xff]
  %v1549 = vld [vmem:[%s352 + $0x10] sm:$0xff]
  %v1550 = vpack.c.bf16 %v1546, %v1546
  %1551 = vmatprep.subr.bf16.mxu0 %v1397
  %1552 = vmatpush1.bf16.msra.mxu0 %v1396
  %1553 = vmatprep.subr.bf16.mxu0 %v1400
  %1554 = vmatpush1.bf16.msra.mxu0 %v1399
  %1555 = vmatprep.subr.bf16.mxu0 %v1403
  %1556 = vmatpush1.bf16.msra.mxu0 %v1402
  %1557 = vmatprep.subr.bf16.mxu0 %v1406
  %1558 = vmatpush1.bf16.msra.mxu0 %v1405
  %1559 = vmatprep.subr.bf16.mxu0 %v1409
  %1560 = vmatpush1.bf16.msra.mxu0 %v1408
  %1561 = vmatprep.subr.bf16.mxu0 %v1412
  %1562 = vmatpush1.bf16.msra.mxu0 %v1411
  %1563 = vmatprep.subr.bf16.mxu0 %v1415
  %1564 = vmatpush1.bf16.msra.mxu0 %v1414
  %1565 = vmatprep.subr.bf16.mxu0 %v1418
  %1566 = vmatpush1.bf16.msra.mxu0 %v1417
  %1567 = vmatprep.subr.bf16.mxu0 0
  %1568 = vmatpush1.bf16.msra.mxu0 0
  %1569 = vmatprep.subr.bf16.mxu0 0
  %1570 = vmatpush1.bf16.msra.mxu0 0
  %1571 = vmatprep.subr.bf16.mxu0 0
  %1572 = vmatpush1.bf16.msra.mxu0 0
  %1573 = vmatprep.subr.bf16.mxu0 0
  %1574 = vmatpush1.bf16.msra.mxu0 0
  %1575 = vmatprep.subr.bf16.mxu0 0
  %1576 = vmatpush1.bf16.msra.mxu0 0
  %1577 = vmatprep.subr.bf16.mxu0 0
  %1578 = vmatpush1.bf16.msra.mxu0 0
  %1579 = vmatprep.subr.bf16.mxu0 0
  %1580 = vmatpush1.bf16.msra.mxu0 0
  %1581 = vmatprep.subr.bf16.mxu0 0
  %1582 = vmatpush1.bf16.msra.mxu0 0
  %1583 = vmatprep.mubr.bf16.mxu0 0
  %1584 = vmatmul.mubr.bf16.gmra.mrb[0].mxu0 %v1550
  %v1585 = vpop.f32.mrb[0].mxu0
  %v1586 = vadd.f32 0.0, %v1585
  %v1587 = vpop.f32.mrb[0].mxu0
  %v1588 = vadd.f32 0.0, %v1587
  %v1589 = vpop.f32.mrb[0].mxu0
  %v1590 = vpop.f32.mrb[0].mxu0
  %1591 = vdwg.mxu0
  %1592 = vmatprep.subr.bf16.mxu0 0
  %1593 = vmatpush1.bf16.msra.mxu0 %v1398
  %1594 = vmatprep.subr.bf16.mxu0 0
  %1595 = vmatpush1.bf16.msra.mxu0 %v1401
  %1596 = vmatprep.subr.bf16.mxu0 0
  %1597 = vmatpush1.bf16.msra.mxu0 %v1404
  %1598 = vmatprep.subr.bf16.mxu0 0
  %1599 = vmatpush1.bf16.msra.mxu0 %v1407
  %1600 = vmatprep.subr.bf16.mxu0 0
  %1601 = vmatpush1.bf16.msra.mxu0 %v1410
  %1602 = vmatprep.subr.bf16.mxu0 0
  %1603 = vmatpush1.bf16.msra.mxu0 %v1413
  %1604 = vmatprep.subr.bf16.mxu0 0
  %1605 = vmatpush1.bf16.msra.mxu0 %v1416
  %1606 = vmatprep.subr.bf16.mxu0 0
  %1607 = vmatpush1.bf16.msra.mxu0 %v1419
  %1608 = vmatprep.subr.bf16.mxu0 0
  %1609 = vmatpush1.bf16.msra.mxu0 0
  %1610 = vmatprep.subr.bf16.mxu0 0
  %1611 = vmatpush1.bf16.msra.mxu0 0
  %1612 = vmatprep.subr.bf16.mxu0 0
  %1613 = vmatpush1.bf16.msra.mxu0 0
  %1614 = vmatprep.subr.bf16.mxu0 0
  %1615 = vmatpush1.bf16.msra.mxu0 0
  %1616 = vmatprep.subr.bf16.mxu0 0
  %1617 = vmatpush1.bf16.msra.mxu0 0
  %1618 = vmatprep.subr.bf16.mxu0 0
  %1619 = vmatpush1.bf16.msra.mxu0 0
  %1620 = vmatprep.subr.bf16.mxu0 0
  %1621 = vmatpush1.bf16.msra.mxu0 0
  %1622 = vmatprep.subr.bf16.mxu0 0
  %1623 = vmatpush1.bf16.msra.mxu0 0
  %1624 = vmatprep.mubr.bf16.mxu0 0
  %1625 = vmatmul.mubr.bf16.gmra.mrb[0].mxu0 %v1550
  %v1626 = vpop.f32.mrb[0].mxu0
  %v1627 = vadd.f32 0.0, %v1626
  %v1628 = vpop.f32.mrb[0].mxu0
  %v1629 = vpop.f32.mrb[0].mxu0
  %v1630 = vpop.f32.mrb[0].mxu0
  %1631 = vdwg.mxu0
  %v1632 = vadd.f32 %v1547, %v1586
  %v1633 = vxor.u32 %v1632, 2147483648
  %v1634 = vmul.f32 %v1633, 1.442695
  %v1635 = vpow.pop %v1634
  %v1636 = vadd.f32 %v1635, 1.0
  %v1637 = vrcp.pop %v1636
  %v1638 = vmul.f32 1.0, %v1637
  %v1639 = vadd.f32 %v1548, %v1588
  %v1640 = vxor.u32 %v1639, 2147483648
  %v1641 = vmul.f32 %v1640, 1.442695
  %v1642 = vpow.pop %v1641
  %v1643 = vadd.f32 %v1642, 1.0
  %v1644 = vrcp.pop %v1643
  %v1645 = vmul.f32 1.0, %v1644
  %v1646 = vadd.f32 %v1627, %v1278
  %v1647 = vmul.f32 %v1638, %v1646
  %v1648 = vadd.f32 %v1549, %v1647
  %v1649 = vtanh.pop %v1648
  %v1650 = vsub.f32 1.0, %v1645
  %v1651 = vmul.f32 %v1650, %v1649
  %v1652 = vmul.f32 %v1645, %v1546
  %v1653 = vadd.f32 %v1651, %v1652
  %v1654 = vld [vmem:[%s505] sm:$0xff]
  %v1655 = vld [vmem:[%s505 + $0x8] sm:$0xff]
  %v1656 = vld [vmem:[%s505 + $0x10] sm:$0xff]
  %v1657 = vpack.c.bf16 %v1653, %v1653
  %1658 = vmatprep.subr.bf16.mxu0 %v1397
  %1659 = vmatpush1.bf16.msra.mxu0 %v1396
  %1660 = vmatprep.subr.bf16.mxu0 %v1400
  %1661 = vmatpush1.bf16.msra.mxu0 %v1399
  %1662 = vmatprep.subr.bf16.mxu0 %v1403
  %1663 = vmatpush1.bf16.msra.mxu0 %v1402
  %1664 = vmatprep.subr.bf16.mxu0 %v1406
  %1665 = vmatpush1.bf16.msra.mxu0 %v1405
  %1666 = vmatprep.subr.bf16.mxu0 %v1409
  %1667 = vmatpush1.bf16.msra.mxu0 %v1408
  %1668 = vmatprep.subr.bf16.mxu0 %v1412
  %1669 = vmatpush1.bf16.msra.mxu0 %v1411
  %1670 = vmatprep.subr.bf16.mxu0 %v1415
  %1671 = vmatpush1.bf16.msra.mxu0 %v1414
  %1672 = vmatprep.subr.bf16.mxu0 %v1418
  %1673 = vmatpush1.bf16.msra.mxu0 %v1417
  %1674 = vmatprep.subr.bf16.mxu0 0
  %1675 = vmatpush1.bf16.msra.mxu0 0
  %1676 = vmatprep.subr.bf16.mxu0 0
  %1677 = vmatpush1.bf16.msra.mxu0 0
  %1678 = vmatprep.subr.bf16.mxu0 0
  %1679 = vmatpush1.bf16.msra.mxu0 0
  %1680 = vmatprep.subr.bf16.mxu0 0
  %1681 = vmatpush1.bf16.msra.mxu0 0
  %1682 = vmatprep.subr.bf16.mxu0 0
  %1683 = vmatpush1.bf16.msra.mxu0 0
  %1684 = vmatprep.subr.bf16.mxu0 0
  %1685 = vmatpush1.bf16.msra.mxu0 0
  %1686 = vmatprep.subr.bf16.mxu0 0
  %1687 = vmatpush1.bf16.msra.mxu0 0
  %1688 = vmatprep.subr.bf16.mxu0 0
  %1689 = vmatpush1.bf16.msra.mxu0 0
  %1690 = vmatprep.mubr.bf16.mxu0 0
  %1691 = vmatmul.mubr.bf16.gmra.mrb[0].mxu0 %v1657
  %v1692 = vpop.f32.mrb[0].mxu0
  %v1693 = vadd.f32 0.0, %v1692
  %v1694 = vpop.f32.mrb[0].mxu0
  %v1695 = vadd.f32 0.0, %v1694
  %v1696 = vpop.f32.mrb[0].mxu0
  %v1697 = vpop.f32.mrb[0].mxu0
  %1698 = vdwg.mxu0
  %1699 = vmatprep.subr.bf16.mxu0 0
  %1700 = vmatpush1.bf16.msra.mxu0 %v1398
  %1701 = vmatprep.subr.bf16.mxu0 0
  %1702 = vmatpush1.bf16.msra.mxu0 %v1401
  %1703 = vmatprep.subr.bf16.mxu0 0
  %1704 = vmatpush1.bf16.msra.mxu0 %v1404
  %1705 = vmatprep.subr.bf16.mxu0 0
  %1706 = vmatpush1.bf16.msra.mxu0 %v1407
  %1707 = vmatprep.subr.bf16.mxu0 0
  %1708 = vmatpush1.bf16.msra.mxu0 %v1410
  %1709 = vmatprep.subr.bf16.mxu0 0
  %1710 = vmatpush1.bf16.msra.mxu0 %v1413
  %1711 = vmatprep.subr.bf16.mxu0 0
  %1712 = vmatpush1.bf16.msra.mxu0 %v1416
  %1713 = vmatprep.subr.bf16.mxu0 0
  %1714 = vmatpush1.bf16.msra.mxu0 %v1419
  %1715 = vmatprep.subr.bf16.mxu0 0
  %1716 = vmatpush1.bf16.msra.mxu0 0
  %1717 = vmatprep.subr.bf16.mxu0 0
  %1718 = vmatpush1.bf16.msra.mxu0 0
  %1719 = vmatprep.subr.bf16.mxu0 0
  %1720 = vmatpush1.bf16.msra.mxu0 0
  %1721 = vmatprep.subr.bf16.mxu0 0
  %1722 = vmatpush1.bf16.msra.mxu0 0
  %1723 = vmatprep.subr.bf16.mxu0 0
  %1724 = vmatpush1.bf16.msra.mxu0 0
  %1725 = vmatprep.subr.bf16.mxu0 0
  %1726 = vmatpush1.bf16.msra.mxu0 0
  %1727 = vmatprep.subr.bf16.mxu0 0
  %1728 = vmatpush1.bf16.msra.mxu0 0
  %1729 = vmatprep.subr.bf16.mxu0 0
  %1730 = vmatpush1.bf16.msra.mxu0 0
  %1731 = vmatprep.mubr.bf16.mxu0 0
  %1732 = vmatmul.mubr.bf16.gmra.mrb[0].mxu0 %v1657
  %v1733 = vpop.f32.mrb[0].mxu0
  %v1734 = vadd.f32 0.0, %v1733
  %v1735 = vpop.f32.mrb[0].mxu0
  %v1736 = vpop.f32.mrb[0].mxu0
  %v1737 = vpop.f32.mrb[0].mxu0
  %1738 = vdwg.mxu0
  %v1739 = vadd.f32 %v1654, %v1693
  %v1740 = vxor.u32 %v1739, 2147483648
  %v1741 = vmul.f32 %v1740, 1.442695
  %v1742 = vpow.pop %v1741
  %v1743 = vadd.f32 %v1742, 1.0
  %v1744 = vrcp.pop %v1743
  %v1745 = vmul.f32 1.0, %v1744
  %v1746 = vadd.f32 %v1655, %v1695
  %v1747 = vxor.u32 %v1746, 2147483648
  %v1748 = vmul.f32 %v1747, 1.442695
  %v1749 = vpow.pop %v1748
  %v1750 = vadd.f32 %v1749, 1.0
  %v1751 = vrcp.pop %v1750
  %v1752 = vmul.f32 1.0, %v1751
  %v1753 = vadd.f32 %v1734, %v1278
  %v1754 = vmul.f32 %v1745, %v1753
  %v1755 = vadd.f32 %v1656, %v1754
  %v1756 = vtanh.pop %v1755
  %v1757 = vsub.f32 1.0, %v1752
  %v1758 = vmul.f32 %v1757, %v1756
  %v1759 = vmul.f32 %v1752, %v1653
  %v1760 = vadd.f32 %v1758, %v1759
  %v1761 = vld [vmem:[%s658] sm:$0xff]
  %v1762 = vld [vmem:[%s658 + $0x8] sm:$0xff]
  %v1763 = vld [vmem:[%s658 + $0x10] sm:$0xff]
  %v1764 = vpack.c.bf16 %v1760, %v1760
  %1765 = vmatprep.subr.bf16.mxu0 %v1397
  %1766 = vmatpush1.bf16.msra.mxu0 %v1396
  %1767 = vmatprep.subr.bf16.mxu0 %v1400
  %1768 = vmatpush1.bf16.msra.mxu0 %v1399
  %1769 = vmatprep.subr.bf16.mxu0 %v1403
  %1770 = vmatpush1.bf16.msra.mxu0 %v1402
  %1771 = vmatprep.subr.bf16.mxu0 %v1406
  %1772 = vmatpush1.bf16.msra.mxu0 %v1405
  %1773 = vmatprep.subr.bf16.mxu0 %v1409
  %1774 = vmatpush1.bf16.msra.mxu0 %v1408
  %1775 = vmatprep.subr.bf16.mxu0 %v1412
  %1776 = vmatpush1.bf16.msra.mxu0 %v1411
  %1777 = vmatprep.subr.bf16.mxu0 %v1415
  %1778 = vmatpush1.bf16.msra.mxu0 %v1414
  %1779 = vmatprep.subr.bf16.mxu0 %v1418
  %1780 = vmatpush1.bf16.msra.mxu0 %v1417
  %1781 = vmatprep.subr.bf16.mxu0 0
  %1782 = vmatpush1.bf16.msra.mxu0 0
  %1783 = vmatprep.subr.bf16.mxu0 0
  %1784 = vmatpush1.bf16.msra.mxu0 0
  %1785 = vmatprep.subr.bf16.mxu0 0
  %1786 = vmatpush1.bf16.msra.mxu0 0
  %1787 = vmatprep.subr.bf16.mxu0 0
  %1788 = vmatpush1.bf16.msra.mxu0 0
  %1789 = vmatprep.subr.bf16.mxu0 0
  %1790 = vmatpush1.bf16.msra.mxu0 0
  %1791 = vmatprep.subr.bf16.mxu0 0
  %1792 = vmatpush1.bf16.msra.mxu0 0
  %1793 = vmatprep.subr.bf16.mxu0 0
  %1794 = vmatpush1.bf16.msra.mxu0 0
  %1795 = vmatprep.subr.bf16.mxu0 0
  %1796 = vmatpush1.bf16.msra.mxu0 0
  %1797 = vmatprep.mubr.bf16.mxu0 0
  %1798 = vmatmul.mubr.bf16.gmra.mrb[0].mxu0 %v1764
  %v1799 = vpop.f32.mrb[0].mxu0
  %v1800 = vadd.f32 0.0, %v1799
  %v1801 = vpop.f32.mrb[0].mxu0
  %v1802 = vadd.f32 0.0, %v1801
  %v1803 = vpop.f32.mrb[0].mxu0
  %v1804 = vpop.f32.mrb[0].mxu0
  %1805 = vdwg.mxu0
  %1806 = vmatprep.subr.bf16.mxu0 0
  %1807 = vmatpush1.bf16.msra.mxu0 %v1398
  %1808 = vmatprep.subr.bf16.mxu0 0
  %1809 = vmatpush1.bf16.msra.mxu0 %v1401
  %1810 = vmatprep.subr.bf16.mxu0 0
  %1811 = vmatpush1.bf16.msra.mxu0 %v1404
  %1812 = vmatprep.subr.bf16.mxu0 0
  %1813 = vmatpush1.bf16.msra.mxu0 %v1407
  %1814 = vmatprep.subr.bf16.mxu0 0
  %1815 = vmatpush1.bf16.msra.mxu0 %v1410
  %1816 = vmatprep.subr.bf16.mxu0 0
  %1817 = vmatpush1.bf16.msra.mxu0 %v1413
  %1818 = vmatprep.subr.bf16.mxu0 0
  %1819 = vmatpush1.bf16.msra.mxu0 %v1416
  %1820 = vmatprep.subr.bf16.mxu0 0
  %1821 = vmatpush1.bf16.msra.mxu0 %v1419
  %1822 = vmatprep.subr.bf16.mxu0 0
  %1823 = vmatpush1.bf16.msra.mxu0 0
  %1824 = vmatprep.subr.bf16.mxu0 0
  %1825 = vmatpush1.bf16.msra.mxu0 0
  %1826 = vmatprep.subr.bf16.mxu0 0
  %1827 = vmatpush1.bf16.msra.mxu0 0
  %1828 = vmatprep.subr.bf16.mxu0 0
  %1829 = vmatpush1.bf16.msra.mxu0 0
  %1830 = vmatprep.subr.bf16.mxu0 0
  %1831 = vmatpush1.bf16.msra.mxu0 0
  %1832 = vmatprep.subr.bf16.mxu0 0
  %1833 = vmatpush1.bf16.msra.mxu0 0
  %1834 = vmatprep.subr.bf16.mxu0 0
  %1835 = vmatpush1.bf16.msra.mxu0 0
  %1836 = vmatprep.subr.bf16.mxu0 0
  %1837 = vmatpush1.bf16.msra.mxu0 0
  %1838 = vmatprep.mubr.bf16.mxu0 0
  %1839 = vmatmul.mubr.bf16.gmra.mrb[0].mxu0 %v1764
  %v1840 = vpop.f32.mrb[0].mxu0
  %v1841 = vadd.f32 0.0, %v1840
  %v1842 = vpop.f32.mrb[0].mxu0
  %v1843 = vpop.f32.mrb[0].mxu0
  %v1844 = vpop.f32.mrb[0].mxu0
  %1845 = vdwg.mxu0
  %v1846 = vadd.f32 %v1761, %v1800
  %v1847 = vxor.u32 %v1846, 2147483648
  %v1848 = vmul.f32 %v1847, 1.442695
  %v1849 = vpow.pop %v1848
  %v1850 = vadd.f32 %v1849, 1.0
  %v1851 = vrcp.pop %v1850
  %v1852 = vmul.f32 1.0, %v1851
  %v1853 = vadd.f32 %v1762, %v1802
  %v1854 = vxor.u32 %v1853, 2147483648
  %v1855 = vmul.f32 %v1854, 1.442695
  %v1856 = vpow.pop %v1855
  %v1857 = vadd.f32 %v1856, 1.0
  %v1858 = vrcp.pop %v1857
  %v1859 = vmul.f32 1.0, %v1858
  %v1860 = vadd.f32 %v1841, %v1278
  %v1861 = vmul.f32 %v1852, %v1860
  %v1862 = vadd.f32 %v1763, %v1861
  %v1863 = vtanh.pop %v1862
  %v1864 = vsub.f32 1.0, %v1859
  %v1865 = vmul.f32 %v1864, %v1863
  %v1866 = vmul.f32 %v1859, %v1760
  %v1867 = vadd.f32 %v1865, %v1866
  %v1868 = vld [vmem:[%s811] sm:$0xff]
  %v1869 = vld [vmem:[%s811 + $0x8] sm:$0xff]
  %v1870 = vld [vmem:[%s811 + $0x10] sm:$0xff]
  %v1871 = vpack.c.bf16 %v1867, %v1867
  %1872 = vmatprep.subr.bf16.mxu0 %v1397
  %1873 = vmatpush1.bf16.msra.mxu0 %v1396
  %1874 = vmatprep.subr.bf16.mxu0 %v1400
  %1875 = vmatpush1.bf16.msra.mxu0 %v1399
  %1876 = vmatprep.subr.bf16.mxu0 %v1403
  %1877 = vmatpush1.bf16.msra.mxu0 %v1402
  %1878 = vmatprep.subr.bf16.mxu0 %v1406
  %1879 = vmatpush1.bf16.msra.mxu0 %v1405
  %1880 = vmatprep.subr.bf16.mxu0 %v1409
  %1881 = vmatpush1.bf16.msra.mxu0 %v1408
  %1882 = vmatprep.subr.bf16.mxu0 %v1412
  %1883 = vmatpush1.bf16.msra.mxu0 %v1411
  %1884 = vmatprep.subr.bf16.mxu0 %v1415
  %1885 = vmatpush1.bf16.msra.mxu0 %v1414
  %1886 = vmatprep.subr.bf16.mxu0 %v1418
  %1887 = vmatpush1.bf16.msra.mxu0 %v1417
  %1888 = vmatprep.subr.bf16.mxu0 0
  %1889 = vmatpush1.bf16.msra.mxu0 0
  %1890 = vmatprep.subr.bf16.mxu0 0
  %1891 = vmatpush1.bf16.msra.mxu0 0
  %1892 = vmatprep.subr.bf16.mxu0 0
  %1893 = vmatpush1.bf16.msra.mxu0 0
  %1894 = vmatprep.subr.bf16.mxu0 0
  %1895 = vmatpush1.bf16.msra.mxu0 0
  %1896 = vmatprep.subr.bf16.mxu0 0
  %1897 = vmatpush1.bf16.msra.mxu0 0
  %1898 = vmatprep.subr.bf16.mxu0 0
  %1899 = vmatpush1.bf16.msra.mxu0 0
  %1900 = vmatprep.subr.bf16.mxu0 0
  %1901 = vmatpush1.bf16.msra.mxu0 0
  %1902 = vmatprep.subr.bf16.mxu0 0
  %1903 = vmatpush1.bf16.msra.mxu0 0
  %1904 = vmatprep.mubr.bf16.mxu0 0
  %1905 = vmatmul.mubr.bf16.gmra.mrb[0].mxu0 %v1871
  %v1906 = vpop.f32.mrb[0].mxu0
  %v1907 = vadd.f32 0.0, %v1906
  %v1908 = vpop.f32.mrb[0].mxu0
  %v1909 = vadd.f32 0.0, %v1908
  %v1910 = vpop.f32.mrb[0].mxu0
  %v1911 = vpop.f32.mrb[0].mxu0
  %1912 = vdwg.mxu0
  %1913 = vmatprep.subr.bf16.mxu0 0
  %1914 = vmatpush1.bf16.msra.mxu0 %v1398
  %1915 = vmatprep.subr.bf16.mxu0 0
  %1916 = vmatpush1.bf16.msra.mxu0 %v1401
  %1917 = vmatprep.subr.bf16.mxu0 0
  %1918 = vmatpush1.bf16.msra.mxu0 %v1404
  %1919 = vmatprep.subr.bf16.mxu0 0
  %1920 = vmatpush1.bf16.msra.mxu0 %v1407
  %1921 = vmatprep.subr.bf16.mxu0 0
  %1922 = vmatpush1.bf16.msra.mxu0 %v1410
  %1923 = vmatprep.subr.bf16.mxu0 0
  %1924 = vmatpush1.bf16.msra.mxu0 %v1413
  %1925 = vmatprep.subr.bf16.mxu0 0
  %1926 = vmatpush1.bf16.msra.mxu0 %v1416
  %1927 = vmatprep.subr.bf16.mxu0 0
  %1928 = vmatpush1.bf16.msra.mxu0 %v1419
  %1929 = vmatprep.subr.bf16.mxu0 0
  %1930 = vmatpush1.bf16.msra.mxu0 0
  %1931 = vmatprep.subr.bf16.mxu0 0
  %1932 = vmatpush1.bf16.msra.mxu0 0
  %1933 = vmatprep.subr.bf16.mxu0 0
  %1934 = vmatpush1.bf16.msra.mxu0 0
  %1935 = vmatprep.subr.bf16.mxu0 0
  %1936 = vmatpush1.bf16.msra.mxu0 0
  %1937 = vmatprep.subr.bf16.mxu0 0
  %1938 = vmatpush1.bf16.msra.mxu0 0
  %1939 = vmatprep.subr.bf16.mxu0 0
  %1940 = vmatpush1.bf16.msra.mxu0 0
  %1941 = vmatprep.subr.bf16.mxu0 0
  %1942 = vmatpush1.bf16.msra.mxu0 0
  %1943 = vmatprep.subr.bf16.mxu0 0
  %1944 = vmatpush1.bf16.msra.mxu0 0
  %1945 = vmatprep.mubr.bf16.mxu0 0
  %1946 = vmatmul.mubr.bf16.gmra.mrb[0].mxu0 %v1871
  %v1947 = vpop.f32.mrb[0].mxu0
  %v1948 = vadd.f32 0.0, %v1947
  %v1949 = vpop.f32.mrb[0].mxu0
  %v1950 = vpop.f32.mrb[0].mxu0
  %v1951 = vpop.f32.mrb[0].mxu0
  %1952 = vdwg.mxu0
  %v1953 = vadd.f32 %v1868, %v1907
  %v1954 = vxor.u32 %v1953, 2147483648
  %v1955 = vmul.f32 %v1954, 1.442695
  %v1956 = vpow.pop %v1955
  %v1957 = vadd.f32 %v1956, 1.0
  %v1958 = vrcp.pop %v1957
  %v1959 = vmul.f32 1.0, %v1958
  %v1960 = vadd.f32 %v1869, %v1909
  %v1961 = vxor.u32 %v1960, 2147483648
  %v1962 = vmul.f32 %v1961, 1.442695
  %v1963 = vpow.pop %v1962
  %v1964 = vadd.f32 %v1963, 1.0
  %v1965 = vrcp.pop %v1964
  %v1966 = vmul.f32 1.0, %v1965
  %v1967 = vadd.f32 %v1948, %v1278
  %v1968 = vmul.f32 %v1959, %v1967
  %v1969 = vadd.f32 %v1870, %v1968
  %v1970 = vtanh.pop %v1969
  %v1971 = vsub.f32 1.0, %v1966
  %v1972 = vmul.f32 %v1971, %v1970
  %v1973 = vmul.f32 %v1966, %v1867
  %v1974 = vadd.f32 %v1972, %v1973
  %v1975 = vld [vmem:[%s964] sm:$0xff]
  %v1976 = vld [vmem:[%s964 + $0x8] sm:$0xff]
  %v1977 = vld [vmem:[%s964 + $0x10] sm:$0xff]
  %v1978 = vpack.c.bf16 %v1974, %v1974
  %1979 = vmatprep.subr.bf16.mxu0 %v1397
  %1980 = vmatpush1.bf16.msra.mxu0 %v1396
  %1981 = vmatprep.subr.bf16.mxu0 %v1400
  %1982 = vmatpush1.bf16.msra.mxu0 %v1399
  %1983 = vmatprep.subr.bf16.mxu0 %v1403
  %1984 = vmatpush1.bf16.msra.mxu0 %v1402
  %1985 = vmatprep.subr.bf16.mxu0 %v1406
  %1986 = vmatpush1.bf16.msra.mxu0 %v1405
  %1987 = vmatprep.subr.bf16.mxu0 %v1409
  %1988 = vmatpush1.bf16.msra.mxu0 %v1408
  %1989 = vmatprep.subr.bf16.mxu0 %v1412
  %1990 = vmatpush1.bf16.msra.mxu0 %v1411
  %1991 = vmatprep.subr.bf16.mxu0 %v1415
  %1992 = vmatpush1.bf16.msra.mxu0 %v1414
  %1993 = vmatprep.subr.bf16.mxu0 %v1418
  %1994 = vmatpush1.bf16.msra.mxu0 %v1417
  %1995 = vmatprep.subr.bf16.mxu0 0
  %1996 = vmatpush1.bf16.msra.mxu0 0
  %1997 = vmatprep.subr.bf16.mxu0 0
  %1998 = vmatpush1.bf16.msra.mxu0 0
  %1999 = vmatprep.subr.bf16.mxu0 0
  %2000 = vmatpush1.bf16.msra.mxu0 0
  %2001 = vmatprep.subr.bf16.mxu0 0
  %2002 = vmatpush1.bf16.msra.mxu0 0
  %2003 = vmatprep.subr.bf16.mxu0 0
  %2004 = vmatpush1.bf16.msra.mxu0 0
  %2005 = vmatprep.subr.bf16.mxu0 0
  %2006 = vmatpush1.bf16.msra.mxu0 0
  %2007 = vmatprep.subr.bf16.mxu0 0
  %2008 = vmatpush1.bf16.msra.mxu0 0
  %2009 = vmatprep.subr.bf16.mxu0 0
  %2010 = vmatpush1.bf16.msra.mxu0 0
  %2011 = vmatprep.mubr.bf16.mxu0 0
  %2012 = vmatmul.mubr.bf16.gmra.mrb[0].mxu0 %v1978
  %v2013 = vpop.f32.mrb[0].mxu0
  %v2014 = vadd.f32 0.0, %v2013
  %v2015 = vpop.f32.mrb[0].mxu0
  %v2016 = vadd.f32 0.0, %v2015
  %v2017 = vpop.f32.mrb[0].mxu0
  %v2018 = vpop.f32.mrb[0].mxu0
  %2019 = vdwg.mxu0
  %2020 = vmatprep.subr.bf16.mxu0 0
  %2021 = vmatpush1.bf16.msra.mxu0 %v1398
  %2022 = vmatprep.subr.bf16.mxu0 0
  %2023 = vmatpush1.bf16.msra.mxu0 %v1401
  %2024 = vmatprep.subr.bf16.mxu0 0
  %2025 = vmatpush1.bf16.msra.mxu0 %v1404
  %2026 = vmatprep.subr.bf16.mxu0 0
  %2027 = vmatpush1.bf16.msra.mxu0 %v1407
  %2028 = vmatprep.subr.bf16.mxu0 0
  %2029 = vmatpush1.bf16.msra.mxu0 %v1410
  %2030 = vmatprep.subr.bf16.mxu0 0
  %2031 = vmatpush1.bf16.msra.mxu0 %v1413
  %2032 = vmatprep.subr.bf16.mxu0 0
  %2033 = vmatpush1.bf16.msra.mxu0 %v1416
  %2034 = vmatprep.subr.bf16.mxu0 0
  %2035 = vmatpush1.bf16.msra.mxu0 %v1419
  %2036 = vmatprep.subr.bf16.mxu0 0
  %2037 = vmatpush1.bf16.msra.mxu0 0
  %2038 = vmatprep.subr.bf16.mxu0 0
  %2039 = vmatpush1.bf16.msra.mxu0 0
  %2040 = vmatprep.subr.bf16.mxu0 0
  %2041 = vmatpush1.bf16.msra.mxu0 0
  %2042 = vmatprep.subr.bf16.mxu0 0
  %2043 = vmatpush1.bf16.msra.mxu0 0
  %2044 = vmatprep.subr.bf16.mxu0 0
  %2045 = vmatpush1.bf16.msra.mxu0 0
  %2046 = vmatprep.subr.bf16.mxu0 0
  %2047 = vmatpush1.bf16.msra.mxu0 0
  %2048 = vmatprep.subr.bf16.mxu0 0
  %2049 = vmatpush1.bf16.msra.mxu0 0
  %2050 = vmatprep.subr.bf16.mxu0 0
  %2051 = vmatpush1.bf16.msra.mxu0 0
  %2052 = vmatprep.mubr.bf16.mxu0 0
  %2053 = vmatmul.mubr.bf16.gmra.mrb[0].mxu0 %v1978
  %v2054 = vpop.f32.mrb[0].mxu0
  %v2055 = vadd.f32 0.0, %v2054
  %v2056 = vpop.f32.mrb[0].mxu0
  %v2057 = vpop.f32.mrb[0].mxu0
  %v2058 = vpop.f32.mrb[0].mxu0
  %2059 = vdwg.mxu0
  %v2060 = vadd.f32 %v1975, %v2014
  %v2061 = vxor.u32 %v2060, 2147483648
  %v2062 = vmul.f32 %v2061, 1.442695
  %v2063 = vpow.pop %v2062
  %v2064 = vadd.f32 %v2063, 1.0
  %v2065 = vrcp.pop %v2064
  %v2066 = vmul.f32 1.0, %v2065
  %v2067 = vadd.f32 %v1976, %v2016
  %v2068 = vxor.u32 %v2067, 2147483648
  %v2069 = vmul.f32 %v2068, 1.442695
  %v2070 = vpow.pop %v2069
  %v2071 = vadd.f32 %v2070, 1.0
  %v2072 = vrcp.pop %v2071
  %v2073 = vmul.f32 1.0, %v2072
  %v2074 = vadd.f32 %v2055, %v1278
  %v2075 = vmul.f32 %v2066, %v2074
  %v2076 = vadd.f32 %v1977, %v2075
  %v2077 = vtanh.pop %v2076
  %v2078 = vsub.f32 1.0, %v2073
  %v2079 = vmul.f32 %v2078, %v2077
  %v2080 = vmul.f32 %v2073, %v1974
  %v2081 = vadd.f32 %v2079, %v2080
  %v2082 = vld [vmem:[%s1117] sm:$0xff]
  %v2083 = vld [vmem:[%s1117 + $0x8] sm:$0xff]
  %v2084 = vld [vmem:[%s1117 + $0x10] sm:$0xff]
  %v2085 = vpack.c.bf16 %v2081, %v2081
  %2086 = vmatprep.subr.bf16.mxu0 %v1397
  %2087 = vmatpush1.bf16.msra.mxu0 %v1396
  %2088 = vmatprep.subr.bf16.mxu0 %v1400
  %2089 = vmatpush1.bf16.msra.mxu0 %v1399
  %2090 = vmatprep.subr.bf16.mxu0 %v1403
  %2091 = vmatpush1.bf16.msra.mxu0 %v1402
  %2092 = vmatprep.subr.bf16.mxu0 %v1406
  %2093 = vmatpush1.bf16.msra.mxu0 %v1405
  %2094 = vmatprep.subr.bf16.mxu0 %v1409
  %2095 = vmatpush1.bf16.msra.mxu0 %v1408
  %2096 = vmatprep.subr.bf16.mxu0 %v1412
  %2097 = vmatpush1.bf16.msra.mxu0 %v1411
  %2098 = vmatprep.subr.bf16.mxu0 %v1415
  %2099 = vmatpush1.bf16.msra.mxu0 %v1414
  %2100 = vmatprep.subr.bf16.mxu0 %v1418
  %2101 = vmatpush1.bf16.msra.mxu0 %v1417
  %2102 = vmatprep.subr.bf16.mxu0 0
  %2103 = vmatpush1.bf16.msra.mxu0 0
  %2104 = vmatprep.subr.bf16.mxu0 0
  %2105 = vmatpush1.bf16.msra.mxu0 0
  %2106 = vmatprep.subr.bf16.mxu0 0
  %2107 = vmatpush1.bf16.msra.mxu0 0
  %2108 = vmatprep.subr.bf16.mxu0 0
  %2109 = vmatpush1.bf16.msra.mxu0 0
  %2110 = vmatprep.subr.bf16.mxu0 0
  %2111 = vmatpush1.bf16.msra.mxu0 0
  %2112 = vmatprep.subr.bf16.mxu0 0
  %2113 = vmatpush1.bf16.msra.mxu0 0
  %2114 = vmatprep.subr.bf16.mxu0 0
  %2115 = vmatpush1.bf16.msra.mxu0 0
  %2116 = vmatprep.subr.bf16.mxu0 0
  %2117 = vmatpush1.bf16.msra.mxu0 0
  %2118 = vmatprep.mubr.bf16.mxu0 0
  %2119 = vmatmul.mubr.bf16.gmra.mrb[0].mxu0 %v2085
  %v2120 = vpop.f32.mrb[0].mxu0
  %v2121 = vadd.f32 0.0, %v2120
  %v2122 = vpop.f32.mrb[0].mxu0
  %v2123 = vadd.f32 0.0, %v2122
  %v2124 = vpop.f32.mrb[0].mxu0
  %v2125 = vpop.f32.mrb[0].mxu0
  %2126 = vdwg.mxu0
  %2127 = vmatprep.subr.bf16.mxu0 0
  %2128 = vmatpush1.bf16.msra.mxu0 %v1398
  %2129 = vmatprep.subr.bf16.mxu0 0
  %2130 = vmatpush1.bf16.msra.mxu0 %v1401
  %2131 = vmatprep.subr.bf16.mxu0 0
  %2132 = vmatpush1.bf16.msra.mxu0 %v1404
  %2133 = vmatprep.subr.bf16.mxu0 0
  %2134 = vmatpush1.bf16.msra.mxu0 %v1407
  %2135 = vmatprep.subr.bf16.mxu0 0
  %2136 = vmatpush1.bf16.msra.mxu0 %v1410
  %2137 = vmatprep.subr.bf16.mxu0 0
  %2138 = vmatpush1.bf16.msra.mxu0 %v1413
  %2139 = vmatprep.subr.bf16.mxu0 0
  %2140 = vmatpush1.bf16.msra.mxu0 %v1416
  %2141 = vmatprep.subr.bf16.mxu0 0
  %2142 = vmatpush1.bf16.msra.mxu0 %v1419
  %2143 = vmatprep.subr.bf16.mxu0 0
  %2144 = vmatpush1.bf16.msra.mxu0 0
  %2145 = vmatprep.subr.bf16.mxu0 0
  %2146 = vmatpush1.bf16.msra.mxu0 0
  %2147 = vmatprep.subr.bf16.mxu0 0
  %2148 = vmatpush1.bf16.msra.mxu0 0
  %2149 = vmatprep.subr.bf16.mxu0 0
  %2150 = vmatpush1.bf16.msra.mxu0 0
  %2151 = vmatprep.subr.bf16.mxu0 0
  %2152 = vmatpush1.bf16.msra.mxu0 0
  %2153 = vmatprep.subr.bf16.mxu0 0
  %2154 = vmatpush1.bf16.msra.mxu0 0
  %2155 = vmatprep.subr.bf16.mxu0 0
  %2156 = vmatpush1.bf16.msra.mxu0 0
  %2157 = vmatprep.subr.bf16.mxu0 0
  %2158 = vmatpush1.bf16.msra.mxu0 0
  %2159 = vmatprep.mubr.bf16.mxu0 0
  %2160 = vmatmul.mubr.bf16.gmra.mrb[0].mxu0 %v2085
  %v2161 = vpop.f32.mrb[0].mxu0
  %v2162 = vadd.f32 0.0, %v2161
  %v2163 = vpop.f32.mrb[0].mxu0
  %v2164 = vpop.f32.mrb[0].mxu0
  %v2165 = vpop.f32.mrb[0].mxu0
  %2166 = vdwg.mxu0
  %v2167 = vadd.f32 %v2082, %v2121
  %v2168 = vxor.u32 %v2167, 2147483648
  %v2169 = vmul.f32 %v2168, 1.442695
  %v2170 = vpow.pop %v2169
  %v2171 = vadd.f32 %v2170, 1.0
  %v2172 = vrcp.pop %v2171
  %v2173 = vmul.f32 1.0, %v2172
  %v2174 = vadd.f32 %v2083, %v2123
  %v2175 = vxor.u32 %v2174, 2147483648
  %v2176 = vmul.f32 %v2175, 1.442695
  %v2177 = vpow.pop %v2176
  %v2178 = vadd.f32 %v2177, 1.0
  %v2179 = vrcp.pop %v2178
  %v2180 = vmul.f32 1.0, %v2179
  %v2181 = vadd.f32 %v2162, %v1278
  %v2182 = vmul.f32 %v2173, %v2181
  %v2183 = vadd.f32 %v2084, %v2182
  %v2184 = vtanh.pop %v2183
  %v2185 = vsub.f32 1.0, %v2180
  %v2186 = vmul.f32 %v2185, %v2184
  %v2187 = vmul.f32 %v2180, %v2081
  %v2188 = vadd.f32 %v2186, %v2187
  %v2189 = vld [vmem:[%s1270] sm:$0xff]
  %v2190 = vld [vmem:[%s1270 + $0x8] sm:$0xff]
  %v2191 = vld [vmem:[%s1270 + $0x10] sm:$0xff]
  %v2192 = vpack.c.bf16 %v2188, %v2188
  %2193 = vmatprep.subr.bf16.mxu0 %v1397
  %2194 = vmatpush1.bf16.msra.mxu0 %v1396
  %2195 = vmatprep.subr.bf16.mxu0 %v1400
  %2196 = vmatpush1.bf16.msra.mxu0 %v1399
  %2197 = vmatprep.subr.bf16.mxu0 %v1403
  %2198 = vmatpush1.bf16.msra.mxu0 %v1402
  %2199 = vmatprep.subr.bf16.mxu0 %v1406
  %2200 = vmatpush1.bf16.msra.mxu0 %v1405
  %2201 = vmatprep.subr.bf16.mxu0 %v1409
  %2202 = vmatpush1.bf16.msra.mxu0 %v1408
  %2203 = vmatprep.subr.bf16.mxu0 %v1412
  %2204 = vmatpush1.bf16.msra.mxu0 %v1411
  %2205 = vmatprep.subr.bf16.mxu0 %v1415
  %2206 = vmatpush1.bf16.msra.mxu0 %v1414
  %2207 = vmatprep.subr.bf16.mxu0 %v1418
  %2208 = vmatpush1.bf16.msra.mxu0 %v1417
  %2209 = vmatprep.subr.bf16.mxu0 0
  %2210 = vmatpush1.bf16.msra.mxu0 0
  %2211 = vmatprep.subr.bf16.mxu0 0
  %2212 = vmatpush1.bf16.msra.mxu0 0
  %2213 = vmatprep.subr.bf16.mxu0 0
  %2214 = vmatpush1.bf16.msra.mxu0 0
  %2215 = vmatprep.subr.bf16.mxu0 0
  %2216 = vmatpush1.bf16.msra.mxu0 0
  %2217 = vmatprep.subr.bf16.mxu0 0
  %2218 = vmatpush1.bf16.msra.mxu0 0
  %2219 = vmatprep.subr.bf16.mxu0 0
  %2220 = vmatpush1.bf16.msra.mxu0 0
  %2221 = vmatprep.subr.bf16.mxu0 0
  %2222 = vmatpush1.bf16.msra.mxu0 0
  %2223 = vmatprep.subr.bf16.mxu0 0
  %2224 = vmatpush1.bf16.msra.mxu0 0
  %2225 = vmatprep.mubr.bf16.mxu0 0
  %2226 = vmatmul.mubr.bf16.gmra.mrb[0].mxu0 %v2192
  %v2227 = vpop.f32.mrb[0].mxu0
  %v2228 = vadd.f32 0.0, %v2227
  %v2229 = vpop.f32.mrb[0].mxu0
  %v2230 = vadd.f32 0.0, %v2229
  %v2231 = vpop.f32.mrb[0].mxu0
  %v2232 = vpop.f32.mrb[0].mxu0
  %2233 = vdwg.mxu0
  %2234 = vmatprep.subr.bf16.mxu0 0
  %2235 = vmatpush1.bf16.msra.mxu0 %v1398
  %2236 = vmatprep.subr.bf16.mxu0 0
  %2237 = vmatpush1.bf16.msra.mxu0 %v1401
  %2238 = vmatprep.subr.bf16.mxu0 0
  %2239 = vmatpush1.bf16.msra.mxu0 %v1404
  %2240 = vmatprep.subr.bf16.mxu0 0
  %2241 = vmatpush1.bf16.msra.mxu0 %v1407
  %2242 = vmatprep.subr.bf16.mxu0 0
  %2243 = vmatpush1.bf16.msra.mxu0 %v1410
  %2244 = vmatprep.subr.bf16.mxu0 0
  %2245 = vmatpush1.bf16.msra.mxu0 %v1413
  %2246 = vmatprep.subr.bf16.mxu0 0
  %2247 = vmatpush1.bf16.msra.mxu0 %v1416
  %2248 = vmatprep.subr.bf16.mxu0 0
  %2249 = vmatpush1.bf16.msra.mxu0 %v1419
  %2250 = vmatprep.subr.bf16.mxu0 0
  %2251 = vmatpush1.bf16.msra.mxu0 0
  %2252 = vmatprep.subr.bf16.mxu0 0
  %2253 = vmatpush1.bf16.msra.mxu0 0
  %2254 = vmatprep.subr.bf16.mxu0 0
  %2255 = vmatpush1.bf16.msra.mxu0 0
  %2256 = vmatprep.subr.bf16.mxu0 0
  %2257 = vmatpush1.bf16.msra.mxu0 0
  %2258 = vmatprep.subr.bf16.mxu0 0
  %2259 = vmatpush1.bf16.msra.mxu0 0
  %2260 = vmatprep.subr.bf16.mxu0 0
  %2261 = vmatpush1.bf16.msra.mxu0 0
  %2262 = vmatprep.subr.bf16.mxu0 0
  %2263 = vmatpush1.bf16.msra.mxu0 0
  %2264 = vmatprep.subr.bf16.mxu0 0
  %2265 = vmatpush1.bf16.msra.mxu0 0
  %2266 = vmatprep.mubr.bf16.mxu0 0
  %2267 = vmatmul.mubr.bf16.gmra.mrb[0].mxu0 %v2192
  %v2268 = vpop.f32.mrb[0].mxu0
  %v2269 = vadd.f32 0.0, %v2268
  %v2270 = vpop.f32.mrb[0].mxu0
  %v2271 = vpop.f32.mrb[0].mxu0
  %v2272 = vpop.f32.mrb[0].mxu0
  %2273 = vdwg.mxu0
  %v2274 = vadd.f32 %v2189, %v2228
  %v2275 = vxor.u32 %v2274, 2147483648
  %v2276 = vmul.f32 %v2275, 1.442695
  %v2277 = vpow.pop %v2276
  %v2278 = vadd.f32 %v2277, 1.0
  %v2279 = vrcp.pop %v2278
  %v2280 = vmul.f32 1.0, %v2279
  %v2281 = vadd.f32 %v2190, %v2230
  %v2282 = vxor.u32 %v2281, 2147483648
  %v2283 = vmul.f32 %v2282, 1.442695
  %v2284 = vpow.pop %v2283
  %v2285 = vadd.f32 %v2284, 1.0
  %v2286 = vrcp.pop %v2285
  %v2287 = vmul.f32 1.0, %v2286
  %v2288 = vadd.f32 %v2269, %v1278
  %v2289 = vmul.f32 %v2280, %v2288
  %v2290 = vadd.f32 %v2191, %v2289
  %v2291 = vtanh.pop %v2290
  %v2292 = vsub.f32 1.0, %v2287
  %v2293 = vmul.f32 %v2292, %v2291
  %v2294 = vmul.f32 %v2287, %v2188
  %v2295 = vadd.f32 %v2293, %v2294
  %2296 = vst [vmem:[%s8] sm:$0xff] %v2295
  // Predicated region
  $region34: #{gru_forward.1} parent=0 // pred_check
    %p2297 = pneg %p29
  $region35: #{gru_forward.1} parent=0 // pred_check_branch
    %2299 = sbr.rel (%p2297) target = $region37
  $region36: #{gru_forward.1} parent=0 // pred_region
    %v2300 = vld [vmem:[%s4 + $0x1] sm:$0x1]
    %v2301 = vld [vmem:[%s4 + $0x2] sm:$0x1]
    %v2302 = vld [vmem:[%s4 + $0x3] sm:$0x1]
    %v2303 = vld [vmem:[%s4 + $0x4] sm:$0x1]
    %v2304 = vadd.f32 %v2303, 1e-05
    %v2305 = vrsqrt.pop %v2304
    %v2306 = vlaneseq
    %v2307 = vshrl.u32 %v2306, 7
    %v2308 = vsub.s32 0, %v2307
    %v2309 = vrot.slane %v2302, %v2308
    %v2310 = vsub.f32 %v2295, %v2309
    %v2311 = vlaneseq
    %v2312 = vshrl.u32 %v2311, 7
    %v2313 = vsub.s32 0, %v2312
    %v2314 = vrot.slane %v2305, %v2313
    %v2315 = vmul.f32 %v2310, %v2314
    %v2316 = vlaneseq
    %v2317 = vshrl.u32 %v2316, 7
    %v2318 = vsub.s32 0, %v2317
    %v2319 = vrot.slane %v2300, %v2318
    %v2320 = vmul.f32 %v2315, %v2319
    %v2321 = vlaneseq
    %v2322 = vshrl.u32 %v2321, 7
    %v2323 = vsub.s32 0, %v2322
    %v2324 = vrot.slane %v2301, %v2323
    %v2325 = vadd.f32 %v2320, %v2324
    %v2326 = vmax.f32 %v2325, 0.0
    %v2327 = vld [vmem:[%s5] sm:$0xff]
    %v2328 = vld [vmem:[%s5 + $0x8] sm:$0xff]
    %v2329 = vld [vmem:[%s5 + $0x10] sm:$0xff]
    %v2330 = vld [vmem:[%s5 + $0x18] sm:$0xff]
    %v2331 = vld [vmem:[%s5 + $0x20] sm:$0xff]
    %v2332 = vld [vmem:[%s5 + $0x28] sm:$0xff]
    %v2333 = vld [vmem:[%s5 + $0x30] sm:$0xff]
    %v2334 = vld [vmem:[%s5 + $0x38] sm:$0xff]
    %v2335 = vld [vmem:[%s5 + $0x40] sm:$0xff]
    %v2336 = vld [vmem:[%s5 + $0x48] sm:$0xff]
    %v2337 = vld [vmem:[%s5 + $0x50] sm:$0xff]
    %v2338 = vld [vmem:[%s5 + $0x58] sm:$0xff]
    %v2339 = vld [vmem:[%s5 + $0x60] sm:$0xff]
    %v2340 = vld [vmem:[%s5 + $0x68] sm:$0xff]
    %v2341 = vld [vmem:[%s5 + $0x70] sm:$0xff]
    %v2342 = vld [vmem:[%s5 + $0x78] sm:$0xff]
    %v2343 = vld [vmem:[%s6] sm:$0x1]
    %v2345 = vlaneseq
    %v2346 = vshrl.u32 %v2345, 7
    %v2347 = vsub.s32 0, %v2346
    %v2348 = vrot.slane %v2343, %v2347
    %2350 = vmatprep.subr.mxu0 0.0
    %2351 = vmatpush1.msra.mxu0 %v2327
    %2352 = vmatprep.subr.mxu0 0.0
    %2353 = vmatpush1.msra.mxu0 %v2328
    %2354 = vmatprep.subr.mxu0 0.0
    %2355 = vmatpush1.msra.mxu0 %v2329
    %2356 = vmatprep.subr.mxu0 0.0
    %2357 = vmatpush1.msra.mxu0 %v2330
    %2358 = vmatprep.subr.mxu0 0.0
    %2359 = vmatpush1.msra.mxu0 %v2331
    %2360 = vmatprep.subr.mxu0 0.0
    %2361 = vmatpush1.msra.mxu0 %v2332
    %2362 = vmatprep.subr.mxu0 0.0
    %2363 = vmatpush1.msra.mxu0 %v2333
    %2364 = vmatprep.subr.mxu0 0.0
    %2365 = vmatpush1.msra.mxu0 %v2334
    %2366 = vmatprep.subr.mxu0 0.0
    %2367 = vmatpush1.msra.mxu0 %v2335
    %2368 = vmatprep.subr.mxu0 0.0
    %2369 = vmatpush1.msra.mxu0 %v2336
    %2370 = vmatprep.subr.mxu0 0.0
    %2371 = vmatpush1.msra.mxu0 %v2337
    %2372 = vmatprep.subr.mxu0 0.0
    %2373 = vmatpush1.msra.mxu0 %v2338
    %2374 = vmatprep.subr.mxu0 0.0
    %2375 = vmatpush1.msra.mxu0 %v2339
    %2376 = vmatprep.subr.mxu0 0.0
    %2377 = vmatpush1.msra.mxu0 %v2340
    %2378 = vmatprep.subr.mxu0 0.0
    %2379 = vmatpush1.msra.mxu0 %v2341
    %2380 = vmatprep.subr.mxu0 0.0
    %2381 = vmatpush1.msra.mxu0 %v2342
    %2382 = vmatprep.subr.mxu0 0.0
    %2383 = vmatpush1.msra.mxu0 0.0
    %2384 = vmatprep.subr.mxu0 0.0
    %2385 = vmatpush1.msra.mxu0 0.0
    %2386 = vmatprep.subr.mxu0 0.0
    %2387 = vmatpush1.msra.mxu0 0.0
    %2388 = vmatprep.subr.mxu0 0.0
    %2389 = vmatpush1.msra.mxu0 0.0
    %2390 = vmatprep.subr.mxu0 0.0
    %2391 = vmatpush1.msra.mxu0 0.0
    %2392 = vmatprep.subr.mxu0 0.0
    %2393 = vmatpush1.msra.mxu0 0.0
    %2394 = vmatprep.subr.mxu0 0.0
    %2395 = vmatpush1.msra.mxu0 0.0
    %2396 = vmatprep.subr.mxu0 0.0
    %2397 = vmatpush1.msra.mxu0 0.0
    %2398 = vmatprep.subr.mxu0 0.0
    %2399 = vmatpush1.msra.mxu0 0.0
    %2400 = vmatprep.subr.mxu0 0.0
    %2401 = vmatpush1.msra.mxu0 0.0
    %2402 = vmatprep.subr.mxu0 0.0
    %2403 = vmatpush1.msra.mxu0 0.0
    %2404 = vmatprep.subr.mxu0 0.0
    %2405 = vmatpush1.msra.mxu0 0.0
    %2406 = vmatprep.subr.mxu0 0.0
    %2407 = vmatpush1.msra.mxu0 0.0
    %2408 = vmatprep.subr.mxu0 0.0
    %2409 = vmatpush1.msra.mxu0 0.0
    %2410 = vmatprep.subr.mxu0 0.0
    %2411 = vmatpush1.msra.mxu0 0.0
    %2412 = vmatprep.subr.mxu0 0.0
    %2413 = vmatpush1.msra.mxu0 0.0
    %2414 = vmatprep.mubr.f32.mxu0 0.0
    %2415 = vmatmul.mubr.f32.gmra.mrb[0].mxu0 %v2326
    %v2416 = vpop.f32.mrb[0].mxu0
    %v2417 = vadd.f32 %v2348, %v2416
    %v2418 = vpop.f32.mrb[0].mxu0
    %2419 = vdwg.mxu0
    %2420 = vst [vmem:[%s7] sm:$0xff] %v2417
  $region37: #{gru_forward.1} parent=0 // pred_fallthru
    _
  // Predicated region
  $region38: #{gru_forward.1} parent=0 // pred_check
    _
  $region39: #{gru_forward.1} parent=0 // pred_check_branch
    %2422 = sbr.rel (0) target = $region41
  $region40: #{gru_forward.1} parent=0 // pred_region
    _
  $region41: #{gru_forward.1} parent=0 // pred_fallthru
    _
  // Predicated region
  $region42: #{gru_forward.1} parent=0 // pred_check
    _
  $region43: #{gru_forward.1} parent=0 // pred_check_branch
    %2424 = sbr.rel (0) target = $region45
  $region44: #{gru_forward.1} parent=0 // pred_region
    _
  $region45: #{gru_forward.1} parent=0 // pred_fallthru
    _
  // Predicated region
  $region46: #{gru_forward.1} parent=0 // pred_check
    _
  $region47: #{gru_forward.1} parent=0 // pred_check_branch
    %2426 = sbr.rel (0) target = $region49
  $region48: #{gru_forward.1} parent=0 // pred_region
    _
  $region49: #{gru_forward.1} parent=0 // pred_fallthru
    _
  // Predicated region
  $region50: #{gru_forward.1} parent=0 // pred_check
    _
  $region51: #{gru_forward.1} parent=0 // pred_check_branch
    %2428 = sbr.rel (0) target = $region53
  $region52: #{gru_forward.1} parent=0 // pred_region
    _
  $region53: #{gru_forward.1} parent=0 // pred_fallthru
    _

</llo_original>
